<compile_context>
chip_gen: v5e
topology: v5e:2x2
jax: 0.10.0
libtpu: 0.0.40
codegen_flags: <defaults>
</compile_context>

<pallas_src>
import jax
import jax.numpy as jnp
from jax import lax
from jax.experimental import pallas as pl
from jax.experimental.pallas import tpu as pltpu

EPS = 1e-5
LANES = 128


def _round_up(x, m):
    return (x + m - 1) // m * m


def _pick_vmem_limit_bytes():
    """~3/4 of physical VMEM, capped at 96 MiB (safe on v5e/v6e/v7x)."""
    cap = 64 * 1024 * 1024
    try:
        cap = int(getattr(pltpu.get_tpu_info(), "vmem_capacity_bytes", cap))
    except Exception:
        pass
    return min(96 * 1024 * 1024, (cap * 3) // 4)


def _shift_rows(x2d, s):
    """result[m] = x2d[m - s] for 0 <= m - s < M, else 0 (zero-filled shift).
    (pltpu.roll(x2d, s % M, axis=0) + the boundary masks is an XLU variant.)"""
    if s == 0:
        return x2d
    M, Cp = x2d.shape
    pad = jnp.zeros((abs(s), Cp), x2d.dtype)
    if s > 0:
        return jnp.concatenate([pad, x2d[:M - s]], axis=0)
    return jnp.concatenate([x2d[-s:], pad], axis=0)


def _conv3x3(x2d, w_ref, b_ref, H, W):
    """3x3 SAME conv on one image flattened to (M, Cp), M = H*W.

    Nine accumulating K=Cp MXU matmuls (per-tap accumulate).  Tap construction,
    masking and accumulation stay f32; MXU operands are bf16.

    x2d   : (M, Cp) f32 value, row index m = h*W + w
    w_ref : (9, Cp, Cp) bf16 ref, tap t = dh*3 + dw, rows = c_in, cols = c_out
    b_ref : (1, Cp) f32 ref
    """
    M, Cp = x2d.shape
    h_idx = lax.broadcasted_iota(jnp.int32, (1, H, W, Cp), 1).reshape(M, Cp)
    w_idx = lax.broadcasted_iota(jnp.int32, (1, H, W, Cp), 2).reshape(M, Cp)
    # Boundary compares hoisted out of the 9-tap loop.
    h_masks = (h_idx >= 1, None, h_idx <= H - 2)
    w_masks = (w_idx >= 1, None, w_idx <= W - 2)

    acc = None
    for dh in range(3):
        for dw in range(3):
            s = (1 - dh) * W + (1 - dw)            # result[m] = x2d[m - s]
            v = _shift_rows(x2d, s)
            hm, wm = h_masks[dh], w_masks[dw]
            if hm is None:
                cond = wm
            elif wm is None:
                cond = hm
            else:
                cond = jnp.logical_and(hm, wm)
            if cond is not None:
                v = jnp.where(cond, v, 0.0)
            d = jnp.dot(v.astype(jnp.bfloat16), w_ref[dh * 3 + dw],
                        preferred_element_type=jnp.float32)
            acc = d if acc is None else acc + d
    return acc + b_ref[...]                        # (M, Cp) f32


def _tile_stats(y, M):
    """Per-tile channel sum and centered sum-of-squares (for Chan's combine)."""
    s = jnp.sum(y, axis=0, keepdims=True)                    # (1, Cp)
    d = y - s * (1.0 / M)
    css = jnp.sum(d * d, axis=0, keepdims=True)              # (1, Cp)
    return jnp.concatenate(
        [s, css, jnp.zeros((6, y.shape[1]), jnp.float32)], axis=0)   # (8, Cp)


def _conv_stats_kernel(x_ref, w_ref, b_ref, y_ref, stats_ref):
    """Pass 1: conv1 (+bias); store y1 as bf16; BN1 partial stats from f32."""
    _, H, W, Cp = x_ref.shape
    M = H * W
    y = _conv3x3(x_ref[...].reshape(M, Cp), w_ref, b_ref, H, W)
    y_ref[...] = y.reshape(1, H, W, Cp).astype(y_ref.dtype)
    stats_ref[...] = _tile_stats(y, M).reshape(1, 8, Cp)


def _bn_act_conv_stats_kernel(y1_ref, sc_ref, sh_ref, w_ref, b_ref,
                              y2_ref, stats_ref):
    """Pass 2: BN1-normalize + ReLU + conv2 (+bias); store y2 bf16; BN2 stats."""
    _, H, W, Cp = y1_ref.shape
    M = H * W
    a = jnp.maximum(y1_ref[...].astype(jnp.float32) * sc_ref[...] + sh_ref[...],
                    0.0)
    y = _conv3x3(a.reshape(M, Cp), w_ref, b_ref, H, W)
    y2_ref[...] = y.reshape(1, H, W, Cp).astype(y2_ref.dtype)
    stats_ref[...] = _tile_stats(y, M).reshape(1, 8, Cp)


def _bn_residual_act_kernel(y2_ref, sc_ref, sh_ref, x_ref, o_ref):
    """Pass 3: BN2-normalize + residual add + ReLU; emit only first C channels."""
    C = o_ref.shape[-1]
    z = jnp.maximum(
        y2_ref[...].astype(jnp.float32) * sc_ref[...] + sh_ref[...] + x_ref[...],
        0.0)
    o_ref[...] = z[..., :C]


def _bn_fold(stats, gamma_p, beta_p, tile_count, total_count):
    """Combine per-tile (sum, centered-SS) via Chan's parallel variance formula,
    then fold with gamma/beta into y*scale + shift (biased variance)."""
    s_t = stats[:, 0, :]                            # (G, Cp)
    css_t = stats[:, 1, :]                          # (G, Cp)
    mean = jnp.sum(s_t, axis=0) / total_count
    mu_t = s_t / tile_count
    var = (jnp.sum(css_t, axis=0)
           + tile_count * jnp.sum((mu_t - mean) ** 2, axis=0)) / total_count
    var = jnp.maximum(var, 0.0)
    inv = lax.rsqrt(var + EPS)
    scale = gamma_p.reshape(-1) * inv
    shift = beta_p.reshape(-1) - mean * scale
    return (scale.reshape(1, -1).astype(jnp.float32),
            shift.reshape(1, -1).astype(jnp.float32))


def residual_block(x_nchw, params):
    """params = (w1, cb1, g1, b1, w2, cb2, g2, b2); conv weights HWIO (3,3,C,C),
    per-channel vectors (1, C).  Input/output NCHW f32 (PyTorch interface)."""
    w1, cb1, g1, b1, w2, cb2, g2, b2 = params
    N, C, H, W = x_nchw.shape
    Cp = _round_up(C, LANES)
    tile_count = float(H * W)
    total_count = float(N * H * W)

    # Single padded f32 NHWC copy (no extra bf16 copy).  When chaining blocks,
    # keep activations NHWC / channel-padded between blocks instead of paying
    # this HBM relayout every call.
    x = jnp.transpose(x_nchw, (0, 2, 3, 1)).astype(jnp.float32)
    x = jnp.pad(x, ((0, 0), (0, 0), (0, 0), (0, Cp - C)))

    def prep_w(w):   # HWIO (3,3,C,C) -> (9, Cp, Cp) bf16, tap = dh*3 + dw
        wp = jnp.pad(w, ((0, 0), (0, 0), (0, Cp - C), (0, Cp - C)))
        return wp.reshape(9, Cp, Cp).astype(jnp.bfloat16)

    def prep_v(v):   # (1, C) -> (1, Cp) f32
        return jnp.pad(v.astype(jnp.float32), ((0, 0), (0, Cp - C)))

    w1m, w2m = prep_w(w1), prep_w(w2)
    cb1p, g1p, b1p = prep_v(cb1), prep_v(g1), prep_v(b1)
    cb2p, g2p, b2p = prep_v(cb2), prep_v(g2), prep_v(b2)

    grid = (N,)
    blk = pl.BlockSpec((1, H, W, Cp), lambda i: (i, 0, 0, 0))
    vec = pl.BlockSpec((1, Cp), lambda i: (0, 0))
    wmat = pl.BlockSpec((9, Cp, Cp), lambda i: (0, 0, 0))
    stat = pl.BlockSpec((1, 8, Cp), lambda i: (i, 0, 0))
    out_blk = pl.BlockSpec((1, H, W, C), lambda i: (i, 0, 0, 0))

    cparams = pltpu.CompilerParams(
        dimension_semantics=("parallel",),
        vmem_limit_bytes=_pick_vmem_limit_bytes(),
    )

    conv_cost = pl.CostEstimate(
        flops=2 * N * H * W * 9 * Cp * Cp, transcendentals=0,
        bytes_accessed=N * H * W * Cp * 6 + 9 * Cp * Cp * 2 + N * 8 * Cp * 4)
    ew_cost = pl.CostEstimate(
        flops=4 * N * H * W * Cp, transcendentals=0,
        bytes_accessed=N * H * W * (Cp * 6 + C * 4))

    # Pass 1: conv1 (+bias) -> y1 (bf16) + BN1 partial statistics.
    y1, stats1 = pl.pallas_call(
        _conv_stats_kernel,
        grid=grid,
        in_specs=[blk, wmat, vec],
        out_specs=(blk, stat),
        out_shape=(jax.ShapeDtypeStruct((N, H, W, Cp), jnp.bfloat16),
                   jax.ShapeDtypeStruct((N, 8, Cp), jnp.float32)),
        compiler_params=cparams,
        cost_estimate=conv_cost,
    )(x, w1m, cb1p)

    sc1, sh1 = _bn_fold(stats1, g1p, b1p, tile_count, total_count)

    # Pass 2: BN1-normalize + ReLU + conv2 (+bias) -> y2 (bf16) + BN2 stats.
    y2, stats2 = pl.pallas_call(
        _bn_act_conv_stats_kernel,
        grid=grid,
        in_specs=[blk, vec, vec, wmat, vec],
        out_specs=(blk, stat),
        out_shape=(jax.ShapeDtypeStruct((N, H, W, Cp), jnp.bfloat16),
                   jax.ShapeDtypeStruct((N, 8, Cp), jnp.float32)),
        compiler_params=cparams,
        cost_estimate=conv_cost,
    )(y1, sc1, sh1, w2m, cb2p)

    sc2, sh2 = _bn_fold(stats2, g2p, b2p, tile_count, total_count)

    # Pass 3: BN2-normalize + residual + ReLU; emit only the first C channels.
    out = pl.pallas_call(
        _bn_residual_act_kernel,
        grid=grid,
        in_specs=[blk, vec, vec, blk],
        out_specs=out_blk,
        out_shape=jax.ShapeDtypeStruct((N, H, W, C), jnp.float32),
        compiler_params=cparams,
        cost_estimate=ew_cost,
    )(y2, sc2, sh2, x)

    return jnp.transpose(out, (0, 3, 1, 2))        # NHWC -> NCHW


def residual_block_reference(x_nchw, params, *, mirror_kernel_precision=False):
    """Pure-JAX/XLA reference.  With mirror_kernel_precision=True the conv
    operands are bf16-rounded and the inter-pass activations are bf16-rounded
    before BN normalization (exactly the kernel's precision choices);
    accumulation and statistics stay f32 in both cases."""
    w1, cb1, g1, b1, w2, cb2, g2, b2 = params
    x = jnp.transpose(x_nchw, (0, 2, 3, 1)).astype(jnp.float32)

    if mirror_kernel_precision:
        def q(v): return v.astype(jnp.bfloat16).astype(jnp.float32)
    else:
        def q(v): return v
    store = q

    def conv(v, w, cb):
        y = lax.conv_general_dilated(
            q(v), q(w), window_strides=(1, 1), padding="SAME",
            dimension_numbers=("NHWC", "HWIO", "NHWC"))
        return y + cb.reshape(1, 1, 1, -1)

    def bn(v_stats, v_val, g, b):
        m = jnp.mean(v_stats, axis=(0, 1, 2), keepdims=True)
        var = jnp.mean((v_stats - m) ** 2, axis=(0, 1, 2), keepdims=True)
        return (v_val - m) * lax.rsqrt(var + EPS) * g.reshape(1, 1, 1, -1) \
            + b.reshape(1, 1, 1, -1)

    y1 = conv(x, w1, cb1)
    a1 = jnp.maximum(bn(y1, store(y1), g1, b1), 0.0)
    y2 = conv(a1, w2, cb2)
    out = jnp.maximum(bn(y2, store(y2), g2, b2) + x, 0.0)
    return jnp.transpose(out, (0, 3, 1, 2))


def make_params(key, channels):
    ks = jax.random.split(key, 8)
    C = channels
    w1 = 0.1 * jax.random.normal(ks[0], (3, 3, C, C), jnp.float32)   # HWIO
    cb1 = 0.1 * jax.random.normal(ks[1], (1, C), jnp.float32)
    g1 = 1.0 + 0.1 * jax.random.normal(ks[2], (1, C), jnp.float32)
    b1 = 0.1 * jax.random.normal(ks[3], (1, C), jnp.float32)
    w2 = 0.1 * jax.random.normal(ks[4], (3, 3, C, C), jnp.float32)
    cb2 = 0.1 * jax.random.normal(ks[5], (1, C), jnp.float32)
    g2 = 1.0 + 0.1 * jax.random.normal(ks[6], (1, C), jnp.float32)
    b2 = 0.1 * jax.random.normal(ks[7], (1, C), jnp.float32)
    return (w1, cb1, g1, b1, w2, cb2, g2, b2)


if __name__ == "__main__":
    key = jax.random.PRNGKey(0)
    k_x, k_p = jax.random.split(key)

    # Residual add requires in_channels == out_channels.
    N, C, H, W = 2, 4, 16, 16
    x = jax.random.normal(k_x, (N, C, H, W), jnp.float32)   # NCHW, as in PyTorch
    params = make_params(k_p, C)

    out = jax.block_until_ready(jax.jit(residual_block)(x, params))
    assert out.shape == (N, C, H, W)
    assert bool(jnp.all(jnp.isfinite(out)))

    # Tight check vs a reference that mirrors the kernel's precision choices
    # (bf16 MXU operands, bf16-stored intermediates; f32 accumulation/stats).
    ref_mirror = residual_block_reference(x, params, mirror_kernel_precision=True)
    err_m = float(jnp.max(jnp.abs(out - ref_mirror)))
    assert jnp.allclose(out, ref_mirror, rtol=1e-2, atol=1e-2), \
        f"max abs err vs mirrored-precision ref: {err_m}"

    # Loose sanity check vs the full-f32 reference.
    ref_f32 = residual_block_reference(x, params, mirror_kernel_precision=False)
    err_f = float(jnp.max(jnp.abs(out - ref_f32)))
    assert jnp.allclose(out, ref_f32, rtol=1e-1, atol=1e-1), \
        f"max abs err vs f32 ref: {err_f}"

    print("KERNEL_OK")
</pallas_src>

<mosaic_0001>
module attributes {stable_mosaic.version = 11 : i64} {
  func.func @_conv_stats_kernel(%arg0: i32, %arg1: memref<1x16x16x128xf32, #tpu.memory_space<vmem>>, %arg2: memref<9x128x128xbf16, #tpu.memory_space<vmem>>, %arg3: memref<1x128xf32, #tpu.memory_space<vmem>>, %arg4: memref<1x16x16x128xbf16, #tpu.memory_space<vmem>>, %arg5: memref<1x8x128xf32, #tpu.memory_space<vmem>>) attributes {dimension_semantics = [#tpu.dimension_semantics<parallel>], iteration_bounds = array<i64: 2>, scalar_prefetch = 0 : i64, scratch_operands = 0 : i64, tpu.core_type = #tpu.core_type<tc>, window_params = [{transform_indices = @transform_0, window_bounds = array<i64: 1, 16, 16, 128>}, {pipeline_mode = #tpu.pipeline_mode<synchronous>, transform_indices = @transform_1, window_bounds = array<i64: 9, 128, 128>}, {pipeline_mode = #tpu.pipeline_mode<synchronous>, transform_indices = @transform_2, window_bounds = array<i64: 1, 128>}, {transform_indices = @transform_3, window_bounds = array<i64: 1, 16, 16, 128>}, {transform_indices = @transform_4, window_bounds = array<i64: 1, 8, 128>}]} {
    %c0 = arith.constant 0 : index
    %c0_0 = arith.constant 0 : index
    %c0_1 = arith.constant 0 : index
    %c0_2 = arith.constant 0 : index
    %0 = vector.load %arg1[%c0, %c0_0, %c0_1, %c0_2] : memref<1x16x16x128xf32, #tpu.memory_space<vmem>>, vector<1x16x16x128xf32>
    %1 = vector.shape_cast %0 : vector<1x16x16x128xf32> to vector<256x128xf32>
    %2 = tpu.iota {dimensions = array<i32: 1>} : vector<1x16x16x128xi32>
    %3 = vector.shape_cast %2 : vector<1x16x16x128xi32> to vector<256x128xi32>
    %4 = tpu.iota {dimensions = array<i32: 2>} : vector<1x16x16x128xi32>
    %5 = vector.shape_cast %4 : vector<1x16x16x128xi32> to vector<256x128xi32>
    %c1_i32 = arith.constant 1 : i32
    %6 = vector.broadcast %c1_i32 : i32 to vector<256x128xi32>
    %7 = arith.cmpi sge, %3, %6 : vector<256x128xi32>
    %c14_i32 = arith.constant 14 : i32
    %8 = vector.broadcast %c14_i32 : i32 to vector<256x128xi32>
    %9 = arith.cmpi sle, %3, %8 : vector<256x128xi32>
    %c1_i32_3 = arith.constant 1 : i32
    %10 = vector.broadcast %c1_i32_3 : i32 to vector<256x128xi32>
    %11 = arith.cmpi sge, %5, %10 : vector<256x128xi32>
    %c14_i32_4 = arith.constant 14 : i32
    %12 = vector.broadcast %c14_i32_4 : i32 to vector<256x128xi32>
    %13 = arith.cmpi sle, %5, %12 : vector<256x128xi32>
    %cst = arith.constant 0.000000e+00 : f32
    %14 = vector.broadcast %cst : f32 to vector<17x128xf32>
    %15 = vector.extract_strided_slice %1 {offsets = [0, 0], sizes = [239, 128], strides = [1, 1]} : vector<256x128xf32> to vector<239x128xf32>
    %16 = tpu.concatenate %14, %15 in 0 : vector<17x128xf32>, vector<239x128xf32> -> vector<256x128xf32>
    %17 = arith.andi %7, %11 : vector<256x128xi1>
    %cst_5 = arith.constant 0.000000e+00 : f32
    %18 = vector.broadcast %cst_5 : f32 to vector<256x128xf32>
    %19 = arith.select %17, %16, %18 : vector<256x128xi1>, vector<256x128xf32>
    %20 = arith.truncf %19 : vector<256x128xf32> to vector<256x128xbf16>
    %c0_6 = arith.constant 0 : index
    %c0_7 = arith.constant 0 : index
    %c0_8 = arith.constant 0 : index
    %21 = vector.load %arg2[%c0_6, %c0_7, %c0_8] : memref<9x128x128xbf16, #tpu.memory_space<vmem>>, vector<1x128x128xbf16>
    %22 = vector.shape_cast %21 : vector<1x128x128xbf16> to vector<128x128xbf16>
    %cst_9 = arith.constant dense<0.000000e+00> : vector<256x128xf32>
    %23 = tpu.matmul %20, %22, %cst_9 {dimension_numbers = #tpu.dot_dimension_numbers<[1], [0], [0], [1], [0, 0, 1, 1], [], []>} : vector<256x128xbf16>, vector<128x128xbf16>, vector<256x128xf32> -> vector<256x128xf32>
    %cst_10 = arith.constant 0.000000e+00 : f32
    %24 = vector.broadcast %cst_10 : f32 to vector<16x128xf32>
    %25 = vector.extract_strided_slice %1 {offsets = [0, 0], sizes = [240, 128], strides = [1, 1]} : vector<256x128xf32> to vector<240x128xf32>
    %26 = tpu.concatenate %24, %25 in 0 : vector<16x128xf32>, vector<240x128xf32> -> vector<256x128xf32>
    %cst_11 = arith.constant 0.000000e+00 : f32
    %27 = vector.broadcast %cst_11 : f32 to vector<256x128xf32>
    %28 = arith.select %7, %26, %27 : vector<256x128xi1>, vector<256x128xf32>
    %29 = arith.truncf %28 : vector<256x128xf32> to vector<256x128xbf16>
    %c1 = arith.constant 1 : index
    %c0_12 = arith.constant 0 : index
    %c0_13 = arith.constant 0 : index
    %30 = vector.load %arg2[%c1, %c0_12, %c0_13] : memref<9x128x128xbf16, #tpu.memory_space<vmem>>, vector<1x128x128xbf16>
    %31 = vector.shape_cast %30 : vector<1x128x128xbf16> to vector<128x128xbf16>
    %cst_14 = arith.constant dense<0.000000e+00> : vector<256x128xf32>
    %32 = tpu.matmul %29, %31, %cst_14 {dimension_numbers = #tpu.dot_dimension_numbers<[1], [0], [0], [1], [0, 0, 1, 1], [], []>} : vector<256x128xbf16>, vector<128x128xbf16>, vector<256x128xf32> -> vector<256x128xf32>
    %33 = arith.addf %23, %32 : vector<256x128xf32>
    %cst_15 = arith.constant 0.000000e+00 : f32
    %34 = vector.broadcast %cst_15 : f32 to vector<15x128xf32>
    %35 = vector.extract_strided_slice %1 {offsets = [0, 0], sizes = [241, 128], strides = [1, 1]} : vector<256x128xf32> to vector<241x128xf32>
    %36 = tpu.concatenate %34, %35 in 0 : vector<15x128xf32>, vector<241x128xf32> -> vector<256x128xf32>
    %37 = arith.andi %7, %13 : vector<256x128xi1>
    %cst_16 = arith.constant 0.000000e+00 : f32
    %38 = vector.broadcast %cst_16 : f32 to vector<256x128xf32>
    %39 = arith.select %37, %36, %38 : vector<256x128xi1>, vector<256x128xf32>
    %40 = arith.truncf %39 : vector<256x128xf32> to vector<256x128xbf16>
    %c2 = arith.constant 2 : index
    %c0_17 = arith.constant 0 : index
    %c0_18 = arith.constant 0 : index
    %41 = vector.load %arg2[%c2, %c0_17, %c0_18] : memref<9x128x128xbf16, #tpu.memory_space<vmem>>, vector<1x128x128xbf16>
    %42 = vector.shape_cast %41 : vector<1x128x128xbf16> to vector<128x128xbf16>
    %cst_19 = arith.constant dense<0.000000e+00> : vector<256x128xf32>
    %43 = tpu.matmul %40, %42, %cst_19 {dimension_numbers = #tpu.dot_dimension_numbers<[1], [0], [0], [1], [0, 0, 1, 1], [], []>} : vector<256x128xbf16>, vector<128x128xbf16>, vector<256x128xf32> -> vector<256x128xf32>
    %44 = arith.addf %33, %43 : vector<256x128xf32>
    %cst_20 = arith.constant 0.000000e+00 : f32
    %45 = vector.broadcast %cst_20 : f32 to vector<1x128xf32>
    %46 = vector.extract_strided_slice %1 {offsets = [0, 0], sizes = [255, 128], strides = [1, 1]} : vector<256x128xf32> to vector<255x128xf32>
    %47 = tpu.concatenate %45, %46 in 0 : vector<1x128xf32>, vector<255x128xf32> -> vector<256x128xf32>
    %cst_21 = arith.constant 0.000000e+00 : f32
    %48 = vector.broadcast %cst_21 : f32 to vector<256x128xf32>
    %49 = arith.select %11, %47, %48 : vector<256x128xi1>, vector<256x128xf32>
    %50 = arith.truncf %49 : vector<256x128xf32> to vector<256x128xbf16>
    %c3 = arith.constant 3 : index
    %c0_22 = arith.constant 0 : index
    %c0_23 = arith.constant 0 : index
    %51 = vector.load %arg2[%c3, %c0_22, %c0_23] : memref<9x128x128xbf16, #tpu.memory_space<vmem>>, vector<1x128x128xbf16>
    %52 = vector.shape_cast %51 : vector<1x128x128xbf16> to vector<128x128xbf16>
    %cst_24 = arith.constant dense<0.000000e+00> : vector<256x128xf32>
    %53 = tpu.matmul %50, %52, %cst_24 {dimension_numbers = #tpu.dot_dimension_numbers<[1], [0], [0], [1], [0, 0, 1, 1], [], []>} : vector<256x128xbf16>, vector<128x128xbf16>, vector<256x128xf32> -> vector<256x128xf32>
    %54 = arith.addf %44, %53 : vector<256x128xf32>
    %55 = arith.truncf %1 : vector<256x128xf32> to vector<256x128xbf16>
    %c4 = arith.constant 4 : index
    %c0_25 = arith.constant 0 : index
    %c0_26 = arith.constant 0 : index
    %56 = vector.load %arg2[%c4, %c0_25, %c0_26] : memref<9x128x128xbf16, #tpu.memory_space<vmem>>, vector<1x128x128xbf16>
    %57 = vector.shape_cast %56 : vector<1x128x128xbf16> to vector<128x128xbf16>
    %cst_27 = arith.constant dense<0.000000e+00> : vector<256x128xf32>
    %58 = tpu.matmul %55, %57, %cst_27 {dimension_numbers = #tpu.dot_dimension_numbers<[1], [0], [0], [1], [0, 0, 1, 1], [], []>} : vector<256x128xbf16>, vector<128x128xbf16>, vector<256x128xf32> -> vector<256x128xf32>
    %59 = arith.addf %54, %58 : vector<256x128xf32>
    %cst_28 = arith.constant 0.000000e+00 : f32
    %60 = vector.broadcast %cst_28 : f32 to vector<1x128xf32>
    %61 = vector.extract_strided_slice %1 {offsets = [1, 0], sizes = [255, 128], strides = [1, 1]} : vector<256x128xf32> to vector<255x128xf32>
    %62 = tpu.concatenate %61, %60 in 0 : vector<255x128xf32>, vector<1x128xf32> -> vector<256x128xf32>
    %cst_29 = arith.constant 0.000000e+00 : f32
    %63 = vector.broadcast %cst_29 : f32 to vector<256x128xf32>
    %64 = arith.select %13, %62, %63 : vector<256x128xi1>, vector<256x128xf32>
    %65 = arith.truncf %64 : vector<256x128xf32> to vector<256x128xbf16>
    %c5 = arith.constant 5 : index
    %c0_30 = arith.constant 0 : index
    %c0_31 = arith.constant 0 : index
    %66 = vector.load %arg2[%c5, %c0_30, %c0_31] : memref<9x128x128xbf16, #tpu.memory_space<vmem>>, vector<1x128x128xbf16>
    %67 = vector.shape_cast %66 : vector<1x128x128xbf16> to vector<128x128xbf16>
    %cst_32 = arith.constant dense<0.000000e+00> : vector<256x128xf32>
    %68 = tpu.matmul %65, %67, %cst_32 {dimension_numbers = #tpu.dot_dimension_numbers<[1], [0], [0], [1], [0, 0, 1, 1], [], []>} : vector<256x128xbf16>, vector<128x128xbf16>, vector<256x128xf32> -> vector<256x128xf32>
    %69 = arith.addf %59, %68 : vector<256x128xf32>
    %cst_33 = arith.constant 0.000000e+00 : f32
    %70 = vector.broadcast %cst_33 : f32 to vector<15x128xf32>
    %71 = vector.extract_strided_slice %1 {offsets = [15, 0], sizes = [241, 128], strides = [1, 1]} : vector<256x128xf32> to vector<241x128xf32>
    %72 = tpu.concatenate %71, %70 in 0 : vector<241x128xf32>, vector<15x128xf32> -> vector<256x128xf32>
    %73 = arith.andi %9, %11 : vector<256x128xi1>
    %cst_34 = arith.constant 0.000000e+00 : f32
    %74 = vector.broadcast %cst_34 : f32 to vector<256x128xf32>
    %75 = arith.select %73, %72, %74 : vector<256x128xi1>, vector<256x128xf32>
    %76 = arith.truncf %75 : vector<256x128xf32> to vector<256x128xbf16>
    %c6 = arith.constant 6 : index
    %c0_35 = arith.constant 0 : index
    %c0_36 = arith.constant 0 : index
    %77 = vector.load %arg2[%c6, %c0_35, %c0_36] : memref<9x128x128xbf16, #tpu.memory_space<vmem>>, vector<1x128x128xbf16>
    %78 = vector.shape_cast %77 : vector<1x128x128xbf16> to vector<128x128xbf16>
    %cst_37 = arith.constant dense<0.000000e+00> : vector<256x128xf32>
    %79 = tpu.matmul %76, %78, %cst_37 {dimension_numbers = #tpu.dot_dimension_numbers<[1], [0], [0], [1], [0, 0, 1, 1], [], []>} : vector<256x128xbf16>, vector<128x128xbf16>, vector<256x128xf32> -> vector<256x128xf32>
    %80 = arith.addf %69, %79 : vector<256x128xf32>
    %cst_38 = arith.constant 0.000000e+00 : f32
    %81 = vector.broadcast %cst_38 : f32 to vector<16x128xf32>
    %82 = vector.extract_strided_slice %1 {offsets = [16, 0], sizes = [240, 128], strides = [1, 1]} : vector<256x128xf32> to vector<240x128xf32>
    %83 = tpu.concatenate %82, %81 in 0 : vector<240x128xf32>, vector<16x128xf32> -> vector<256x128xf32>
    %cst_39 = arith.constant 0.000000e+00 : f32
    %84 = vector.broadcast %cst_39 : f32 to vector<256x128xf32>
    %85 = arith.select %9, %83, %84 : vector<256x128xi1>, vector<256x128xf32>
    %86 = arith.truncf %85 : vector<256x128xf32> to vector<256x128xbf16>
    %c7 = arith.constant 7 : index
    %c0_40 = arith.constant 0 : index
    %c0_41 = arith.constant 0 : index
    %87 = vector.load %arg2[%c7, %c0_40, %c0_41] : memref<9x128x128xbf16, #tpu.memory_space<vmem>>, vector<1x128x128xbf16>
    %88 = vector.shape_cast %87 : vector<1x128x128xbf16> to vector<128x128xbf16>
    %cst_42 = arith.constant dense<0.000000e+00> : vector<256x128xf32>
    %89 = tpu.matmul %86, %88, %cst_42 {dimension_numbers = #tpu.dot_dimension_numbers<[1], [0], [0], [1], [0, 0, 1, 1], [], []>} : vector<256x128xbf16>, vector<128x128xbf16>, vector<256x128xf32> -> vector<256x128xf32>
    %90 = arith.addf %80, %89 : vector<256x128xf32>
    %cst_43 = arith.constant 0.000000e+00 : f32
    %91 = vector.broadcast %cst_43 : f32 to vector<17x128xf32>
    %92 = vector.extract_strided_slice %1 {offsets = [17, 0], sizes = [239, 128], strides = [1, 1]} : vector<256x128xf32> to vector<239x128xf32>
    %93 = tpu.concatenate %92, %91 in 0 : vector<239x128xf32>, vector<17x128xf32> -> vector<256x128xf32>
    %94 = arith.andi %9, %13 : vector<256x128xi1>
    %cst_44 = arith.constant 0.000000e+00 : f32
    %95 = vector.broadcast %cst_44 : f32 to vector<256x128xf32>
    %96 = arith.select %94, %93, %95 : vector<256x128xi1>, vector<256x128xf32>
    %97 = arith.truncf %96 : vector<256x128xf32> to vector<256x128xbf16>
    %c8 = arith.constant 8 : index
    %c0_45 = arith.constant 0 : index
    %c0_46 = arith.constant 0 : index
    %98 = vector.load %arg2[%c8, %c0_45, %c0_46] : memref<9x128x128xbf16, #tpu.memory_space<vmem>>, vector<1x128x128xbf16>
    %99 = vector.shape_cast %98 : vector<1x128x128xbf16> to vector<128x128xbf16>
    %cst_47 = arith.constant dense<0.000000e+00> : vector<256x128xf32>
    %100 = tpu.matmul %97, %99, %cst_47 {dimension_numbers = #tpu.dot_dimension_numbers<[1], [0], [0], [1], [0, 0, 1, 1], [], []>} : vector<256x128xbf16>, vector<128x128xbf16>, vector<256x128xf32> -> vector<256x128xf32>
    %101 = arith.addf %90, %100 : vector<256x128xf32>
    %c0_48 = arith.constant 0 : index
    %c0_49 = arith.constant 0 : index
    %102 = vector.load %arg3[%c0_48, %c0_49] : memref<1x128xf32, #tpu.memory_space<vmem>>, vector<1x128xf32>
    %103 = vector.broadcast %102 : vector<1x128xf32> to vector<256x128xf32>
    %104 = arith.addf %101, %103 : vector<256x128xf32>
    %105 = vector.shape_cast %104 : vector<256x128xf32> to vector<1x16x16x128xf32>
    %106 = arith.truncf %105 : vector<1x16x16x128xf32> to vector<1x16x16x128xbf16>
    %c0_50 = arith.constant 0 : index
    %c0_51 = arith.constant 0 : index
    %c0_52 = arith.constant 0 : index
    %c0_53 = arith.constant 0 : index
    %107 = vector.load %arg4[%c0_50, %c0_51, %c0_52, %c0_53] : memref<1x16x16x128xbf16, #tpu.memory_space<vmem>>, vector<1x16x16x128xbf16>
    tpu.vector_store %arg4[%c0_50, %c0_51, %c0_52, %c0_53], %106 {strides = array<i32>} : memref<1x16x16x128xbf16, #tpu.memory_space<vmem>>, vector<1x16x16x128xbf16>,
    %cst_54 = arith.constant dense<0.000000e+00> : vector<128xf32>
    %108 = vector.multi_reduction <add>, %104, %cst_54 [0] : vector<256x128xf32> to vector<128xf32>
    %109 = vector.shape_cast %108 : vector<128xf32> to vector<1x128xf32>
    %cst_55 = arith.constant 3.906250e-03 : f32
    %110 = vector.broadcast %cst_55 : f32 to vector<1x128xf32>
    %111 = arith.mulf %109, %110 : vector<1x128xf32>
    %112 = vector.broadcast %111 : vector<1x128xf32> to vector<256x128xf32>
    %113 = arith.subf %104, %112 : vector<256x128xf32>
    %114 = arith.mulf %113, %113 : vector<256x128xf32>
    %cst_56 = arith.constant dense<0.000000e+00> : vector<128xf32>
    %115 = vector.multi_reduction <add>, %114, %cst_56 [0] : vector<256x128xf32> to vector<128xf32>
    %116 = vector.shape_cast %115 : vector<128xf32> to vector<1x128xf32>
    %cst_57 = arith.constant 0.000000e+00 : f32
    %117 = vector.broadcast %cst_57 : f32 to vector<6x128xf32>
    %118 = tpu.concatenate %109, %116, %117 in 0 : vector<1x128xf32>, vector<1x128xf32>, vector<6x128xf32> -> vector<8x128xf32>
    %119 = vector.shape_cast %118 : vector<8x128xf32> to vector<1x8x128xf32>
    %c0_58 = arith.constant 0 : index
    %c0_59 = arith.constant 0 : index
    %c0_60 = arith.constant 0 : index
    %120 = vector.load %arg5[%c0_58, %c0_59, %c0_60] : memref<1x8x128xf32, #tpu.memory_space<vmem>>, vector<1x8x128xf32>
    tpu.vector_store %arg5[%c0_58, %c0_59, %c0_60], %119 {strides = array<i32>} : memref<1x8x128xf32, #tpu.memory_space<vmem>>, vector<1x8x128xf32>,
    return
  }
  func.func @transform_0(%arg0: i32) -> (i32, i32, i32, i32) {
    %c0_i32 = arith.constant 0 : i32
    %c0_i32_0 = arith.constant 0 : i32
    %c0_i32_1 = arith.constant 0 : i32
    %c0_i32_2 = arith.constant 0 : i32
    return %arg0, %c0_i32, %c0_i32_0, %c0_i32_1 : i32, i32, i32, i32
  }
  func.func @transform_1(%arg0: i32) -> (i32, i32, i32) {
    %c0_i32 = arith.constant 0 : i32
    %c0_i32_0 = arith.constant 0 : i32
    %c0_i32_1 = arith.constant 0 : i32
    %c0_i32_2 = arith.constant 0 : i32
    return %c0_i32, %c0_i32_0, %c0_i32_1 : i32, i32, i32
  }
  func.func @transform_2(%arg0: i32) -> (i32, i32) {
    %c0_i32 = arith.constant 0 : i32
    %c0_i32_0 = arith.constant 0 : i32
    %c0_i32_1 = arith.constant 0 : i32
    return %c0_i32, %c0_i32_0 : i32, i32
  }
  func.func @transform_3(%arg0: i32) -> (i32, i32, i32, i32) {
    %c0_i32 = arith.constant 0 : i32
    %c0_i32_0 = arith.constant 0 : i32
    %c0_i32_1 = arith.constant 0 : i32
    %c0_i32_2 = arith.constant 0 : i32
    return %arg0, %c0_i32, %c0_i32_0, %c0_i32_1 : i32, i32, i32, i32
  }
  func.func @transform_4(%arg0: i32) -> (i32, i32, i32) {
    %c0_i32 = arith.constant 0 : i32
    %c0_i32_0 = arith.constant 0 : i32
    %c0_i32_1 = arith.constant 0 : i32
    return %arg0, %c0_i32, %c0_i32_0 : i32, i32, i32
  }
}

module attributes {stable_mosaic.version = 11 : i64} {
  func.func @_bn_residual_act_kernel(%arg0: i32, %arg1: memref<1x16x16x128xbf16, #tpu.memory_space<vmem>>, %arg2: memref<1x128xf32, #tpu.memory_space<vmem>>, %arg3: memref<1x128xf32, #tpu.memory_space<vmem>>, %arg4: memref<1x16x16x128xf32, #tpu.memory_space<vmem>>, %arg5: memref<1x16x16x4xf32, #tpu.memory_space<vmem>>) attributes {dimension_semantics = [#tpu.dimension_semantics<parallel>], iteration_bounds = array<i64: 2>, scalar_prefetch = 0 : i64, scratch_operands = 0 : i64, tpu.core_type = #tpu.core_type<tc>, window_params = [{transform_indices = @transform_0, window_bounds = array<i64: 1, 16, 16, 128>}, {pipeline_mode = #tpu.pipeline_mode<synchronous>, transform_indices = @transform_1, window_bounds = array<i64: 1, 128>}, {pipeline_mode = #tpu.pipeline_mode<synchronous>, transform_indices = @transform_2, window_bounds = array<i64: 1, 128>}, {transform_indices = @transform_3, window_bounds = array<i64: 1, 16, 16, 128>}, {transform_indices = @transform_4, window_bounds = array<i64: 1, 16, 16, 4>}]} {
    %c0 = arith.constant 0 : index
    %c0_0 = arith.constant 0 : index
    %c0_1 = arith.constant 0 : index
    %c0_2 = arith.constant 0 : index
    %0 = vector.load %arg1[%c0, %c0_0, %c0_1, %c0_2] : memref<1x16x16x128xbf16, #tpu.memory_space<vmem>>, vector<1x16x16x128xbf16>
    %1 = arith.extf %0 : vector<1x16x16x128xbf16> to vector<1x16x16x128xf32>
    %c0_3 = arith.constant 0 : index
    %c0_4 = arith.constant 0 : index
    %2 = vector.load %arg2[%c0_3, %c0_4] : memref<1x128xf32, #tpu.memory_space<vmem>>, vector<1x128xf32>
    %3 = vector.shape_cast %2 : vector<1x128xf32> to vector<1x1x1x128xf32>
    %4 = vector.broadcast %3 : vector<1x1x1x128xf32> to vector<1x16x16x128xf32>
    %5 = arith.mulf %1, %4 : vector<1x16x16x128xf32>
    %c0_5 = arith.constant 0 : index
    %c0_6 = arith.constant 0 : index
    %6 = vector.load %arg3[%c0_5, %c0_6] : memref<1x128xf32, #tpu.memory_space<vmem>>, vector<1x128xf32>
    %7 = vector.shape_cast %6 : vector<1x128xf32> to vector<1x1x1x128xf32>
    %8 = vector.broadcast %7 : vector<1x1x1x128xf32> to vector<1x16x16x128xf32>
    %9 = arith.addf %5, %8 : vector<1x16x16x128xf32>
    %c0_7 = arith.constant 0 : index
    %c0_8 = arith.constant 0 : index
    %c0_9 = arith.constant 0 : index
    %c0_10 = arith.constant 0 : index
    %10 = vector.load %arg4[%c0_7, %c0_8, %c0_9, %c0_10] : memref<1x16x16x128xf32, #tpu.memory_space<vmem>>, vector<1x16x16x128xf32>
    %11 = arith.addf %9, %10 : vector<1x16x16x128xf32>
    %cst = arith.constant 0.000000e+00 : f32
    %12 = vector.broadcast %cst : f32 to vector<1x16x16x128xf32>
    %13 = arith.maximumf %11, %12 : vector<1x16x16x128xf32>
    %14 = vector.extract_strided_slice %13 {offsets = [0, 0, 0, 0], sizes = [1, 16, 16, 4], strides = [1, 1, 1, 1]} : vector<1x16x16x128xf32> to vector<1x16x16x4xf32>
    %c0_11 = arith.constant 0 : index
    %c0_12 = arith.constant 0 : index
    %c0_13 = arith.constant 0 : index
    %c0_14 = arith.constant 0 : index
    %15 = vector.load %arg5[%c0_11, %c0_12, %c0_13, %c0_14] : memref<1x16x16x4xf32, #tpu.memory_space<vmem>>, vector<1x16x16x4xf32>
    tpu.vector_store %arg5[%c0_11, %c0_12, %c0_13, %c0_14], %14 {strides = array<i32>} : memref<1x16x16x4xf32, #tpu.memory_space<vmem>>, vector<1x16x16x4xf32>,
    return
  }
  func.func @transform_0(%arg0: i32) -> (i32, i32, i32, i32) {
    %c0_i32 = arith.constant 0 : i32
    %c0_i32_0 = arith.constant 0 : i32
    %c0_i32_1 = arith.constant 0 : i32
    %c0_i32_2 = arith.constant 0 : i32
    return %arg0, %c0_i32, %c0_i32_0, %c0_i32_1 : i32, i32, i32, i32
  }
  func.func @transform_1(%arg0: i32) -> (i32, i32) {
    %c0_i32 = arith.constant 0 : i32
    %c0_i32_0 = arith.constant 0 : i32
    %c0_i32_1 = arith.constant 0 : i32
    return %c0_i32, %c0_i32_0 : i32, i32
  }
  func.func @transform_2(%arg0: i32) -> (i32, i32) {
    %c0_i32 = arith.constant 0 : i32
    %c0_i32_0 = arith.constant 0 : i32
    %c0_i32_1 = arith.constant 0 : i32
    return %c0_i32, %c0_i32_0 : i32, i32
  }
  func.func @transform_3(%arg0: i32) -> (i32, i32, i32, i32) {
    %c0_i32 = arith.constant 0 : i32
    %c0_i32_0 = arith.constant 0 : i32
    %c0_i32_1 = arith.constant 0 : i32
    %c0_i32_2 = arith.constant 0 : i32
    return %arg0, %c0_i32, %c0_i32_0, %c0_i32_1 : i32, i32, i32, i32
  }
  func.func @transform_4(%arg0: i32) -> (i32, i32, i32, i32) {
    %c0_i32 = arith.constant 0 : i32
    %c0_i32_0 = arith.constant 0 : i32
    %c0_i32_1 = arith.constant 0 : i32
    %c0_i32_2 = arith.constant 0 : i32
    return %arg0, %c0_i32, %c0_i32_0, %c0_i32_1 : i32, i32, i32, i32
  }
}

module attributes {stable_mosaic.version = 11 : i64} {
  func.func @_bn_act_conv_stats_kernel(%arg0: i32, %arg1: memref<1x16x16x128xbf16, #tpu.memory_space<vmem>>, %arg2: memref<1x128xf32, #tpu.memory_space<vmem>>, %arg3: memref<1x128xf32, #tpu.memory_space<vmem>>, %arg4: memref<9x128x128xbf16, #tpu.memory_space<vmem>>, %arg5: memref<1x128xf32, #tpu.memory_space<vmem>>, %arg6: memref<1x16x16x128xbf16, #tpu.memory_space<vmem>>, %arg7: memref<1x8x128xf32, #tpu.memory_space<vmem>>) attributes {dimension_semantics = [#tpu.dimension_semantics<parallel>], iteration_bounds = array<i64: 2>, scalar_prefetch = 0 : i64, scratch_operands = 0 : i64, tpu.core_type = #tpu.core_type<tc>, window_params = [{transform_indices = @transform_0, window_bounds = array<i64: 1, 16, 16, 128>}, {pipeline_mode = #tpu.pipeline_mode<synchronous>, transform_indices = @transform_1, window_bounds = array<i64: 1, 128>}, {pipeline_mode = #tpu.pipeline_mode<synchronous>, transform_indices = @transform_2, window_bounds = array<i64: 1, 128>}, {pipeline_mode = #tpu.pipeline_mode<synchronous>, transform_indices = @transform_3, window_bounds = array<i64: 9, 128, 128>}, {pipeline_mode = #tpu.pipeline_mode<synchronous>, transform_indices = @transform_4, window_bounds = array<i64: 1, 128>}, {transform_indices = @transform_5, window_bounds = array<i64: 1, 16, 16, 128>}, {transform_indices = @transform_6, window_bounds = array<i64: 1, 8, 128>}]} {
    %c0 = arith.constant 0 : index
    %c0_0 = arith.constant 0 : index
    %c0_1 = arith.constant 0 : index
    %c0_2 = arith.constant 0 : index
    %0 = vector.load %arg1[%c0, %c0_0, %c0_1, %c0_2] : memref<1x16x16x128xbf16, #tpu.memory_space<vmem>>, vector<1x16x16x128xbf16>
    %1 = arith.extf %0 : vector<1x16x16x128xbf16> to vector<1x16x16x128xf32>
    %c0_3 = arith.constant 0 : index
    %c0_4 = arith.constant 0 : index
    %2 = vector.load %arg2[%c0_3, %c0_4] : memref<1x128xf32, #tpu.memory_space<vmem>>, vector<1x128xf32>
    %3 = vector.shape_cast %2 : vector<1x128xf32> to vector<1x1x1x128xf32>
    %4 = vector.broadcast %3 : vector<1x1x1x128xf32> to vector<1x16x16x128xf32>
    %5 = arith.mulf %1, %4 : vector<1x16x16x128xf32>
    %c0_5 = arith.constant 0 : index
    %c0_6 = arith.constant 0 : index
    %6 = vector.load %arg3[%c0_5, %c0_6] : memref<1x128xf32, #tpu.memory_space<vmem>>, vector<1x128xf32>
    %7 = vector.shape_cast %6 : vector<1x128xf32> to vector<1x1x1x128xf32>
    %8 = vector.broadcast %7 : vector<1x1x1x128xf32> to vector<1x16x16x128xf32>
    %9 = arith.addf %5, %8 : vector<1x16x16x128xf32>
    %cst = arith.constant 0.000000e+00 : f32
    %10 = vector.broadcast %cst : f32 to vector<1x16x16x128xf32>
    %11 = arith.maximumf %9, %10 : vector<1x16x16x128xf32>
    %12 = vector.shape_cast %11 : vector<1x16x16x128xf32> to vector<256x128xf32>
    %13 = tpu.iota {dimensions = array<i32: 1>} : vector<1x16x16x128xi32>
    %14 = vector.shape_cast %13 : vector<1x16x16x128xi32> to vector<256x128xi32>
    %15 = tpu.iota {dimensions = array<i32: 2>} : vector<1x16x16x128xi32>
    %16 = vector.shape_cast %15 : vector<1x16x16x128xi32> to vector<256x128xi32>
    %c1_i32 = arith.constant 1 : i32
    %17 = vector.broadcast %c1_i32 : i32 to vector<256x128xi32>
    %18 = arith.cmpi sge, %14, %17 : vector<256x128xi32>
    %c14_i32 = arith.constant 14 : i32
    %19 = vector.broadcast %c14_i32 : i32 to vector<256x128xi32>
    %20 = arith.cmpi sle, %14, %19 : vector<256x128xi32>
    %c1_i32_7 = arith.constant 1 : i32
    %21 = vector.broadcast %c1_i32_7 : i32 to vector<256x128xi32>
    %22 = arith.cmpi sge, %16, %21 : vector<256x128xi32>
    %c14_i32_8 = arith.constant 14 : i32
    %23 = vector.broadcast %c14_i32_8 : i32 to vector<256x128xi32>
    %24 = arith.cmpi sle, %16, %23 : vector<256x128xi32>
    %cst_9 = arith.constant 0.000000e+00 : f32
    %25 = vector.broadcast %cst_9 : f32 to vector<17x128xf32>
    %26 = vector.extract_strided_slice %12 {offsets = [0, 0], sizes = [239, 128], strides = [1, 1]} : vector<256x128xf32> to vector<239x128xf32>
    %27 = tpu.concatenate %25, %26 in 0 : vector<17x128xf32>, vector<239x128xf32> -> vector<256x128xf32>
    %28 = arith.andi %18, %22 : vector<256x128xi1>
    %cst_10 = arith.constant 0.000000e+00 : f32
    %29 = vector.broadcast %cst_10 : f32 to vector<256x128xf32>
    %30 = arith.select %28, %27, %29 : vector<256x128xi1>, vector<256x128xf32>
    %31 = arith.truncf %30 : vector<256x128xf32> to vector<256x128xbf16>
    %c0_11 = arith.constant 0 : index
    %c0_12 = arith.constant 0 : index
    %c0_13 = arith.constant 0 : index
    %32 = vector.load %arg4[%c0_11, %c0_12, %c0_13] : memref<9x128x128xbf16, #tpu.memory_space<vmem>>, vector<1x128x128xbf16>
    %33 = vector.shape_cast %32 : vector<1x128x128xbf16> to vector<128x128xbf16>
    %cst_14 = arith.constant dense<0.000000e+00> : vector<256x128xf32>
    %34 = tpu.matmul %31, %33, %cst_14 {dimension_numbers = #tpu.dot_dimension_numbers<[1], [0], [0], [1], [0, 0, 1, 1], [], []>} : vector<256x128xbf16>, vector<128x128xbf16>, vector<256x128xf32> -> vector<256x128xf32>
    %cst_15 = arith.constant 0.000000e+00 : f32
    %35 = vector.broadcast %cst_15 : f32 to vector<16x128xf32>
    %36 = vector.extract_strided_slice %12 {offsets = [0, 0], sizes = [240, 128], strides = [1, 1]} : vector<256x128xf32> to vector<240x128xf32>
    %37 = tpu.concatenate %35, %36 in 0 : vector<16x128xf32>, vector<240x128xf32> -> vector<256x128xf32>
    %cst_16 = arith.constant 0.000000e+00 : f32
    %38 = vector.broadcast %cst_16 : f32 to vector<256x128xf32>
    %39 = arith.select %18, %37, %38 : vector<256x128xi1>, vector<256x128xf32>
    %40 = arith.truncf %39 : vector<256x128xf32> to vector<256x128xbf16>
    %c1 = arith.constant 1 : index
    %c0_17 = arith.constant 0 : index
    %c0_18 = arith.constant 0 : index
    %41 = vector.load %arg4[%c1, %c0_17, %c0_18] : memref<9x128x128xbf16, #tpu.memory_space<vmem>>, vector<1x128x128xbf16>
    %42 = vector.shape_cast %41 : vector<1x128x128xbf16> to vector<128x128xbf16>
    %cst_19 = arith.constant dense<0.000000e+00> : vector<256x128xf32>
    %43 = tpu.matmul %40, %42, %cst_19 {dimension_numbers = #tpu.dot_dimension_numbers<[1], [0], [0], [1], [0, 0, 1, 1], [], []>} : vector<256x128xbf16>, vector<128x128xbf16>, vector<256x128xf32> -> vector<256x128xf32>
    %44 = arith.addf %34, %43 : vector<256x128xf32>
    %cst_20 = arith.constant 0.000000e+00 : f32
    %45 = vector.broadcast %cst_20 : f32 to vector<15x128xf32>
    %46 = vector.extract_strided_slice %12 {offsets = [0, 0], sizes = [241, 128], strides = [1, 1]} : vector<256x128xf32> to vector<241x128xf32>
    %47 = tpu.concatenate %45, %46 in 0 : vector<15x128xf32>, vector<241x128xf32> -> vector<256x128xf32>
    %48 = arith.andi %18, %24 : vector<256x128xi1>
    %cst_21 = arith.constant 0.000000e+00 : f32
    %49 = vector.broadcast %cst_21 : f32 to vector<256x128xf32>
    %50 = arith.select %48, %47, %49 : vector<256x128xi1>, vector<256x128xf32>
    %51 = arith.truncf %50 : vector<256x128xf32> to vector<256x128xbf16>
    %c2 = arith.constant 2 : index
    %c0_22 = arith.constant 0 : index
    %c0_23 = arith.constant 0 : index
    %52 = vector.load %arg4[%c2, %c0_22, %c0_23] : memref<9x128x128xbf16, #tpu.memory_space<vmem>>, vector<1x128x128xbf16>
    %53 = vector.shape_cast %52 : vector<1x128x128xbf16> to vector<128x128xbf16>
    %cst_24 = arith.constant dense<0.000000e+00> : vector<256x128xf32>
    %54 = tpu.matmul %51, %53, %cst_24 {dimension_numbers = #tpu.dot_dimension_numbers<[1], [0], [0], [1], [0, 0, 1, 1], [], []>} : vector<256x128xbf16>, vector<128x128xbf16>, vector<256x128xf32> -> vector<256x128xf32>
    %55 = arith.addf %44, %54 : vector<256x128xf32>
    %cst_25 = arith.constant 0.000000e+00 : f32
    %56 = vector.broadcast %cst_25 : f32 to vector<1x128xf32>
    %57 = vector.extract_strided_slice %12 {offsets = [0, 0], sizes = [255, 128], strides = [1, 1]} : vector<256x128xf32> to vector<255x128xf32>
    %58 = tpu.concatenate %56, %57 in 0 : vector<1x128xf32>, vector<255x128xf32> -> vector<256x128xf32>
    %cst_26 = arith.constant 0.000000e+00 : f32
    %59 = vector.broadcast %cst_26 : f32 to vector<256x128xf32>
    %60 = arith.select %22, %58, %59 : vector<256x128xi1>, vector<256x128xf32>
    %61 = arith.truncf %60 : vector<256x128xf32> to vector<256x128xbf16>
    %c3 = arith.constant 3 : index
    %c0_27 = arith.constant 0 : index
    %c0_28 = arith.constant 0 : index
    %62 = vector.load %arg4[%c3, %c0_27, %c0_28] : memref<9x128x128xbf16, #tpu.memory_space<vmem>>, vector<1x128x128xbf16>
    %63 = vector.shape_cast %62 : vector<1x128x128xbf16> to vector<128x128xbf16>
    %cst_29 = arith.constant dense<0.000000e+00> : vector<256x128xf32>
    %64 = tpu.matmul %61, %63, %cst_29 {dimension_numbers = #tpu.dot_dimension_numbers<[1], [0], [0], [1], [0, 0, 1, 1], [], []>} : vector<256x128xbf16>, vector<128x128xbf16>, vector<256x128xf32> -> vector<256x128xf32>
    %65 = arith.addf %55, %64 : vector<256x128xf32>
    %66 = arith.truncf %12 : vector<256x128xf32> to vector<256x128xbf16>
    %c4 = arith.constant 4 : index
    %c0_30 = arith.constant 0 : index
    %c0_31 = arith.constant 0 : index
    %67 = vector.load %arg4[%c4, %c0_30, %c0_31] : memref<9x128x128xbf16, #tpu.memory_space<vmem>>, vector<1x128x128xbf16>
    %68 = vector.shape_cast %67 : vector<1x128x128xbf16> to vector<128x128xbf16>
    %cst_32 = arith.constant dense<0.000000e+00> : vector<256x128xf32>
    %69 = tpu.matmul %66, %68, %cst_32 {dimension_numbers = #tpu.dot_dimension_numbers<[1], [0], [0], [1], [0, 0, 1, 1], [], []>} : vector<256x128xbf16>, vector<128x128xbf16>, vector<256x128xf32> -> vector<256x128xf32>
    %70 = arith.addf %65, %69 : vector<256x128xf32>
    %cst_33 = arith.constant 0.000000e+00 : f32
    %71 = vector.broadcast %cst_33 : f32 to vector<1x128xf32>
    %72 = vector.extract_strided_slice %12 {offsets = [1, 0], sizes = [255, 128], strides = [1, 1]} : vector<256x128xf32> to vector<255x128xf32>
    %73 = tpu.concatenate %72, %71 in 0 : vector<255x128xf32>, vector<1x128xf32> -> vector<256x128xf32>
    %cst_34 = arith.constant 0.000000e+00 : f32
    %74 = vector.broadcast %cst_34 : f32 to vector<256x128xf32>
    %75 = arith.select %24, %73, %74 : vector<256x128xi1>, vector<256x128xf32>
    %76 = arith.truncf %75 : vector<256x128xf32> to vector<256x128xbf16>
    %c5 = arith.constant 5 : index
    %c0_35 = arith.constant 0 : index
    %c0_36 = arith.constant 0 : index
    %77 = vector.load %arg4[%c5, %c0_35, %c0_36] : memref<9x128x128xbf16, #tpu.memory_space<vmem>>, vector<1x128x128xbf16>
    %78 = vector.shape_cast %77 : vector<1x128x128xbf16> to vector<128x128xbf16>
    %cst_37 = arith.constant dense<0.000000e+00> : vector<256x128xf32>
    %79 = tpu.matmul %76, %78, %cst_37 {dimension_numbers = #tpu.dot_dimension_numbers<[1], [0], [0], [1], [0, 0, 1, 1], [], []>} : vector<256x128xbf16>, vector<128x128xbf16>, vector<256x128xf32> -> vector<256x128xf32>
    %80 = arith.addf %70, %79 : vector<256x128xf32>
    %cst_38 = arith.constant 0.000000e+00 : f32
    %81 = vector.broadcast %cst_38 : f32 to vector<15x128xf32>
    %82 = vector.extract_strided_slice %12 {offsets = [15, 0], sizes = [241, 128], strides = [1, 1]} : vector<256x128xf32> to vector<241x128xf32>
    %83 = tpu.concatenate %82, %81 in 0 : vector<241x128xf32>, vector<15x128xf32> -> vector<256x128xf32>
    %84 = arith.andi %20, %22 : vector<256x128xi1>
    %cst_39 = arith.constant 0.000000e+00 : f32
    %85 = vector.broadcast %cst_39 : f32 to vector<256x128xf32>
    %86 = arith.select %84, %83, %85 : vector<256x128xi1>, vector<256x128xf32>
    %87 = arith.truncf %86 : vector<256x128xf32> to vector<256x128xbf16>
    %c6 = arith.constant 6 : index
    %c0_40 = arith.constant 0 : index
    %c0_41 = arith.constant 0 : index
    %88 = vector.load %arg4[%c6, %c0_40, %c0_41] : memref<9x128x128xbf16, #tpu.memory_space<vmem>>, vector<1x128x128xbf16>
    %89 = vector.shape_cast %88 : vector<1x128x128xbf16> to vector<128x128xbf16>
    %cst_42 = arith.constant dense<0.000000e+00> : vector<256x128xf32>
    %90 = tpu.matmul %87, %89, %cst_42 {dimension_numbers = #tpu.dot_dimension_numbers<[1], [0], [0], [1], [0, 0, 1, 1], [], []>} : vector<256x128xbf16>, vector<128x128xbf16>, vector<256x128xf32> -> vector<256x128xf32>
    %91 = arith.addf %80, %90 : vector<256x128xf32>
    %cst_43 = arith.constant 0.000000e+00 : f32
    %92 = vector.broadcast %cst_43 : f32 to vector<16x128xf32>
    %93 = vector.extract_strided_slice %12 {offsets = [16, 0], sizes = [240, 128], strides = [1, 1]} : vector<256x128xf32> to vector<240x128xf32>
    %94 = tpu.concatenate %93, %92 in 0 : vector<240x128xf32>, vector<16x128xf32> -> vector<256x128xf32>
    %cst_44 = arith.constant 0.000000e+00 : f32
    %95 = vector.broadcast %cst_44 : f32 to vector<256x128xf32>
    %96 = arith.select %20, %94, %95 : vector<256x128xi1>, vector<256x128xf32>
    %97 = arith.truncf %96 : vector<256x128xf32> to vector<256x128xbf16>
    %c7 = arith.constant 7 : index
    %c0_45 = arith.constant 0 : index
    %c0_46 = arith.constant 0 : index
    %98 = vector.load %arg4[%c7, %c0_45, %c0_46] : memref<9x128x128xbf16, #tpu.memory_space<vmem>>, vector<1x128x128xbf16>
    %99 = vector.shape_cast %98 : vector<1x128x128xbf16> to vector<128x128xbf16>
    %cst_47 = arith.constant dense<0.000000e+00> : vector<256x128xf32>
    %100 = tpu.matmul %97, %99, %cst_47 {dimension_numbers = #tpu.dot_dimension_numbers<[1], [0], [0], [1], [0, 0, 1, 1], [], []>} : vector<256x128xbf16>, vector<128x128xbf16>, vector<256x128xf32> -> vector<256x128xf32>
    %101 = arith.addf %91, %100 : vector<256x128xf32>
    %cst_48 = arith.constant 0.000000e+00 : f32
    %102 = vector.broadcast %cst_48 : f32 to vector<17x128xf32>
    %103 = vector.extract_strided_slice %12 {offsets = [17, 0], sizes = [239, 128], strides = [1, 1]} : vector<256x128xf32> to vector<239x128xf32>
    %104 = tpu.concatenate %103, %102 in 0 : vector<239x128xf32>, vector<17x128xf32> -> vector<256x128xf32>
    %105 = arith.andi %20, %24 : vector<256x128xi1>
    %cst_49 = arith.constant 0.000000e+00 : f32
    %106 = vector.broadcast %cst_49 : f32 to vector<256x128xf32>
    %107 = arith.select %105, %104, %106 : vector<256x128xi1>, vector<256x128xf32>
    %108 = arith.truncf %107 : vector<256x128xf32> to vector<256x128xbf16>
    %c8 = arith.constant 8 : index
    %c0_50 = arith.constant 0 : index
    %c0_51 = arith.constant 0 : index
    %109 = vector.load %arg4[%c8, %c0_50, %c0_51] : memref<9x128x128xbf16, #tpu.memory_space<vmem>>, vector<1x128x128xbf16>
    %110 = vector.shape_cast %109 : vector<1x128x128xbf16> to vector<128x128xbf16>
    %cst_52 = arith.constant dense<0.000000e+00> : vector<256x128xf32>
    %111 = tpu.matmul %108, %110, %cst_52 {dimension_numbers = #tpu.dot_dimension_numbers<[1], [0], [0], [1], [0, 0, 1, 1], [], []>} : vector<256x128xbf16>, vector<128x128xbf16>, vector<256x128xf32> -> vector<256x128xf32>
    %112 = arith.addf %101, %111 : vector<256x128xf32>
    %c0_53 = arith.constant 0 : index
    %c0_54 = arith.constant 0 : index
    %113 = vector.load %arg5[%c0_53, %c0_54] : memref<1x128xf32, #tpu.memory_space<vmem>>, vector<1x128xf32>
    %114 = vector.broadcast %113 : vector<1x128xf32> to vector<256x128xf32>
    %115 = arith.addf %112, %114 : vector<256x128xf32>
    %116 = vector.shape_cast %115 : vector<256x128xf32> to vector<1x16x16x128xf32>
    %117 = arith.truncf %116 : vector<1x16x16x128xf32> to vector<1x16x16x128xbf16>
    %c0_55 = arith.constant 0 : index
    %c0_56 = arith.constant 0 : index
    %c0_57 = arith.constant 0 : index
    %c0_58 = arith.constant 0 : index
    %118 = vector.load %arg6[%c0_55, %c0_56, %c0_57, %c0_58] : memref<1x16x16x128xbf16, #tpu.memory_space<vmem>>, vector<1x16x16x128xbf16>
    tpu.vector_store %arg6[%c0_55, %c0_56, %c0_57, %c0_58], %117 {strides = array<i32>} : memref<1x16x16x128xbf16, #tpu.memory_space<vmem>>, vector<1x16x16x128xbf16>,
    %cst_59 = arith.constant dense<0.000000e+00> : vector<128xf32>
    %119 = vector.multi_reduction <add>, %115, %cst_59 [0] : vector<256x128xf32> to vector<128xf32>
    %120 = vector.shape_cast %119 : vector<128xf32> to vector<1x128xf32>
    %cst_60 = arith.constant 3.906250e-03 : f32
    %121 = vector.broadcast %cst_60 : f32 to vector<1x128xf32>
    %122 = arith.mulf %120, %121 : vector<1x128xf32>
    %123 = vector.broadcast %122 : vector<1x128xf32> to vector<256x128xf32>
    %124 = arith.subf %115, %123 : vector<256x128xf32>
    %125 = arith.mulf %124, %124 : vector<256x128xf32>
    %cst_61 = arith.constant dense<0.000000e+00> : vector<128xf32>
    %126 = vector.multi_reduction <add>, %125, %cst_61 [0] : vector<256x128xf32> to vector<128xf32>
    %127 = vector.shape_cast %126 : vector<128xf32> to vector<1x128xf32>
    %cst_62 = arith.constant 0.000000e+00 : f32
    %128 = vector.broadcast %cst_62 : f32 to vector<6x128xf32>
    %129 = tpu.concatenate %120, %127, %128 in 0 : vector<1x128xf32>, vector<1x128xf32>, vector<6x128xf32> -> vector<8x128xf32>
    %130 = vector.shape_cast %129 : vector<8x128xf32> to vector<1x8x128xf32>
    %c0_63 = arith.constant 0 : index
    %c0_64 = arith.constant 0 : index
    %c0_65 = arith.constant 0 : index
    %131 = vector.load %arg7[%c0_63, %c0_64, %c0_65] : memref<1x8x128xf32, #tpu.memory_space<vmem>>, vector<1x8x128xf32>
    tpu.vector_store %arg7[%c0_63, %c0_64, %c0_65], %130 {strides = array<i32>} : memref<1x8x128xf32, #tpu.memory_space<vmem>>, vector<1x8x128xf32>,
    return
  }
  func.func @transform_0(%arg0: i32) -> (i32, i32, i32, i32) {
    %c0_i32 = arith.constant 0 : i32
    %c0_i32_0 = arith.constant 0 : i32
    %c0_i32_1 = arith.constant 0 : i32
    %c0_i32_2 = arith.constant 0 : i32
    return %arg0, %c0_i32, %c0_i32_0, %c0_i32_1 : i32, i32, i32, i32
  }
  func.func @transform_1(%arg0: i32) -> (i32, i32) {
    %c0_i32 = arith.constant 0 : i32
    %c0_i32_0 = arith.constant 0 : i32
    %c0_i32_1 = arith.constant 0 : i32
    return %c0_i32, %c0_i32_0 : i32, i32
  }
  func.func @transform_2(%arg0: i32) -> (i32, i32) {
    %c0_i32 = arith.constant 0 : i32
    %c0_i32_0 = arith.constant 0 : i32
    %c0_i32_1 = arith.constant 0 : i32
    return %c0_i32, %c0_i32_0 : i32, i32
  }
  func.func @transform_3(%arg0: i32) -> (i32, i32, i32) {
    %c0_i32 = arith.constant 0 : i32
    %c0_i32_0 = arith.constant 0 : i32
    %c0_i32_1 = arith.constant 0 : i32
    %c0_i32_2 = arith.constant 0 : i32
    return %c0_i32, %c0_i32_0, %c0_i32_1 : i32, i32, i32
  }
  func.func @transform_4(%arg0: i32) -> (i32, i32) {
    %c0_i32 = arith.constant 0 : i32
    %c0_i32_0 = arith.constant 0 : i32
    %c0_i32_1 = arith.constant 0 : i32
    return %c0_i32, %c0_i32_0 : i32, i32
  }
  func.func @transform_5(%arg0: i32) -> (i32, i32, i32, i32) {
    %c0_i32 = arith.constant 0 : i32
    %c0_i32_0 = arith.constant 0 : i32
    %c0_i32_1 = arith.constant 0 : i32
    %c0_i32_2 = arith.constant 0 : i32
    return %arg0, %c0_i32, %c0_i32_0, %c0_i32_1 : i32, i32, i32, i32
  }
  func.func @transform_6(%arg0: i32) -> (i32, i32, i32) {
    %c0_i32 = arith.constant 0 : i32
    %c0_i32_0 = arith.constant 0 : i32
    %c0_i32_1 = arith.constant 0 : i32
    return %arg0, %c0_i32, %c0_i32_0 : i32, i32, i32
  }
}

</mosaic_0001>

<llo_original>
// kernel: residual_block.5
$region0: #{residual_block.5}
  #allocation0 [shape = 'u32[]', space=smem, size = 0x4, offset = 0x4, fixed_abs, tag = 'smem constant byte address 0x4 - core index']
  #allocation1 [shape = 'u32[72,128]{1,0:T(1,128)}', space=vmem, size = 0x9000, scoped, tag = 'internal scratch']
  %s0 = inlined_call_operand.vmem [shape: bf16[2,16,16,128], index: 0, kind: input, shape index: {}]
  %s1 = inlined_call_operand.vmem [shape: f32[1,128], index: 1, kind: input, shape index: {}]
  %s2 = inlined_call_operand.vmem [shape: f32[1,128], index: 2, kind: input, shape index: {}]
  %s3 = inlined_call_operand.vmem [shape: f32[2,16,16,128], index: 3, kind: input, shape index: {}]
  %s4 = inlined_call_operand.vmem [shape: f32[2,16,16,4], index: 4, kind: output, shape index: {}]
  %s5 = sld [smem:[#allocation0]]
  $region49: #{residual_block.5} parent=0
    _
  %s7 = ssub.s32 1, %s5
  %s8 = scalar_select 0, %s7, %s5
  loop: start=0, step=1, limit=4
  $region2: #{residual_block.5} parent=0 // loop_pre_header
    _
  $region3: #{residual_block.5} parent=0 // loop_header
    %s10 = sphi 0, %s14
    %p11 = scmp.ge.s32.totalorder %s10, 4
    %s20 = sphi 0, %s22
    %s23 = sphi 0, %s20
    %s24 = sphi 0, %s23
    %s40 = sphi 0, %s24
    %s44 = sphi 0, %s44
    %s46 = sphi 0, %s44
    %s47 = sphi 0, %s46
    %s61 = sphi 0, %s47
    %s65 = sphi 0, %s65
    %s67 = sphi 0, %s65
    %s68 = sphi 0, %s67
    %s82 = sphi 0, %s68
    %s88 = sphi 0, %s90
    %s91 = sphi 0, %s88
    %s92 = sphi 0, %s91
    %s108 = sphi 0, %s92
    %s114 = sphi 0, %s116
    %s117 = sphi 0, %s114
    %s118 = sphi 0, %s117
    %s134 = sphi 0, %s118
  $region4: #{residual_block.5} parent=0 // loop_header_branch
    %13 = sbr.rel (%p11) target = $region8
  $region5: #{residual_block.5} parent=0 // loop_body
    %s15 = ssub.s32 %s10, 1
    %s16 = ssub.s32 %s10, 2
    %s17 = sadd.s32 %s10, 1
    %s18 = ssub.s32 %s10, %s17
    %p19 = scmp.eq.s32.totalorder %s18, 0
    %s21 = sadd.s32 %s20, 1
    %s22 = scalar_select %p19, %s20, %s21
    %p25 = pneg %p19
    %p26 = scmp.eq.s32.totalorder %s10, 1
    %p27 = por %p25, %p26
    %p28 = scmp.ne.s32.totalorder %s20, %s23
    %p29 = scmp.eq.s32.totalorder %s10, 0
    %p30 = por %p28, %p29
    %p31 = scmp.ne.s32.totalorder %s20, %s23
    %p32 = scmp.eq.s32.totalorder %s15, 1
    %p33 = por %p31, %p32
    %p34 = scmp.ne.s32.totalorder %s23, %s24
    %p35 = scmp.eq.s32.totalorder %s15, 0
    %p36 = por %p34, %p35
    %p37 = scmp.ne.s32.totalorder %s23, %s24
    %p38 = scmp.eq.s32.totalorder %s16, 1
    %p39 = por %p37, %p38
    %p41 = scmp.ne.s32.totalorder %s24, %s40
    %p42 = scmp.eq.s32.totalorder %s16, 0
    %p43 = por %p41, %p42
    %s45 = sadd.s32 %s44, 1
    %p48 = scmp.eq.s32.totalorder %s10, 1
    %p49 = scmp.ne.s32.totalorder %s44, %s46
    %p50 = scmp.eq.s32.totalorder %s10, 0
    %p51 = por %p49, %p50
    %p52 = scmp.ne.s32.totalorder %s44, %s46
    %p53 = scmp.eq.s32.totalorder %s15, 1
    %p54 = por %p52, %p53
    %p55 = scmp.ne.s32.totalorder %s46, %s47
    %p56 = scmp.eq.s32.totalorder %s15, 0
    %p57 = por %p55, %p56
    %p58 = scmp.ne.s32.totalorder %s46, %s47
    %p59 = scmp.eq.s32.totalorder %s16, 1
    %p60 = por %p58, %p59
    %p62 = scmp.ne.s32.totalorder %s47, %s61
    %p63 = scmp.eq.s32.totalorder %s16, 0
    %p64 = por %p62, %p63
    %s66 = sadd.s32 %s65, 1
    %p69 = scmp.eq.s32.totalorder %s10, 1
    %p70 = scmp.ne.s32.totalorder %s65, %s67
    %p71 = scmp.eq.s32.totalorder %s10, 0
    %p72 = por %p70, %p71
    %p73 = scmp.ne.s32.totalorder %s65, %s67
    %p74 = scmp.eq.s32.totalorder %s15, 1
    %p75 = por %p73, %p74
    %p76 = scmp.ne.s32.totalorder %s67, %s68
    %p77 = scmp.eq.s32.totalorder %s15, 0
    %p78 = por %p76, %p77
    %p79 = scmp.ne.s32.totalorder %s67, %s68
    %p80 = scmp.eq.s32.totalorder %s16, 1
    %p81 = por %p79, %p80
    %p83 = scmp.ne.s32.totalorder %s68, %s82
    %p84 = scmp.eq.s32.totalorder %s16, 0
    %p85 = por %p83, %p84
    %s86 = ssub.s32 %s10, %s17
    %p87 = scmp.eq.s32.totalorder %s86, 0
    %s89 = sadd.s32 %s88, 1
    %s90 = scalar_select %p87, %s88, %s89
    %p93 = pneg %p87
    %p94 = scmp.eq.s32.totalorder %s10, 1
    %p95 = por %p93, %p94
    %p96 = scmp.ne.s32.totalorder %s88, %s91
    %p97 = scmp.eq.s32.totalorder %s10, 0
    %p98 = por %p96, %p97
    %p99 = scmp.ne.s32.totalorder %s88, %s91
    %p100 = scmp.eq.s32.totalorder %s15, 1
    %p101 = por %p99, %p100
    %p102 = scmp.ne.s32.totalorder %s91, %s92
    %p103 = scmp.eq.s32.totalorder %s15, 0
    %p104 = por %p102, %p103
    %p105 = scmp.ne.s32.totalorder %s91, %s92
    %p106 = scmp.eq.s32.totalorder %s16, 1
    %p107 = por %p105, %p106
    %p109 = scmp.ne.s32.totalorder %s92, %s108
    %p110 = scmp.eq.s32.totalorder %s16, 0
    %p111 = por %p109, %p110
    %s112 = ssub.s32 %s10, %s17
    %p113 = scmp.eq.s32.totalorder %s112, 0
    %s115 = sadd.s32 %s114, 1
    %s116 = scalar_select %p113, %s114, %s115
    %p119 = pneg %p113
    %p120 = scmp.eq.s32.totalorder %s10, 1
    %p121 = por %p119, %p120
    %p122 = scmp.ne.s32.totalorder %s114, %s117
    %p123 = scmp.eq.s32.totalorder %s10, 0
    %p124 = por %p122, %p123
    %p125 = scmp.ne.s32.totalorder %s114, %s117
    %p126 = scmp.eq.s32.totalorder %s15, 1
    %p127 = por %p125, %p126
    %p128 = scmp.ne.s32.totalorder %s117, %s118
    %p129 = scmp.eq.s32.totalorder %s15, 0
    %p130 = por %p128, %p129
    %p131 = scmp.ne.s32.totalorder %s117, %s118
    %p132 = scmp.eq.s32.totalorder %s16, 1
    %p133 = por %p131, %p132
    %p135 = scmp.ne.s32.totalorder %s118, %s134
    %p136 = scmp.eq.s32.totalorder %s16, 0
    %p137 = por %p135, %p136
    %p138 = scmp.le.s32.totalorder 1, %s10
    %p139 = scmp.lt.s32.totalorder %s10, 3
    %p140 = pnand %p138, %p139
    %p141 = pneg %p140
    // Predicated region
    $region9: #{residual_block.5} parent=5 // pred_check
      _
    $region10: #{residual_block.5} parent=5 // pred_check_branch
      %143 = sbr.rel (%p140) target = $region12
    $region11: #{residual_block.5} parent=5 // pred_region
      %s144 = ssub.s32 %s10, 1
      // Predicated region
      $region13: #{residual_block.5} parent=11 // pred_check
        %p145 = pneg %p57
      $region14: #{residual_block.5} parent=11 // pred_check_branch
        %147 = sbr.rel (%p145) target = $region16
      $region15: #{residual_block.5} parent=11 // pred_region
        _
      $region16: #{residual_block.5} parent=11 // pred_fallthru
        _
      // Predicated region
      $region17: #{residual_block.5} parent=11 // pred_check
        %p148 = pneg %p78
      $region18: #{residual_block.5} parent=11 // pred_check_branch
        %150 = sbr.rel (%p148) target = $region20
      $region19: #{residual_block.5} parent=11 // pred_region
        _
      $region20: #{residual_block.5} parent=11 // pred_fallthru
        _
    $region12: #{residual_block.5} parent=5 // pred_fallthru
      _
    %p151 = scmp.lt.s32.totalorder %s10, 2
    // Predicated region
    $region21: #{residual_block.5} parent=5 // pred_check
      %p152 = pneg %p151
    $region22: #{residual_block.5} parent=5 // pred_check_branch
      %154 = sbr.rel (%p152) target = $region24
    $region23: #{residual_block.5} parent=5 // pred_region
      // Predicated region
      $region25: #{residual_block.5} parent=23 // pred_check
        %p155 = pneg %p30
      $region26: #{residual_block.5} parent=23 // pred_check_branch
        %157 = sbr.rel (%p155) target = $region28
      $region27: #{residual_block.5} parent=23 // pred_region
        %p158 = scmp.lt.s32.totalorder %s10, 1
        %s159 = scalar_select %p158, %s10, 1
        %s160 = smul.addr %s159, 32
        %s161 = smul.addr %s160, 4
        %s162 = scalar_lea.vmem %s0, %s161
      $region28: #{residual_block.5} parent=23 // pred_fallthru
        _
      // Predicated region
      $region29: #{residual_block.5} parent=23 // pred_check
        %p163 = pneg %p98
      $region30: #{residual_block.5} parent=23 // pred_check_branch
        %165 = sbr.rel (%p163) target = $region32
      $region31: #{residual_block.5} parent=23 // pred_region
        %p166 = scmp.lt.s32.totalorder %s10, 1
        %s167 = scalar_select %p166, %s10, 1
        %s168 = smul.addr %s167, 32
        %s169 = smul.addr %s168, 8
        %s170 = scalar_lea.vmem %s3, %s169
      $region32: #{residual_block.5} parent=23 // pred_fallthru
        _
    $region24: #{residual_block.5} parent=5 // pred_fallthru
      _
    %p171 = scmp.le.s32.totalorder 1, %s10
    %p172 = scmp.lt.s32.totalorder %s10, 3
    %p173 = pnand %p171, %p172
    %p174 = pneg %p173
    // Predicated region
    $region33: #{residual_block.5} parent=5 // pred_check
      _
    $region34: #{residual_block.5} parent=5 // pred_check_branch
      %176 = sbr.rel (%p173) target = $region36
    $region35: #{residual_block.5} parent=5 // pred_region
      %s177 = ssub.s32 %s10, 1
      %p178 = scmp.lt.s32.totalorder %s15, 1
      %s179 = scalar_select %p178, %s15, 1
      %s180 = smul.addr %s179, 32
      %s181 = smul.addr %s180, 4
      %s182 = scalar_lea.vmem %s0, %s181
      %p183 = pneg %p36
      %p184 = pneg %p33
      %p185 = pneg %p57
      %p186 = pneg %p54
      %p187 = pneg %p78
      %p188 = pneg %p75
      %p189 = scmp.lt.s32.totalorder %s15, 1
      %s190 = scalar_select %p189, %s15, 1
      %s191 = smul.addr %s190, 32
      %s192 = smul.addr %s191, 8
      %s193 = scalar_lea.vmem %s3, %s192
      %p194 = pneg %p104
      %p195 = pneg %p101
      %p196 = pneg %p130
      %p197 = pneg %p127
      %p198 = scmp.lt.s32.totalorder %s15, 1
      %s199 = scalar_select %p198, %s15, 1
      %s200 = smul.addr %s199, 32
      %s201 = smul.addr %s200, 8
      %s202 = scalar_lea.vmem %s4, %s201
      %p203 = scmp.lt.s32.totalorder %s15, 1
      %s204 = scalar_select %p203, %s15, 1
      %s205 = smul.addr %s204, 32
      %s206 = smul.addr %s205, 4
      %s207 = scalar_lea.vmem %s0, %s206
      %p208 = scmp.lt.s32.totalorder %s15, 1
      %s209 = scalar_select %p208, %s15, 1
      %s210 = smul.addr %s209, 32
      %s211 = smul.addr %s210, 8
      %s212 = scalar_lea.vmem %s3, %s211
      %p213 = scmp.lt.s32.totalorder %s15, 1
      %s214 = scalar_select %p213, %s15, 1
      %s215 = smul.addr %s214, 32
      %s216 = smul.addr %s215, 8
      %s217 = scalar_lea.vmem %s4, %s216
      %v218 = vld [vmem:[%s207] sm:$0xf]
      %v219 = vld [vmem:[%s207 + $0x4] sm:$0xf]
      %v220 = vld [vmem:[%s207 + $0x8] sm:$0xf]
      %v221 = vld [vmem:[%s207 + $0xc] sm:$0xf]
      %v222 = vld [vmem:[%s207 + $0x10] sm:$0xf]
      %v223 = vld [vmem:[%s207 + $0x14] sm:$0xf]
      %v224 = vld [vmem:[%s207 + $0x18] sm:$0xf]
      %v225 = vld [vmem:[%s207 + $0x1c] sm:$0xf]
      %v226 = vld [vmem:[%s207 + $0x20] sm:$0xf]
      %v227 = vld [vmem:[%s207 + $0x24] sm:$0xf]
      %v228 = vld [vmem:[%s207 + $0x28] sm:$0xf]
      %v229 = vld [vmem:[%s207 + $0x2c] sm:$0xf]
      %v230 = vld [vmem:[%s207 + $0x30] sm:$0xf]
      %v231 = vld [vmem:[%s207 + $0x34] sm:$0xf]
      %v232 = vld [vmem:[%s207 + $0x38] sm:$0xf]
      %v233 = vld [vmem:[%s207 + $0x3c] sm:$0xf]
      %v234 = vld [vmem:[%s207 + $0x40] sm:$0xf]
      %v235 = vld [vmem:[%s207 + $0x44] sm:$0xf]
      %v236 = vld [vmem:[%s207 + $0x48] sm:$0xf]
      %v237 = vld [vmem:[%s207 + $0x4c] sm:$0xf]
      %v238 = vld [vmem:[%s207 + $0x50] sm:$0xf]
      %v239 = vld [vmem:[%s207 + $0x54] sm:$0xf]
      %v240 = vld [vmem:[%s207 + $0x58] sm:$0xf]
      %v241 = vld [vmem:[%s207 + $0x5c] sm:$0xf]
      %v242 = vld [vmem:[%s207 + $0x60] sm:$0xf]
      %v243 = vld [vmem:[%s207 + $0x64] sm:$0xf]
      %v244 = vld [vmem:[%s207 + $0x68] sm:$0xf]
      %v245 = vld [vmem:[%s207 + $0x6c] sm:$0xf]
      %v246 = vld [vmem:[%s207 + $0x70] sm:$0xf]
      %v247 = vld [vmem:[%s207 + $0x74] sm:$0xf]
      %v248 = vld [vmem:[%s207 + $0x78] sm:$0xf]
      %v249 = vld [vmem:[%s207 + $0x7c] sm:$0xf]
      %v250 = vunpack.c.l.bf16 %v218
      %v251 = vunpack.c.l.bf16 %v219
      %v252 = vunpack.c.l.bf16 %v220
      %v253 = vunpack.c.l.bf16 %v221
      %v254 = vunpack.c.l.bf16 %v222
      %v255 = vunpack.c.l.bf16 %v223
      %v256 = vunpack.c.l.bf16 %v224
      %v257 = vunpack.c.l.bf16 %v225
      %v258 = vunpack.c.l.bf16 %v226
      %v259 = vunpack.c.l.bf16 %v227
      %v260 = vunpack.c.l.bf16 %v228
      %v261 = vunpack.c.l.bf16 %v229
      %v262 = vunpack.c.l.bf16 %v230
      %v263 = vunpack.c.l.bf16 %v231
      %v264 = vunpack.c.l.bf16 %v232
      %v265 = vunpack.c.l.bf16 %v233
      %v266 = vunpack.c.l.bf16 %v234
      %v267 = vunpack.c.l.bf16 %v235
      %v268 = vunpack.c.l.bf16 %v236
      %v269 = vunpack.c.l.bf16 %v237
      %v270 = vunpack.c.l.bf16 %v238
      %v271 = vunpack.c.l.bf16 %v239
      %v272 = vunpack.c.l.bf16 %v240
      %v273 = vunpack.c.l.bf16 %v241
      %v274 = vunpack.c.l.bf16 %v242
      %v275 = vunpack.c.l.bf16 %v243
      %v276 = vunpack.c.l.bf16 %v244
      %v277 = vunpack.c.l.bf16 %v245
      %v278 = vunpack.c.l.bf16 %v246
      %v279 = vunpack.c.l.bf16 %v247
      %v280 = vunpack.c.l.bf16 %v248
      %v281 = vunpack.c.l.bf16 %v249
      %v282 = vld [vmem:[%s1] sm:$0x1]
      %v284 = vperm.slane %v282, 0
      %v286 = vmul.f32 %v250, %v284
      %v287 = vmul.f32 %v251, %v284
      %v288 = vmul.f32 %v252, %v284
      %v289 = vmul.f32 %v253, %v284
      %v290 = vmul.f32 %v254, %v284
      %v291 = vmul.f32 %v255, %v284
      %v292 = vmul.f32 %v256, %v284
      %v293 = vmul.f32 %v257, %v284
      %v294 = vmul.f32 %v258, %v284
      %v295 = vmul.f32 %v259, %v284
      %v296 = vmul.f32 %v260, %v284
      %v297 = vmul.f32 %v261, %v284
      %v298 = vmul.f32 %v262, %v284
      %v299 = vmul.f32 %v263, %v284
      %v300 = vmul.f32 %v264, %v284
      %v301 = vmul.f32 %v265, %v284
      %v302 = vmul.f32 %v266, %v284
      %v303 = vmul.f32 %v267, %v284
      %v304 = vmul.f32 %v268, %v284
      %v305 = vmul.f32 %v269, %v284
      %v306 = vmul.f32 %v270, %v284
      %v307 = vmul.f32 %v271, %v284
      %v308 = vmul.f32 %v272, %v284
      %v309 = vmul.f32 %v273, %v284
      %v310 = vmul.f32 %v274, %v284
      %v311 = vmul.f32 %v275, %v284
      %v312 = vmul.f32 %v276, %v284
      %v313 = vmul.f32 %v277, %v284
      %v314 = vmul.f32 %v278, %v284
      %v315 = vmul.f32 %v279, %v284
      %v316 = vmul.f32 %v280, %v284
      %v317 = vmul.f32 %v281, %v284
      %v318 = vld [vmem:[%s2] sm:$0x1]
      %v320 = vperm.slane %v318, 0
      %v322 = vadd.f32 %v286, %v320
      %v323 = vadd.f32 %v287, %v320
      %v324 = vadd.f32 %v288, %v320
      %v325 = vadd.f32 %v289, %v320
      %v326 = vadd.f32 %v290, %v320
      %v327 = vadd.f32 %v291, %v320
      %v328 = vadd.f32 %v292, %v320
      %v329 = vadd.f32 %v293, %v320
      %v330 = vadd.f32 %v294, %v320
      %v331 = vadd.f32 %v295, %v320
      %v332 = vadd.f32 %v296, %v320
      %v333 = vadd.f32 %v297, %v320
      %v334 = vadd.f32 %v298, %v320
      %v335 = vadd.f32 %v299, %v320
      %v336 = vadd.f32 %v300, %v320
      %v337 = vadd.f32 %v301, %v320
      %v338 = vadd.f32 %v302, %v320
      %v339 = vadd.f32 %v303, %v320
      %v340 = vadd.f32 %v304, %v320
      %v341 = vadd.f32 %v305, %v320
      %v342 = vadd.f32 %v306, %v320
      %v343 = vadd.f32 %v307, %v320
      %v344 = vadd.f32 %v308, %v320
      %v345 = vadd.f32 %v309, %v320
      %v346 = vadd.f32 %v310, %v320
      %v347 = vadd.f32 %v311, %v320
      %v348 = vadd.f32 %v312, %v320
      %v349 = vadd.f32 %v313, %v320
      %v350 = vadd.f32 %v314, %v320
      %v351 = vadd.f32 %v315, %v320
      %v352 = vadd.f32 %v316, %v320
      %v353 = vadd.f32 %v317, %v320
      %v354 = vld [vmem:[%s212] sm:$0xff]
      %v355 = vld [vmem:[%s212 + $0x8] sm:$0xff]
      %v356 = vld [vmem:[%s212 + $0x10] sm:$0xff]
      %v357 = vld [vmem:[%s212 + $0x18] sm:$0xff]
      %v358 = vld [vmem:[%s212 + $0x20] sm:$0xff]
      %v359 = vld [vmem:[%s212 + $0x28] sm:$0xff]
      %v360 = vld [vmem:[%s212 + $0x30] sm:$0xff]
      %v361 = vld [vmem:[%s212 + $0x38] sm:$0xff]
      %v362 = vld [vmem:[%s212 + $0x40] sm:$0xff]
      %v363 = vld [vmem:[%s212 + $0x48] sm:$0xff]
      %v364 = vld [vmem:[%s212 + $0x50] sm:$0xff]
      %v365 = vld [vmem:[%s212 + $0x58] sm:$0xff]
      %v366 = vld [vmem:[%s212 + $0x60] sm:$0xff]
      %v367 = vld [vmem:[%s212 + $0x68] sm:$0xff]
      %v368 = vld [vmem:[%s212 + $0x70] sm:$0xff]
      %v369 = vld [vmem:[%s212 + $0x78] sm:$0xff]
      %v370 = vld [vmem:[%s212 + $0x80] sm:$0xff]
      %v371 = vld [vmem:[%s212 + $0x88] sm:$0xff]
      %v372 = vld [vmem:[%s212 + $0x90] sm:$0xff]
      %v373 = vld [vmem:[%s212 + $0x98] sm:$0xff]
      %v374 = vld [vmem:[%s212 + $0xa0] sm:$0xff]
      %v375 = vld [vmem:[%s212 + $0xa8] sm:$0xff]
      %v376 = vld [vmem:[%s212 + $0xb0] sm:$0xff]
      %v377 = vld [vmem:[%s212 + $0xb8] sm:$0xff]
      %v378 = vld [vmem:[%s212 + $0xc0] sm:$0xff]
      %v379 = vld [vmem:[%s212 + $0xc8] sm:$0xff]
      %v380 = vld [vmem:[%s212 + $0xd0] sm:$0xff]
      %v381 = vld [vmem:[%s212 + $0xd8] sm:$0xff]
      %v382 = vld [vmem:[%s212 + $0xe0] sm:$0xff]
      %v383 = vld [vmem:[%s212 + $0xe8] sm:$0xff]
      %v384 = vld [vmem:[%s212 + $0xf0] sm:$0xff]
      %v385 = vld [vmem:[%s212 + $0xf8] sm:$0xff]
      %v386 = vadd.f32 %v322, %v354
      %v387 = vadd.f32 %v323, %v355
      %v388 = vadd.f32 %v324, %v356
      %v389 = vadd.f32 %v325, %v357
      %v390 = vadd.f32 %v326, %v358
      %v391 = vadd.f32 %v327, %v359
      %v392 = vadd.f32 %v328, %v360
      %v393 = vadd.f32 %v329, %v361
      %v394 = vadd.f32 %v330, %v362
      %v395 = vadd.f32 %v331, %v363
      %v396 = vadd.f32 %v332, %v364
      %v397 = vadd.f32 %v333, %v365
      %v398 = vadd.f32 %v334, %v366
      %v399 = vadd.f32 %v335, %v367
      %v400 = vadd.f32 %v336, %v368
      %v401 = vadd.f32 %v337, %v369
      %v402 = vadd.f32 %v338, %v370
      %v403 = vadd.f32 %v339, %v371
      %v404 = vadd.f32 %v340, %v372
      %v405 = vadd.f32 %v341, %v373
      %v406 = vadd.f32 %v342, %v374
      %v407 = vadd.f32 %v343, %v375
      %v408 = vadd.f32 %v344, %v376
      %v409 = vadd.f32 %v345, %v377
      %v410 = vadd.f32 %v346, %v378
      %v411 = vadd.f32 %v347, %v379
      %v412 = vadd.f32 %v348, %v380
      %v413 = vadd.f32 %v349, %v381
      %v414 = vadd.f32 %v350, %v382
      %v415 = vadd.f32 %v351, %v383
      %v416 = vadd.f32 %v352, %v384
      %v417 = vadd.f32 %v353, %v385
      %v418 = vmax.f32 %v386, 0.0
      %v419 = vmax.f32 %v387, 0.0
      %v420 = vmax.f32 %v388, 0.0
      %v421 = vmax.f32 %v389, 0.0
      %v422 = vmax.f32 %v390, 0.0
      %v423 = vmax.f32 %v391, 0.0
      %v424 = vmax.f32 %v392, 0.0
      %v425 = vmax.f32 %v393, 0.0
      %v426 = vmax.f32 %v394, 0.0
      %v427 = vmax.f32 %v395, 0.0
      %v428 = vmax.f32 %v396, 0.0
      %v429 = vmax.f32 %v397, 0.0
      %v430 = vmax.f32 %v398, 0.0
      %v431 = vmax.f32 %v399, 0.0
      %v432 = vmax.f32 %v400, 0.0
      %v433 = vmax.f32 %v401, 0.0
      %v434 = vmax.f32 %v402, 0.0
      %v435 = vmax.f32 %v403, 0.0
      %v436 = vmax.f32 %v404, 0.0
      %v437 = vmax.f32 %v405, 0.0
      %v438 = vmax.f32 %v406, 0.0
      %v439 = vmax.f32 %v407, 0.0
      %v440 = vmax.f32 %v408, 0.0
      %v441 = vmax.f32 %v409, 0.0
      %v442 = vmax.f32 %v410, 0.0
      %v443 = vmax.f32 %v411, 0.0
      %v444 = vmax.f32 %v412, 0.0
      %v445 = vmax.f32 %v413, 0.0
      %v446 = vmax.f32 %v414, 0.0
      %v447 = vmax.f32 %v415, 0.0
      %v448 = vmax.f32 %v416, 0.0
      %v449 = vmax.f32 %v417, 0.0
      %vm450 = vcmask 31744
      %451 = vst.msk [vmem:[%s217] sm:$0xff] %vm450, %v418
      %452 = vst.msk [vmem:[%s217 + $0x8] sm:$0xff] %vm450, %v419
      %453 = vst.msk [vmem:[%s217 + $0x10] sm:$0xff] %vm450, %v420
      %454 = vst.msk [vmem:[%s217 + $0x18] sm:$0xff] %vm450, %v421
      %455 = vst.msk [vmem:[%s217 + $0x20] sm:$0xff] %vm450, %v422
      %456 = vst.msk [vmem:[%s217 + $0x28] sm:$0xff] %vm450, %v423
      %457 = vst.msk [vmem:[%s217 + $0x30] sm:$0xff] %vm450, %v424
      %458 = vst.msk [vmem:[%s217 + $0x38] sm:$0xff] %vm450, %v425
      %459 = vst.msk [vmem:[%s217 + $0x40] sm:$0xff] %vm450, %v426
      %460 = vst.msk [vmem:[%s217 + $0x48] sm:$0xff] %vm450, %v427
      %461 = vst.msk [vmem:[%s217 + $0x50] sm:$0xff] %vm450, %v428
      %462 = vst.msk [vmem:[%s217 + $0x58] sm:$0xff] %vm450, %v429
      %463 = vst.msk [vmem:[%s217 + $0x60] sm:$0xff] %vm450, %v430
      %464 = vst.msk [vmem:[%s217 + $0x68] sm:$0xff] %vm450, %v431
      %465 = vst.msk [vmem:[%s217 + $0x70] sm:$0xff] %vm450, %v432
      %466 = vst.msk [vmem:[%s217 + $0x78] sm:$0xff] %vm450, %v433
      %467 = vst.msk [vmem:[%s217 + $0x80] sm:$0xff] %vm450, %v434
      %468 = vst.msk [vmem:[%s217 + $0x88] sm:$0xff] %vm450, %v435
      %469 = vst.msk [vmem:[%s217 + $0x90] sm:$0xff] %vm450, %v436
      %470 = vst.msk [vmem:[%s217 + $0x98] sm:$0xff] %vm450, %v437
      %471 = vst.msk [vmem:[%s217 + $0xa0] sm:$0xff] %vm450, %v438
      %472 = vst.msk [vmem:[%s217 + $0xa8] sm:$0xff] %vm450, %v439
      %473 = vst.msk [vmem:[%s217 + $0xb0] sm:$0xff] %vm450, %v440
      %474 = vst.msk [vmem:[%s217 + $0xb8] sm:$0xff] %vm450, %v441
      %475 = vst.msk [vmem:[%s217 + $0xc0] sm:$0xff] %vm450, %v442
      %476 = vst.msk [vmem:[%s217 + $0xc8] sm:$0xff] %vm450, %v443
      %477 = vst.msk [vmem:[%s217 + $0xd0] sm:$0xff] %vm450, %v444
      %478 = vst.msk [vmem:[%s217 + $0xd8] sm:$0xff] %vm450, %v445
      %479 = vst.msk [vmem:[%s217 + $0xe0] sm:$0xff] %vm450, %v446
      %480 = vst.msk [vmem:[%s217 + $0xe8] sm:$0xff] %vm450, %v447
      %481 = vst.msk [vmem:[%s217 + $0xf0] sm:$0xff] %vm450, %v448
      %482 = vst.msk [vmem:[%s217 + $0xf8] sm:$0xff] %vm450, %v449
      %p483 = scmp.lt.s32.totalorder %s15, 1
      %s484 = scalar_select %p483, %s15, 1
      %s485 = smul.addr %s484, 32
      %s486 = smul.addr %s485, 8
      %s487 = scalar_lea.vmem %s4, %s486
      // Predicated region
      $region37: #{residual_block.5} parent=35 // pred_check
        %p488 = pneg %p127
      $region38: #{residual_block.5} parent=35 // pred_check_branch
        %490 = sbr.rel (%p488) target = $region40
      $region39: #{residual_block.5} parent=35 // pred_region
        _
      $region40: #{residual_block.5} parent=35 // pred_fallthru
        _
    $region36: #{residual_block.5} parent=5 // pred_fallthru
      _
    %p491 = scmp.le.s32.totalorder 2, %s10
    // Predicated region
    $region41: #{residual_block.5} parent=5 // pred_check
      %p492 = pneg %p491
    $region42: #{residual_block.5} parent=5 // pred_check_branch
      %494 = sbr.rel (%p492) target = $region44
    $region43: #{residual_block.5} parent=5 // pred_region
      %s495 = ssub.s32 %s10, 2
      // Predicated region
      $region45: #{residual_block.5} parent=43 // pred_check
        %p496 = pneg %p133
      $region46: #{residual_block.5} parent=43 // pred_check_branch
        %498 = sbr.rel (%p496) target = $region48
      $region47: #{residual_block.5} parent=43 // pred_region
        %p499 = scmp.lt.s32.totalorder %s16, 1
        %s500 = scalar_select %p499, %s16, 1
        %s501 = smul.addr %s500, 32
        %s502 = smul.addr %s501, 8
        %s503 = scalar_lea.vmem %s4, %s502
      $region48: #{residual_block.5} parent=43 // pred_fallthru
        _
    $region44: #{residual_block.5} parent=5 // pred_fallthru
      _
  $region6: #{residual_block.5} parent=0 // loop_footer
    %s14 = sadd.s32 1, %s10
  $region7: #{residual_block.5} parent=0 // loop_footer_branch
    %9 = sbr.rel target = $region3
  $region8: #{residual_block.5} parent=0 // loop_exit
    _

// kernel: residual_block.3
$region0: #{residual_block.3}
  #allocation0 [shape = 'u32[]', space=smem, size = 0x4, offset = 0x4, fixed_abs, tag = 'smem constant byte address 0x4 - core index']
  #allocation1 [shape = 'u32[72,128]{1,0:T(1,128)}', space=vmem, size = 0x9000, scoped, tag = 'internal scratch']
  %s0 = inlined_call_operand.vmem [shape: f32[2,16,16,128], index: 0, kind: input, shape index: {}]
  %s1 = inlined_call_operand.vmem [shape: bf16[9,128,128], index: 1, kind: input, shape index: {}]
  %s2 = inlined_call_operand.vmem [shape: f32[1,128], index: 2, kind: input, shape index: {}]
  %s3 = inlined_call_operand.vmem [shape: bf16[2,16,16,128], index: 3, kind: output, shape index: {0}]
  %s4 = inlined_call_operand.vmem [shape: f32[2,8,128], index: 4, kind: output, shape index: {1}]
  %5 = xla_tuple %s3, %s4
  %s6 = sld [smem:[#allocation0]]
  $region53: #{residual_block.3} parent=0
    _
  %s8 = ssub.s32 1, %s6
  %s9 = scalar_select 0, %s8, %s6
  loop: start=0, step=1, limit=4
  $region2: #{residual_block.3} parent=0 // loop_pre_header
    _
  $region3: #{residual_block.3} parent=0 // loop_header
    %s11 = sphi 0, %s15
    %p12 = scmp.ge.s32.totalorder %s11, 4
    %s21 = sphi 0, %s23
    %s24 = sphi 0, %s21
    %s25 = sphi 0, %s24
    %s41 = sphi 0, %s25
    %s45 = sphi 0, %s45
    %s47 = sphi 0, %s45
    %s48 = sphi 0, %s47
    %s62 = sphi 0, %s48
    %s66 = sphi 0, %s66
    %s68 = sphi 0, %s66
    %s69 = sphi 0, %s68
    %s83 = sphi 0, %s69
    %s89 = sphi 0, %s91
    %s92 = sphi 0, %s89
    %s93 = sphi 0, %s92
    %s109 = sphi 0, %s93
    %s115 = sphi 0, %s117
    %s118 = sphi 0, %s115
    %s119 = sphi 0, %s118
    %s135 = sphi 0, %s119
  $region4: #{residual_block.3} parent=0 // loop_header_branch
    %14 = sbr.rel (%p12) target = $region8
  $region5: #{residual_block.3} parent=0 // loop_body
    %s16 = ssub.s32 %s11, 1
    %s17 = ssub.s32 %s11, 2
    %s18 = sadd.s32 %s11, 1
    %s19 = ssub.s32 %s11, %s18
    %p20 = scmp.eq.s32.totalorder %s19, 0
    %s22 = sadd.s32 %s21, 1
    %s23 = scalar_select %p20, %s21, %s22
    %p26 = pneg %p20
    %p27 = scmp.eq.s32.totalorder %s11, 1
    %p28 = por %p26, %p27
    %p29 = scmp.ne.s32.totalorder %s21, %s24
    %p30 = scmp.eq.s32.totalorder %s11, 0
    %p31 = por %p29, %p30
    %p32 = scmp.ne.s32.totalorder %s21, %s24
    %p33 = scmp.eq.s32.totalorder %s16, 1
    %p34 = por %p32, %p33
    %p35 = scmp.ne.s32.totalorder %s24, %s25
    %p36 = scmp.eq.s32.totalorder %s16, 0
    %p37 = por %p35, %p36
    %p38 = scmp.ne.s32.totalorder %s24, %s25
    %p39 = scmp.eq.s32.totalorder %s17, 1
    %p40 = por %p38, %p39
    %p42 = scmp.ne.s32.totalorder %s25, %s41
    %p43 = scmp.eq.s32.totalorder %s17, 0
    %p44 = por %p42, %p43
    %s46 = sadd.s32 %s45, 1
    %p49 = scmp.eq.s32.totalorder %s11, 1
    %p50 = scmp.ne.s32.totalorder %s45, %s47
    %p51 = scmp.eq.s32.totalorder %s11, 0
    %p52 = por %p50, %p51
    %p53 = scmp.ne.s32.totalorder %s45, %s47
    %p54 = scmp.eq.s32.totalorder %s16, 1
    %p55 = por %p53, %p54
    %p56 = scmp.ne.s32.totalorder %s47, %s48
    %p57 = scmp.eq.s32.totalorder %s16, 0
    %p58 = por %p56, %p57
    %p59 = scmp.ne.s32.totalorder %s47, %s48
    %p60 = scmp.eq.s32.totalorder %s17, 1
    %p61 = por %p59, %p60
    %p63 = scmp.ne.s32.totalorder %s48, %s62
    %p64 = scmp.eq.s32.totalorder %s17, 0
    %p65 = por %p63, %p64
    %s67 = sadd.s32 %s66, 1
    %p70 = scmp.eq.s32.totalorder %s11, 1
    %p71 = scmp.ne.s32.totalorder %s66, %s68
    %p72 = scmp.eq.s32.totalorder %s11, 0
    %p73 = por %p71, %p72
    %p74 = scmp.ne.s32.totalorder %s66, %s68
    %p75 = scmp.eq.s32.totalorder %s16, 1
    %p76 = por %p74, %p75
    %p77 = scmp.ne.s32.totalorder %s68, %s69
    %p78 = scmp.eq.s32.totalorder %s16, 0
    %p79 = por %p77, %p78
    %p80 = scmp.ne.s32.totalorder %s68, %s69
    %p81 = scmp.eq.s32.totalorder %s17, 1
    %p82 = por %p80, %p81
    %p84 = scmp.ne.s32.totalorder %s69, %s83
    %p85 = scmp.eq.s32.totalorder %s17, 0
    %p86 = por %p84, %p85
    %s87 = ssub.s32 %s11, %s18
    %p88 = scmp.eq.s32.totalorder %s87, 0
    %s90 = sadd.s32 %s89, 1
    %s91 = scalar_select %p88, %s89, %s90
    %p94 = pneg %p88
    %p95 = scmp.eq.s32.totalorder %s11, 1
    %p96 = por %p94, %p95
    %p97 = scmp.ne.s32.totalorder %s89, %s92
    %p98 = scmp.eq.s32.totalorder %s11, 0
    %p99 = por %p97, %p98
    %p100 = scmp.ne.s32.totalorder %s89, %s92
    %p101 = scmp.eq.s32.totalorder %s16, 1
    %p102 = por %p100, %p101
    %p103 = scmp.ne.s32.totalorder %s92, %s93
    %p104 = scmp.eq.s32.totalorder %s16, 0
    %p105 = por %p103, %p104
    %p106 = scmp.ne.s32.totalorder %s92, %s93
    %p107 = scmp.eq.s32.totalorder %s17, 1
    %p108 = por %p106, %p107
    %p110 = scmp.ne.s32.totalorder %s93, %s109
    %p111 = scmp.eq.s32.totalorder %s17, 0
    %p112 = por %p110, %p111
    %s113 = ssub.s32 %s11, %s18
    %p114 = scmp.eq.s32.totalorder %s113, 0
    %s116 = sadd.s32 %s115, 1
    %s117 = scalar_select %p114, %s115, %s116
    %p120 = pneg %p114
    %p121 = scmp.eq.s32.totalorder %s11, 1
    %p122 = por %p120, %p121
    %p123 = scmp.ne.s32.totalorder %s115, %s118
    %p124 = scmp.eq.s32.totalorder %s11, 0
    %p125 = por %p123, %p124
    %p126 = scmp.ne.s32.totalorder %s115, %s118
    %p127 = scmp.eq.s32.totalorder %s16, 1
    %p128 = por %p126, %p127
    %p129 = scmp.ne.s32.totalorder %s118, %s119
    %p130 = scmp.eq.s32.totalorder %s16, 0
    %p131 = por %p129, %p130
    %p132 = scmp.ne.s32.totalorder %s118, %s119
    %p133 = scmp.eq.s32.totalorder %s17, 1
    %p134 = por %p132, %p133
    %p136 = scmp.ne.s32.totalorder %s119, %s135
    %p137 = scmp.eq.s32.totalorder %s17, 0
    %p138 = por %p136, %p137
    %p139 = scmp.le.s32.totalorder 1, %s11
    %p140 = scmp.lt.s32.totalorder %s11, 3
    %p141 = pnand %p139, %p140
    %p142 = pneg %p141
    // Predicated region
    $region9: #{residual_block.3} parent=5 // pred_check
      _
    $region10: #{residual_block.3} parent=5 // pred_check_branch
      %144 = sbr.rel (%p141) target = $region12
    $region11: #{residual_block.3} parent=5 // pred_region
      %s145 = ssub.s32 %s11, 1
      // Predicated region
      $region13: #{residual_block.3} parent=11 // pred_check
        %p146 = pneg %p58
      $region14: #{residual_block.3} parent=11 // pred_check_branch
        %148 = sbr.rel (%p146) target = $region16
      $region15: #{residual_block.3} parent=11 // pred_region
        _
      $region16: #{residual_block.3} parent=11 // pred_fallthru
        _
      // Predicated region
      $region17: #{residual_block.3} parent=11 // pred_check
        %p149 = pneg %p79
      $region18: #{residual_block.3} parent=11 // pred_check_branch
        %151 = sbr.rel (%p149) target = $region20
      $region19: #{residual_block.3} parent=11 // pred_region
        _
      $region20: #{residual_block.3} parent=11 // pred_fallthru
        _
    $region12: #{residual_block.3} parent=5 // pred_fallthru
      _
    %p152 = scmp.lt.s32.totalorder %s11, 2
    // Predicated region
    $region21: #{residual_block.3} parent=5 // pred_check
      %p153 = pneg %p152
    $region22: #{residual_block.3} parent=5 // pred_check_branch
      %155 = sbr.rel (%p153) target = $region24
    $region23: #{residual_block.3} parent=5 // pred_region
      // Predicated region
      $region25: #{residual_block.3} parent=23 // pred_check
        %p156 = pneg %p31
      $region26: #{residual_block.3} parent=23 // pred_check_branch
        %158 = sbr.rel (%p156) target = $region28
      $region27: #{residual_block.3} parent=23 // pred_region
        %p159 = scmp.lt.s32.totalorder %s11, 1
        %s160 = scalar_select %p159, %s11, 1
        %s161 = smul.addr %s160, 32
        %s162 = smul.addr %s161, 8
        %s163 = scalar_lea.vmem %s0, %s162
      $region28: #{residual_block.3} parent=23 // pred_fallthru
        _
    $region24: #{residual_block.3} parent=5 // pred_fallthru
      _
    %p164 = scmp.le.s32.totalorder 1, %s11
    %p165 = scmp.lt.s32.totalorder %s11, 3
    %p166 = pnand %p164, %p165
    %p167 = pneg %p166
    // Predicated region
    $region29: #{residual_block.3} parent=5 // pred_check
      _
    $region30: #{residual_block.3} parent=5 // pred_check_branch
      %169 = sbr.rel (%p166) target = $region32
    $region31: #{residual_block.3} parent=5 // pred_region
      %s170 = ssub.s32 %s11, 1
      %p171 = scmp.lt.s32.totalorder %s16, 1
      %s172 = scalar_select %p171, %s16, 1
      %s173 = smul.addr %s172, 32
      %s174 = smul.addr %s173, 8
      %s175 = scalar_lea.vmem %s0, %s174
      %p176 = pneg %p37
      %p177 = pneg %p34
      %p178 = pneg %p58
      %p179 = pneg %p55
      %p180 = pneg %p79
      %p181 = pneg %p76
      %p182 = pneg %p105
      %p183 = pneg %p102
      %p184 = scmp.lt.s32.totalorder %s16, 1
      %s185 = scalar_select %p184, %s16, 1
      %s186 = smul.addr %s185, 32
      %s187 = smul.addr %s186, 4
      %s188 = scalar_lea.vmem %s3, %s187
      %p189 = pneg %p131
      %p190 = pneg %p128
      %p191 = scmp.lt.s32.totalorder %s16, 1
      %s192 = scalar_select %p191, %s16, 1
      %s193 = smul.addr %s192, 8
      %s194 = scalar_lea.vmem %s4, %s193
      %p195 = scmp.lt.s32.totalorder %s16, 1
      %s196 = scalar_select %p195, %s16, 1
      %s197 = smul.addr %s196, 32
      %s198 = smul.addr %s197, 8
      %s199 = scalar_lea.vmem %s0, %s198
      %p200 = scmp.lt.s32.totalorder %s16, 1
      %s201 = scalar_select %p200, %s16, 1
      %s202 = smul.addr %s201, 32
      %s203 = smul.addr %s202, 4
      %s204 = scalar_lea.vmem %s3, %s203
      %p205 = scmp.lt.s32.totalorder %s16, 1
      %s206 = scalar_select %p205, %s16, 1
      %s207 = smul.addr %s206, 8
      %s208 = scalar_lea.vmem %s4, %s207
      %v209 = vld [vmem:[%s199] sm:$0xff]
      %v210 = vld [vmem:[%s199 + $0x8] sm:$0xff]
      %v211 = vld [vmem:[%s199 + $0x10] sm:$0xff]
      %v212 = vld [vmem:[%s199 + $0x18] sm:$0xff]
      %v213 = vld [vmem:[%s199 + $0x20] sm:$0xff]
      %v214 = vld [vmem:[%s199 + $0x28] sm:$0xff]
      %v215 = vld [vmem:[%s199 + $0x30] sm:$0xff]
      %v216 = vld [vmem:[%s199 + $0x38] sm:$0xff]
      %v217 = vld [vmem:[%s199 + $0x40] sm:$0xff]
      %v218 = vld [vmem:[%s199 + $0x48] sm:$0xff]
      %v219 = vld [vmem:[%s199 + $0x50] sm:$0xff]
      %v220 = vld [vmem:[%s199 + $0x58] sm:$0xff]
      %v221 = vld [vmem:[%s199 + $0x60] sm:$0xff]
      %v222 = vld [vmem:[%s199 + $0x68] sm:$0xff]
      %v223 = vld [vmem:[%s199 + $0x70] sm:$0xff]
      %v224 = vld [vmem:[%s199 + $0x78] sm:$0xff]
      %v225 = vld [vmem:[%s199 + $0x80] sm:$0xff]
      %v226 = vld [vmem:[%s199 + $0x88] sm:$0xff]
      %v227 = vld [vmem:[%s199 + $0x90] sm:$0xff]
      %v228 = vld [vmem:[%s199 + $0x98] sm:$0xff]
      %v229 = vld [vmem:[%s199 + $0xa0] sm:$0xff]
      %v230 = vld [vmem:[%s199 + $0xa8] sm:$0xff]
      %v231 = vld [vmem:[%s199 + $0xb0] sm:$0xff]
      %v232 = vld [vmem:[%s199 + $0xb8] sm:$0xff]
      %v233 = vld [vmem:[%s199 + $0xc0] sm:$0xff]
      %v234 = vld [vmem:[%s199 + $0xc8] sm:$0xff]
      %v235 = vld [vmem:[%s199 + $0xd0] sm:$0xff]
      %v236 = vld [vmem:[%s199 + $0xd8] sm:$0xff]
      %v237 = vld [vmem:[%s199 + $0xe0] sm:$0xff]
      %v238 = vld [vmem:[%s199 + $0xe8] sm:$0xff]
      %v239 = vld [vmem:[%s199 + $0xf0] sm:$0xff]
      %v240 = vld [vmem:[%s199 + $0xf8] sm:$0xff]
      %v241 = vlaneseq
      %v242 = vshrl.u32 %v241, 7
      %v243 = vadd.s32 %v242, 8
      %vm244 = vcmp.ge.s32.totalorder %v242, 1
      %vm245 = vcmp.ge.s32.totalorder %v243, 1
      %vm246 = vcmp.le.s32.totalorder %v242, 14
      %vm247 = vcmp.le.s32.totalorder %v243, 14
      %vm278 = vcmask 1040384
      %v279 = vrot.slane %v209, 7
      %v280 = vrot.slane %v210, 7
      %v281 = vsel %vm278, %v279, %v280
      %v282 = vrot.slane %v211, 7
      %v283 = vsel %vm278, %v280, %v282
      %v284 = vrot.slane %v212, 7
      %v285 = vsel %vm278, %v282, %v284
      %v286 = vrot.slane %v213, 7
      %v287 = vsel %vm278, %v284, %v286
      %v288 = vrot.slane %v214, 7
      %v289 = vsel %vm278, %v286, %v288
      %v290 = vrot.slane %v215, 7
      %v291 = vsel %vm278, %v288, %v290
      %v292 = vrot.slane %v216, 7
      %v293 = vsel %vm278, %v290, %v292
      %v294 = vrot.slane %v217, 7
      %v295 = vsel %vm278, %v292, %v294
      %v296 = vrot.slane %v218, 7
      %v297 = vsel %vm278, %v294, %v296
      %v298 = vrot.slane %v219, 7
      %v299 = vsel %vm278, %v296, %v298
      %v300 = vrot.slane %v220, 7
      %v301 = vsel %vm278, %v298, %v300
      %v302 = vrot.slane %v221, 7
      %v303 = vsel %vm278, %v300, %v302
      %v304 = vrot.slane %v222, 7
      %v305 = vsel %vm278, %v302, %v304
      %v306 = vrot.slane %v223, 7
      %v307 = vsel %vm278, %v304, %v306
      %v308 = vrot.slane %v224, 7
      %v309 = vsel %vm278, %v306, %v308
      %v310 = vrot.slane %v225, 7
      %v311 = vsel %vm278, %v308, %v310
      %v312 = vrot.slane %v226, 7
      %v313 = vsel %vm278, %v310, %v312
      %v314 = vrot.slane %v227, 7
      %v315 = vsel %vm278, %v312, %v314
      %v316 = vrot.slane %v228, 7
      %v317 = vsel %vm278, %v314, %v316
      %v318 = vrot.slane %v229, 7
      %v319 = vsel %vm278, %v316, %v318
      %v320 = vrot.slane %v230, 7
      %v321 = vsel %vm278, %v318, %v320
      %v322 = vrot.slane %v231, 7
      %v323 = vsel %vm278, %v320, %v322
      %v324 = vrot.slane %v232, 7
      %v325 = vsel %vm278, %v322, %v324
      %v326 = vrot.slane %v233, 7
      %v327 = vsel %vm278, %v324, %v326
      %v328 = vrot.slane %v234, 7
      %v329 = vsel %vm278, %v326, %v328
      %v330 = vrot.slane %v235, 7
      %v331 = vsel %vm278, %v328, %v330
      %v332 = vrot.slane %v236, 7
      %v333 = vsel %vm278, %v330, %v332
      %v334 = vrot.slane %v237, 7
      %v335 = vsel %vm278, %v332, %v334
      %v336 = vrot.slane %v238, 7
      %v337 = vsel %vm278, %v334, %v336
      %v368 = vsel %vm278, 0.0, %v279
      %v369 = vsel %vm244, %v368, 0.0
      %v370 = vsel %vm245, %v281, 0.0
      %v371 = vsel %vm244, %v283, 0.0
      %v372 = vsel %vm245, %v285, 0.0
      %v373 = vsel %vm244, %v287, 0.0
      %v374 = vsel %vm245, %v289, 0.0
      %v375 = vsel %vm244, %v291, 0.0
      %v376 = vsel %vm245, %v293, 0.0
      %v377 = vsel %vm244, %v295, 0.0
      %v378 = vsel %vm245, %v297, 0.0
      %v379 = vsel %vm244, %v299, 0.0
      %v380 = vsel %vm245, %v301, 0.0
      %v381 = vsel %vm244, %v303, 0.0
      %v382 = vsel %vm245, %v305, 0.0
      %v383 = vsel %vm244, %v307, 0.0
      %v384 = vsel %vm245, %v309, 0.0
      %v385 = vsel %vm244, %v311, 0.0
      %v386 = vsel %vm245, %v313, 0.0
      %v387 = vsel %vm244, %v315, 0.0
      %v388 = vsel %vm245, %v317, 0.0
      %v389 = vsel %vm244, %v319, 0.0
      %v390 = vsel %vm245, %v321, 0.0
      %v391 = vsel %vm244, %v323, 0.0
      %v392 = vsel %vm245, %v325, 0.0
      %v393 = vsel %vm244, %v327, 0.0
      %v394 = vsel %vm245, %v329, 0.0
      %v395 = vsel %vm244, %v331, 0.0
      %v396 = vsel %vm245, %v333, 0.0
      %v397 = vsel %vm244, %v335, 0.0
      %v398 = vsel %vm245, %v337, 0.0
      %v399 = vpack.c.bf16 0.0, 0.0
      %v400 = vpack.c.bf16 %v370, %v369
      %v401 = vpack.c.bf16 %v372, %v371
      %v402 = vpack.c.bf16 %v374, %v373
      %v403 = vpack.c.bf16 %v376, %v375
      %v404 = vpack.c.bf16 %v378, %v377
      %v405 = vpack.c.bf16 %v380, %v379
      %v406 = vpack.c.bf16 %v382, %v381
      %v407 = vpack.c.bf16 %v384, %v383
      %v408 = vpack.c.bf16 %v386, %v385
      %v409 = vpack.c.bf16 %v388, %v387
      %v410 = vpack.c.bf16 %v390, %v389
      %v411 = vpack.c.bf16 %v392, %v391
      %v412 = vpack.c.bf16 %v394, %v393
      %v413 = vpack.c.bf16 %v396, %v395
      %v414 = vpack.c.bf16 %v398, %v397
      %v415 = vld [vmem:[%s1] sm:$0xf]
      %v416 = vld [vmem:[%s1 + $0x4] sm:$0xf]
      %v417 = vld [vmem:[%s1 + $0x8] sm:$0xf]
      %v418 = vld [vmem:[%s1 + $0xc] sm:$0xf]
      %v419 = vld [vmem:[%s1 + $0x10] sm:$0xf]
      %v420 = vld [vmem:[%s1 + $0x14] sm:$0xf]
      %v421 = vld [vmem:[%s1 + $0x18] sm:$0xf]
      %v422 = vld [vmem:[%s1 + $0x1c] sm:$0xf]
      %v423 = vld [vmem:[%s1 + $0x20] sm:$0xf]
      %v424 = vld [vmem:[%s1 + $0x24] sm:$0xf]
      %v425 = vld [vmem:[%s1 + $0x28] sm:$0xf]
      %v426 = vld [vmem:[%s1 + $0x2c] sm:$0xf]
      %v427 = vld [vmem:[%s1 + $0x30] sm:$0xf]
      %v428 = vld [vmem:[%s1 + $0x34] sm:$0xf]
      %v429 = vld [vmem:[%s1 + $0x38] sm:$0xf]
      %v430 = vld [vmem:[%s1 + $0x3c] sm:$0xf]
      %v431 = vpack.c.bf16 %v210, %v209
      %v432 = vpack.c.bf16 %v212, %v211
      %v433 = vpack.c.bf16 %v214, %v213
      %v434 = vpack.c.bf16 %v216, %v215
      %v435 = vpack.c.bf16 %v218, %v217
      %v436 = vpack.c.bf16 %v220, %v219
      %v437 = vpack.c.bf16 %v222, %v221
      %v438 = vpack.c.bf16 %v224, %v223
      %v439 = vpack.c.bf16 %v226, %v225
      %v440 = vpack.c.bf16 %v228, %v227
      %v441 = vpack.c.bf16 %v230, %v229
      %v442 = vpack.c.bf16 %v232, %v231
      %v443 = vpack.c.bf16 %v234, %v233
      %v444 = vpack.c.bf16 %v236, %v235
      %v445 = vpack.c.bf16 %v238, %v237
      %s446 = scalar_lea.vmem %s1, 64
      %v447 = vld [vmem:[%s446] sm:$0xf]
      %v448 = vld [vmem:[%s446 + $0x4] sm:$0xf]
      %v449 = vld [vmem:[%s446 + $0x8] sm:$0xf]
      %v450 = vld [vmem:[%s446 + $0xc] sm:$0xf]
      %v451 = vld [vmem:[%s446 + $0x10] sm:$0xf]
      %v452 = vld [vmem:[%s446 + $0x14] sm:$0xf]
      %v453 = vld [vmem:[%s446 + $0x18] sm:$0xf]
      %v454 = vld [vmem:[%s446 + $0x1c] sm:$0xf]
      %v455 = vld [vmem:[%s446 + $0x20] sm:$0xf]
      %v456 = vld [vmem:[%s446 + $0x24] sm:$0xf]
      %v457 = vld [vmem:[%s446 + $0x28] sm:$0xf]
      %v458 = vld [vmem:[%s446 + $0x2c] sm:$0xf]
      %v459 = vld [vmem:[%s446 + $0x30] sm:$0xf]
      %v460 = vld [vmem:[%s446 + $0x34] sm:$0xf]
      %v461 = vld [vmem:[%s446 + $0x38] sm:$0xf]
      %v462 = vld [vmem:[%s446 + $0x3c] sm:$0xf]
      %v479 = vunpack.c.l.b16 %v447
      %v480 = vunpack.c.l.b16 %v448
      %v481 = vunpack.c.l.b16 %v449
      %v482 = vunpack.c.l.b16 %v450
      %v483 = vunpack.c.l.b16 %v451
      %v484 = vunpack.c.l.b16 %v452
      %v485 = vunpack.c.l.b16 %v453
      %v486 = vunpack.c.l.b16 %v454
      %v487 = vunpack.c.l.b16 %v455
      %v488 = vunpack.c.l.b16 %v456
      %v489 = vunpack.c.l.b16 %v457
      %v490 = vunpack.c.l.b16 %v458
      %v491 = vunpack.c.l.b16 %v459
      %v492 = vunpack.c.l.b16 %v460
      %v493 = vunpack.c.l.b16 %v461
      %v494 = vunpack.c.l.b16 %v462
      %v495 = vpack.c.b16 %v480, %v479
      %v496 = vpack.c.b16 %v482, %v481
      %v497 = vpack.c.b16 %v484, %v483
      %v498 = vpack.c.b16 %v486, %v485
      %v499 = vpack.c.b16 %v488, %v487
      %v500 = vpack.c.b16 %v490, %v489
      %v501 = vpack.c.b16 %v492, %v491
      %v502 = vpack.c.b16 %v494, %v493
      %511 = vmatpush.bf16.msra.mxu0 %v502
      %512 = vmatpush.bf16.msra.mxu0 %v501
      %513 = vmatpush.bf16.msra.mxu0 %v500
      %514 = vmatpush.bf16.msra.mxu0 %v499
      %515 = vmatpush.bf16.msra.mxu0 %v498
      %516 = vmatpush.bf16.msra.mxu0 %v497
      %517 = vmatpush.bf16.msra.mxu0 %v496
      %518 = vmatpush.bf16.msra.mxu0 %v495
      %519 = vmatmul.bf16.gmra.mxu0 %v399
      %v520 = vpop.f32.mrf.mxu0
      %v521 = vadd.f32 0.0, %v520
      %v522 = vpop.f32.mrf.mxu0
      %v523 = vadd.f32 0.0, %v522
      %524 = vmatmul.bf16.gmra.mxu0 %v431
      %v525 = vpop.f32.mrf.mxu0
      %v526 = vadd.f32 0.0, %v525
      %v527 = vpop.f32.mrf.mxu0
      %v528 = vadd.f32 0.0, %v527
      %529 = vmatmul.bf16.gmra.mxu0 %v432
      %v530 = vpop.f32.mrf.mxu0
      %v531 = vadd.f32 0.0, %v530
      %v532 = vpop.f32.mrf.mxu0
      %v533 = vadd.f32 0.0, %v532
      %534 = vmatmul.bf16.gmra.mxu0 %v433
      %v535 = vpop.f32.mrf.mxu0
      %v536 = vadd.f32 0.0, %v535
      %v537 = vpop.f32.mrf.mxu0
      %v538 = vadd.f32 0.0, %v537
      %539 = vmatmul.bf16.gmra.mxu0 %v434
      %v540 = vpop.f32.mrf.mxu0
      %v541 = vadd.f32 0.0, %v540
      %v542 = vpop.f32.mrf.mxu0
      %v543 = vadd.f32 0.0, %v542
      %544 = vmatmul.bf16.gmra.mxu0 %v435
      %v545 = vpop.f32.mrf.mxu0
      %v546 = vadd.f32 0.0, %v545
      %v547 = vpop.f32.mrf.mxu0
      %v548 = vadd.f32 0.0, %v547
      %549 = vmatmul.bf16.gmra.mxu0 %v436
      %v550 = vpop.f32.mrf.mxu0
      %v551 = vadd.f32 0.0, %v550
      %v552 = vpop.f32.mrf.mxu0
      %v553 = vadd.f32 0.0, %v552
      %554 = vmatmul.bf16.gmra.mxu0 %v437
      %v555 = vpop.f32.mrf.mxu0
      %v556 = vadd.f32 0.0, %v555
      %v557 = vpop.f32.mrf.mxu0
      %v558 = vadd.f32 0.0, %v557
      %559 = vmatmul.bf16.gmra.mxu0 %v438
      %v560 = vpop.f32.mrf.mxu0
      %v561 = vadd.f32 0.0, %v560
      %v562 = vpop.f32.mrf.mxu0
      %v563 = vadd.f32 0.0, %v562
      %564 = vmatmul.bf16.gmra.mxu0 %v439
      %v565 = vpop.f32.mrf.mxu0
      %v566 = vadd.f32 0.0, %v565
      %v567 = vpop.f32.mrf.mxu0
      %v568 = vadd.f32 0.0, %v567
      %569 = vmatmul.bf16.gmra.mxu0 %v440
      %v570 = vpop.f32.mrf.mxu0
      %v571 = vadd.f32 0.0, %v570
      %v572 = vpop.f32.mrf.mxu0
      %v573 = vadd.f32 0.0, %v572
      %574 = vmatmul.bf16.gmra.mxu0 %v441
      %v575 = vpop.f32.mrf.mxu0
      %v576 = vadd.f32 0.0, %v575
      %v577 = vpop.f32.mrf.mxu0
      %v578 = vadd.f32 0.0, %v577
      %579 = vmatmul.bf16.gmra.mxu0 %v442
      %v580 = vpop.f32.mrf.mxu0
      %v581 = vadd.f32 0.0, %v580
      %v582 = vpop.f32.mrf.mxu0
      %v583 = vadd.f32 0.0, %v582
      %584 = vmatmul.bf16.gmra.mxu0 %v443
      %v585 = vpop.f32.mrf.mxu0
      %v586 = vadd.f32 0.0, %v585
      %v587 = vpop.f32.mrf.mxu0
      %v588 = vadd.f32 0.0, %v587
      %589 = vmatmul.bf16.gmra.mxu0 %v444
      %v590 = vpop.f32.mrf.mxu0
      %v591 = vadd.f32 0.0, %v590
      %v592 = vpop.f32.mrf.mxu0
      %v593 = vadd.f32 0.0, %v592
      %594 = vmatmul.bf16.gmra.mxu0 %v445
      %v595 = vpop.f32.mrf.mxu0
      %v596 = vadd.f32 0.0, %v595
      %v597 = vpop.f32.mrf.mxu0
      %v598 = vadd.f32 0.0, %v597
      %599 = vdwg.mxu0
      %v616 = vunpack.c.l.b16 %v415
      %v617 = vunpack.c.l.b16 %v416
      %v618 = vunpack.c.l.b16 %v417
      %v619 = vunpack.c.l.b16 %v418
      %v620 = vunpack.c.l.b16 %v419
      %v621 = vunpack.c.l.b16 %v420
      %v622 = vunpack.c.l.b16 %v421
      %v623 = vunpack.c.l.b16 %v422
      %v624 = vunpack.c.l.b16 %v423
      %v625 = vunpack.c.l.b16 %v424
      %v626 = vunpack.c.l.b16 %v425
      %v627 = vunpack.c.l.b16 %v426
      %v628 = vunpack.c.l.b16 %v427
      %v629 = vunpack.c.l.b16 %v428
      %v630 = vunpack.c.l.b16 %v429
      %v631 = vunpack.c.l.b16 %v430
      %v632 = vpack.c.b16 %v617, %v616
      %v633 = vpack.c.b16 %v619, %v618
      %v634 = vpack.c.b16 %v621, %v620
      %v635 = vpack.c.b16 %v623, %v622
      %v636 = vpack.c.b16 %v625, %v624
      %v637 = vpack.c.b16 %v627, %v626
      %v638 = vpack.c.b16 %v629, %v628
      %v639 = vpack.c.b16 %v631, %v630
      %648 = vmatpush.bf16.msra.mxu0 %v639
      %649 = vmatpush.bf16.msra.mxu0 %v638
      %650 = vmatpush.bf16.msra.mxu0 %v637
      %651 = vmatpush.bf16.msra.mxu0 %v636
      %652 = vmatpush.bf16.msra.mxu0 %v635
      %653 = vmatpush.bf16.msra.mxu0 %v634
      %654 = vmatpush.bf16.msra.mxu0 %v633
      %655 = vmatpush.bf16.msra.mxu0 %v632
      %656 = vmatmul.bf16.gmra.mxu0 %v399
      %v657 = vpop.f32.mrf.mxu0
      %v658 = vadd.f32 %v521, %v657
      %v659 = vpop.f32.mrf.mxu0
      %v660 = vadd.f32 %v523, %v659
      %661 = vmatmul.bf16.gmra.mxu0 %v400
      %v662 = vpop.f32.mrf.mxu0
      %v663 = vadd.f32 %v526, %v662
      %v664 = vpop.f32.mrf.mxu0
      %v665 = vadd.f32 %v528, %v664
      %666 = vmatmul.bf16.gmra.mxu0 %v401
      %v667 = vpop.f32.mrf.mxu0
      %v668 = vadd.f32 %v531, %v667
      %v669 = vpop.f32.mrf.mxu0
      %v670 = vadd.f32 %v533, %v669
      %671 = vmatmul.bf16.gmra.mxu0 %v402
      %v672 = vpop.f32.mrf.mxu0
      %v673 = vadd.f32 %v536, %v672
      %v674 = vpop.f32.mrf.mxu0
      %v675 = vadd.f32 %v538, %v674
      %676 = vmatmul.bf16.gmra.mxu0 %v403
      %v677 = vpop.f32.mrf.mxu0
      %v678 = vadd.f32 %v541, %v677
      %v679 = vpop.f32.mrf.mxu0
      %v680 = vadd.f32 %v543, %v679
      %681 = vmatmul.bf16.gmra.mxu0 %v404
      %v682 = vpop.f32.mrf.mxu0
      %v683 = vadd.f32 %v546, %v682
      %v684 = vpop.f32.mrf.mxu0
      %v685 = vadd.f32 %v548, %v684
      %686 = vmatmul.bf16.gmra.mxu0 %v405
      %v687 = vpop.f32.mrf.mxu0
      %v688 = vadd.f32 %v551, %v687
      %v689 = vpop.f32.mrf.mxu0
      %v690 = vadd.f32 %v553, %v689
      %691 = vmatmul.bf16.gmra.mxu0 %v406
      %v692 = vpop.f32.mrf.mxu0
      %v693 = vadd.f32 %v556, %v692
      %v694 = vpop.f32.mrf.mxu0
      %v695 = vadd.f32 %v558, %v694
      %696 = vmatmul.bf16.gmra.mxu0 %v407
      %v697 = vpop.f32.mrf.mxu0
      %v698 = vadd.f32 %v561, %v697
      %v699 = vpop.f32.mrf.mxu0
      %v700 = vadd.f32 %v563, %v699
      %701 = vmatmul.bf16.gmra.mxu0 %v408
      %v702 = vpop.f32.mrf.mxu0
      %v703 = vadd.f32 %v566, %v702
      %v704 = vpop.f32.mrf.mxu0
      %v705 = vadd.f32 %v568, %v704
      %706 = vmatmul.bf16.gmra.mxu0 %v409
      %v707 = vpop.f32.mrf.mxu0
      %v708 = vadd.f32 %v571, %v707
      %v709 = vpop.f32.mrf.mxu0
      %v710 = vadd.f32 %v573, %v709
      %711 = vmatmul.bf16.gmra.mxu0 %v410
      %v712 = vpop.f32.mrf.mxu0
      %v713 = vadd.f32 %v576, %v712
      %v714 = vpop.f32.mrf.mxu0
      %v715 = vadd.f32 %v578, %v714
      %716 = vmatmul.bf16.gmra.mxu0 %v411
      %v717 = vpop.f32.mrf.mxu0
      %v718 = vadd.f32 %v581, %v717
      %v719 = vpop.f32.mrf.mxu0
      %v720 = vadd.f32 %v583, %v719
      %721 = vmatmul.bf16.gmra.mxu0 %v412
      %v722 = vpop.f32.mrf.mxu0
      %v723 = vadd.f32 %v586, %v722
      %v724 = vpop.f32.mrf.mxu0
      %v725 = vadd.f32 %v588, %v724
      %726 = vmatmul.bf16.gmra.mxu0 %v413
      %v727 = vpop.f32.mrf.mxu0
      %v728 = vadd.f32 %v591, %v727
      %v729 = vpop.f32.mrf.mxu0
      %v730 = vadd.f32 %v593, %v729
      %731 = vmatmul.bf16.gmra.mxu0 %v414
      %v732 = vpop.f32.mrf.mxu0
      %v733 = vadd.f32 %v596, %v732
      %v734 = vpop.f32.mrf.mxu0
      %v735 = vadd.f32 %v598, %v734
      %736 = vdwg.mxu0
      %vm738 = vcmask 1046528
      %v739 = vrot.slane %v209, 1
      %v740 = vrot.slane %v210, 1
      %v741 = vsel %vm738, %v739, %v740
      %v742 = vrot.slane %v211, 1
      %v743 = vsel %vm738, %v740, %v742
      %v744 = vrot.slane %v212, 1
      %v745 = vsel %vm738, %v742, %v744
      %v746 = vrot.slane %v213, 1
      %v747 = vsel %vm738, %v744, %v746
      %v748 = vrot.slane %v214, 1
      %v749 = vsel %vm738, %v746, %v748
      %v750 = vrot.slane %v215, 1
      %v751 = vsel %vm738, %v748, %v750
      %v752 = vrot.slane %v216, 1
      %v753 = vsel %vm738, %v750, %v752
      %v754 = vrot.slane %v217, 1
      %v755 = vsel %vm738, %v752, %v754
      %v756 = vrot.slane %v218, 1
      %v757 = vsel %vm738, %v754, %v756
      %v758 = vrot.slane %v219, 1
      %v759 = vsel %vm738, %v756, %v758
      %v760 = vrot.slane %v220, 1
      %v761 = vsel %vm738, %v758, %v760
      %v762 = vrot.slane %v221, 1
      %v763 = vsel %vm738, %v760, %v762
      %v764 = vrot.slane %v222, 1
      %v765 = vsel %vm738, %v762, %v764
      %v766 = vrot.slane %v223, 1
      %v767 = vsel %vm738, %v764, %v766
      %v768 = vrot.slane %v224, 1
      %v769 = vsel %vm738, %v766, %v768
      %v770 = vrot.slane %v225, 1
      %v771 = vsel %vm738, %v768, %v770
      %v772 = vrot.slane %v226, 1
      %v773 = vsel %vm738, %v770, %v772
      %v774 = vrot.slane %v227, 1
      %v775 = vsel %vm738, %v772, %v774
      %v776 = vrot.slane %v228, 1
      %v777 = vsel %vm738, %v774, %v776
      %v778 = vrot.slane %v229, 1
      %v779 = vsel %vm738, %v776, %v778
      %v780 = vrot.slane %v230, 1
      %v781 = vsel %vm738, %v778, %v780
      %v782 = vrot.slane %v231, 1
      %v783 = vsel %vm738, %v780, %v782
      %v784 = vrot.slane %v232, 1
      %v785 = vsel %vm738, %v782, %v784
      %v786 = vrot.slane %v233, 1
      %v787 = vsel %vm738, %v784, %v786
      %v788 = vrot.slane %v234, 1
      %v789 = vsel %vm738, %v786, %v788
      %v790 = vrot.slane %v235, 1
      %v791 = vsel %vm738, %v788, %v790
      %v792 = vrot.slane %v236, 1
      %v793 = vsel %vm738, %v790, %v792
      %v794 = vrot.slane %v237, 1
      %v795 = vsel %vm738, %v792, %v794
      %v796 = vrot.slane %v238, 1
      %v797 = vsel %vm738, %v794, %v796
      %v798 = vrot.slane %v239, 1
      %v799 = vsel %vm738, %v796, %v798
      %v830 = vsel %vm246, %v741, 0.0
      %v831 = vsel %vm247, %v743, 0.0
      %v832 = vsel %vm246, %v745, 0.0
      %v833 = vsel %vm247, %v747, 0.0
      %v834 = vsel %vm246, %v749, 0.0
      %v835 = vsel %vm247, %v751, 0.0
      %v836 = vsel %vm246, %v753, 0.0
      %v837 = vsel %vm247, %v755, 0.0
      %v838 = vsel %vm246, %v757, 0.0
      %v839 = vsel %vm247, %v759, 0.0
      %v840 = vsel %vm246, %v761, 0.0
      %v841 = vsel %vm247, %v763, 0.0
      %v842 = vsel %vm246, %v765, 0.0
      %v843 = vsel %vm247, %v767, 0.0
      %v844 = vsel %vm246, %v769, 0.0
      %v845 = vsel %vm247, %v771, 0.0
      %v846 = vsel %vm246, %v773, 0.0
      %v847 = vsel %vm247, %v775, 0.0
      %v848 = vsel %vm246, %v777, 0.0
      %v849 = vsel %vm247, %v779, 0.0
      %v850 = vsel %vm246, %v781, 0.0
      %v851 = vsel %vm247, %v783, 0.0
      %v852 = vsel %vm246, %v785, 0.0
      %v853 = vsel %vm247, %v787, 0.0
      %v854 = vsel %vm246, %v789, 0.0
      %v855 = vsel %vm247, %v791, 0.0
      %v856 = vsel %vm246, %v793, 0.0
      %v857 = vsel %vm247, %v795, 0.0
      %v858 = vsel %vm246, %v797, 0.0
      %v859 = vsel %vm247, %v799, 0.0
      %v860 = vpack.c.bf16 %v831, %v830
      %v861 = vpack.c.bf16 %v833, %v832
      %v862 = vpack.c.bf16 %v835, %v834
      %v863 = vpack.c.bf16 %v837, %v836
      %v864 = vpack.c.bf16 %v839, %v838
      %v865 = vpack.c.bf16 %v841, %v840
      %v866 = vpack.c.bf16 %v843, %v842
      %v867 = vpack.c.bf16 %v845, %v844
      %v868 = vpack.c.bf16 %v847, %v846
      %v869 = vpack.c.bf16 %v849, %v848
      %v870 = vpack.c.bf16 %v851, %v850
      %v871 = vpack.c.bf16 %v853, %v852
      %v872 = vpack.c.bf16 %v855, %v854
      %v873 = vpack.c.bf16 %v857, %v856
      %v874 = vpack.c.bf16 %v859, %v858
      %s875 = scalar_lea.vmem %s1, 128
      %v876 = vld [vmem:[%s875] sm:$0xf]
      %v877 = vld [vmem:[%s875 + $0x4] sm:$0xf]
      %v878 = vld [vmem:[%s875 + $0x8] sm:$0xf]
      %v879 = vld [vmem:[%s875 + $0xc] sm:$0xf]
      %v880 = vld [vmem:[%s875 + $0x10] sm:$0xf]
      %v881 = vld [vmem:[%s875 + $0x14] sm:$0xf]
      %v882 = vld [vmem:[%s875 + $0x18] sm:$0xf]
      %v883 = vld [vmem:[%s875 + $0x1c] sm:$0xf]
      %v884 = vld [vmem:[%s875 + $0x20] sm:$0xf]
      %v885 = vld [vmem:[%s875 + $0x24] sm:$0xf]
      %v886 = vld [vmem:[%s875 + $0x28] sm:$0xf]
      %v887 = vld [vmem:[%s875 + $0x2c] sm:$0xf]
      %v888 = vld [vmem:[%s875 + $0x30] sm:$0xf]
      %v889 = vld [vmem:[%s875 + $0x34] sm:$0xf]
      %v890 = vld [vmem:[%s875 + $0x38] sm:$0xf]
      %v891 = vld [vmem:[%s875 + $0x3c] sm:$0xf]
      %v908 = vunpack.c.l.b16 %v876
      %v909 = vunpack.c.l.b16 %v877
      %v910 = vunpack.c.l.b16 %v878
      %v911 = vunpack.c.l.b16 %v879
      %v912 = vunpack.c.l.b16 %v880
      %v913 = vunpack.c.l.b16 %v881
      %v914 = vunpack.c.l.b16 %v882
      %v915 = vunpack.c.l.b16 %v883
      %v916 = vunpack.c.l.b16 %v884
      %v917 = vunpack.c.l.b16 %v885
      %v918 = vunpack.c.l.b16 %v886
      %v919 = vunpack.c.l.b16 %v887
      %v920 = vunpack.c.l.b16 %v888
      %v921 = vunpack.c.l.b16 %v889
      %v922 = vunpack.c.l.b16 %v890
      %v923 = vunpack.c.l.b16 %v891
      %v924 = vpack.c.b16 %v909, %v908
      %v925 = vpack.c.b16 %v911, %v910
      %v926 = vpack.c.b16 %v913, %v912
      %v927 = vpack.c.b16 %v915, %v914
      %v928 = vpack.c.b16 %v917, %v916
      %v929 = vpack.c.b16 %v919, %v918
      %v930 = vpack.c.b16 %v921, %v920
      %v931 = vpack.c.b16 %v923, %v922
      %940 = vmatpush.bf16.msra.mxu0 %v931
      %941 = vmatpush.bf16.msra.mxu0 %v930
      %942 = vmatpush.bf16.msra.mxu0 %v929
      %943 = vmatpush.bf16.msra.mxu0 %v928
      %944 = vmatpush.bf16.msra.mxu0 %v927
      %945 = vmatpush.bf16.msra.mxu0 %v926
      %946 = vmatpush.bf16.msra.mxu0 %v925
      %947 = vmatpush.bf16.msra.mxu0 %v924
      %948 = vmatmul.bf16.gmra.mxu0 %v399
      %v949 = vpop.f32.mrf.mxu0
      %v950 = vadd.f32 0.0, %v949
      %v951 = vpop.f32.mrf.mxu0
      %v952 = vadd.f32 0.0, %v951
      %953 = vmatmul.bf16.gmra.mxu0 %v860
      %v954 = vpop.f32.mrf.mxu0
      %v955 = vadd.f32 0.0, %v954
      %v956 = vpop.f32.mrf.mxu0
      %v957 = vadd.f32 0.0, %v956
      %958 = vmatmul.bf16.gmra.mxu0 %v861
      %v959 = vpop.f32.mrf.mxu0
      %v960 = vadd.f32 0.0, %v959
      %v961 = vpop.f32.mrf.mxu0
      %v962 = vadd.f32 0.0, %v961
      %963 = vmatmul.bf16.gmra.mxu0 %v862
      %v964 = vpop.f32.mrf.mxu0
      %v965 = vadd.f32 0.0, %v964
      %v966 = vpop.f32.mrf.mxu0
      %v967 = vadd.f32 0.0, %v966
      %968 = vmatmul.bf16.gmra.mxu0 %v863
      %v969 = vpop.f32.mrf.mxu0
      %v970 = vadd.f32 0.0, %v969
      %v971 = vpop.f32.mrf.mxu0
      %v972 = vadd.f32 0.0, %v971
      %973 = vmatmul.bf16.gmra.mxu0 %v864
      %v974 = vpop.f32.mrf.mxu0
      %v975 = vadd.f32 0.0, %v974
      %v976 = vpop.f32.mrf.mxu0
      %v977 = vadd.f32 0.0, %v976
      %978 = vmatmul.bf16.gmra.mxu0 %v865
      %v979 = vpop.f32.mrf.mxu0
      %v980 = vadd.f32 0.0, %v979
      %v981 = vpop.f32.mrf.mxu0
      %v982 = vadd.f32 0.0, %v981
      %983 = vmatmul.bf16.gmra.mxu0 %v866
      %v984 = vpop.f32.mrf.mxu0
      %v985 = vadd.f32 0.0, %v984
      %v986 = vpop.f32.mrf.mxu0
      %v987 = vadd.f32 0.0, %v986
      %988 = vmatmul.bf16.gmra.mxu0 %v867
      %v989 = vpop.f32.mrf.mxu0
      %v990 = vadd.f32 0.0, %v989
      %v991 = vpop.f32.mrf.mxu0
      %v992 = vadd.f32 0.0, %v991
      %993 = vmatmul.bf16.gmra.mxu0 %v868
      %v994 = vpop.f32.mrf.mxu0
      %v995 = vadd.f32 0.0, %v994
      %v996 = vpop.f32.mrf.mxu0
      %v997 = vadd.f32 0.0, %v996
      %998 = vmatmul.bf16.gmra.mxu0 %v869
      %v999 = vpop.f32.mrf.mxu0
      %v1000 = vadd.f32 0.0, %v999
      %v1001 = vpop.f32.mrf.mxu0
      %v1002 = vadd.f32 0.0, %v1001
      %1003 = vmatmul.bf16.gmra.mxu0 %v870
      %v1004 = vpop.f32.mrf.mxu0
      %v1005 = vadd.f32 0.0, %v1004
      %v1006 = vpop.f32.mrf.mxu0
      %v1007 = vadd.f32 0.0, %v1006
      %1008 = vmatmul.bf16.gmra.mxu0 %v871
      %v1009 = vpop.f32.mrf.mxu0
      %v1010 = vadd.f32 0.0, %v1009
      %v1011 = vpop.f32.mrf.mxu0
      %v1012 = vadd.f32 0.0, %v1011
      %1013 = vmatmul.bf16.gmra.mxu0 %v872
      %v1014 = vpop.f32.mrf.mxu0
      %v1015 = vadd.f32 0.0, %v1014
      %v1016 = vpop.f32.mrf.mxu0
      %v1017 = vadd.f32 0.0, %v1016
      %1018 = vmatmul.bf16.gmra.mxu0 %v873
      %v1019 = vpop.f32.mrf.mxu0
      %v1020 = vadd.f32 0.0, %v1019
      %v1021 = vpop.f32.mrf.mxu0
      %v1022 = vadd.f32 0.0, %v1021
      %1023 = vmatmul.bf16.gmra.mxu0 %v874
      %v1024 = vpop.f32.mrf.mxu0
      %v1025 = vadd.f32 0.0, %v1024
      %v1026 = vpop.f32.mrf.mxu0
      %v1027 = vadd.f32 0.0, %v1026
      %1028 = vdwg.mxu0
      %v1029 = vadd.f32 %v658, %v950
      %v1030 = vadd.f32 %v660, %v952
      %v1031 = vadd.f32 %v663, %v955
      %v1032 = vadd.f32 %v665, %v957
      %v1033 = vadd.f32 %v668, %v960
      %v1034 = vadd.f32 %v670, %v962
      %v1035 = vadd.f32 %v673, %v965
      %v1036 = vadd.f32 %v675, %v967
      %v1037 = vadd.f32 %v678, %v970
      %v1038 = vadd.f32 %v680, %v972
      %v1039 = vadd.f32 %v683, %v975
      %v1040 = vadd.f32 %v685, %v977
      %v1041 = vadd.f32 %v688, %v980
      %v1042 = vadd.f32 %v690, %v982
      %v1043 = vadd.f32 %v693, %v985
      %v1044 = vadd.f32 %v695, %v987
      %v1045 = vadd.f32 %v698, %v990
      %v1046 = vadd.f32 %v700, %v992
      %v1047 = vadd.f32 %v703, %v995
      %v1048 = vadd.f32 %v705, %v997
      %v1049 = vadd.f32 %v708, %v1000
      %v1050 = vadd.f32 %v710, %v1002
      %v1051 = vadd.f32 %v713, %v1005
      %v1052 = vadd.f32 %v715, %v1007
      %v1053 = vadd.f32 %v718, %v1010
      %v1054 = vadd.f32 %v720, %v1012
      %v1055 = vadd.f32 %v723, %v1015
      %v1056 = vadd.f32 %v725, %v1017
      %v1057 = vadd.f32 %v728, %v1020
      %v1058 = vadd.f32 %v730, %v1022
      %v1059 = vadd.f32 %v733, %v1025
      %v1060 = vadd.f32 %v735, %v1027
      %v1062 = vrot.slane %v239, 7
      %v1063 = vsel %vm278, %v336, %v1062
      %v1064 = vrot.slane %v240, 7
      %v1065 = vsel %vm278, %v1062, %v1064
      %v1068 = vsel %vm244, %v1063, 0.0
      %v1069 = vsel %vm245, %v1065, 0.0
      %v1070 = vpack.c.bf16 %v1069, %v1068
      %s1071 = scalar_lea.vmem %s1, 192
      %v1072 = vld [vmem:[%s1071] sm:$0xf]
      %v1073 = vld [vmem:[%s1071 + $0x4] sm:$0xf]
      %v1074 = vld [vmem:[%s1071 + $0x8] sm:$0xf]
      %v1075 = vld [vmem:[%s1071 + $0xc] sm:$0xf]
      %v1076 = vld [vmem:[%s1071 + $0x10] sm:$0xf]
      %v1077 = vld [vmem:[%s1071 + $0x14] sm:$0xf]
      %v1078 = vld [vmem:[%s1071 + $0x18] sm:$0xf]
      %v1079 = vld [vmem:[%s1071 + $0x1c] sm:$0xf]
      %v1080 = vld [vmem:[%s1071 + $0x20] sm:$0xf]
      %v1081 = vld [vmem:[%s1071 + $0x24] sm:$0xf]
      %v1082 = vld [vmem:[%s1071 + $0x28] sm:$0xf]
      %v1083 = vld [vmem:[%s1071 + $0x2c] sm:$0xf]
      %v1084 = vld [vmem:[%s1071 + $0x30] sm:$0xf]
      %v1085 = vld [vmem:[%s1071 + $0x34] sm:$0xf]
      %v1086 = vld [vmem:[%s1071 + $0x38] sm:$0xf]
      %v1087 = vld [vmem:[%s1071 + $0x3c] sm:$0xf]
      %v1104 = vunpack.c.l.b16 %v1072
      %v1105 = vunpack.c.l.b16 %v1073
      %v1106 = vunpack.c.l.b16 %v1074
      %v1107 = vunpack.c.l.b16 %v1075
      %v1108 = vunpack.c.l.b16 %v1076
      %v1109 = vunpack.c.l.b16 %v1077
      %v1110 = vunpack.c.l.b16 %v1078
      %v1111 = vunpack.c.l.b16 %v1079
      %v1112 = vunpack.c.l.b16 %v1080
      %v1113 = vunpack.c.l.b16 %v1081
      %v1114 = vunpack.c.l.b16 %v1082
      %v1115 = vunpack.c.l.b16 %v1083
      %v1116 = vunpack.c.l.b16 %v1084
      %v1117 = vunpack.c.l.b16 %v1085
      %v1118 = vunpack.c.l.b16 %v1086
      %v1119 = vunpack.c.l.b16 %v1087
      %v1120 = vpack.c.b16 %v1105, %v1104
      %v1121 = vpack.c.b16 %v1107, %v1106
      %v1122 = vpack.c.b16 %v1109, %v1108
      %v1123 = vpack.c.b16 %v1111, %v1110
      %v1124 = vpack.c.b16 %v1113, %v1112
      %v1125 = vpack.c.b16 %v1115, %v1114
      %v1126 = vpack.c.b16 %v1117, %v1116
      %v1127 = vpack.c.b16 %v1119, %v1118
      %1136 = vmatpush.bf16.msra.mxu0 %v1127
      %1137 = vmatpush.bf16.msra.mxu0 %v1126
      %1138 = vmatpush.bf16.msra.mxu0 %v1125
      %1139 = vmatpush.bf16.msra.mxu0 %v1124
      %1140 = vmatpush.bf16.msra.mxu0 %v1123
      %1141 = vmatpush.bf16.msra.mxu0 %v1122
      %1142 = vmatpush.bf16.msra.mxu0 %v1121
      %1143 = vmatpush.bf16.msra.mxu0 %v1120
      %1144 = vmatmul.bf16.gmra.mxu0 %v400
      %v1145 = vpop.f32.mrf.mxu0
      %v1146 = vadd.f32 0.0, %v1145
      %v1147 = vpop.f32.mrf.mxu0
      %v1148 = vadd.f32 0.0, %v1147
      %1149 = vmatmul.bf16.gmra.mxu0 %v401
      %v1150 = vpop.f32.mrf.mxu0
      %v1151 = vadd.f32 0.0, %v1150
      %v1152 = vpop.f32.mrf.mxu0
      %v1153 = vadd.f32 0.0, %v1152
      %1154 = vmatmul.bf16.gmra.mxu0 %v402
      %v1155 = vpop.f32.mrf.mxu0
      %v1156 = vadd.f32 0.0, %v1155
      %v1157 = vpop.f32.mrf.mxu0
      %v1158 = vadd.f32 0.0, %v1157
      %1159 = vmatmul.bf16.gmra.mxu0 %v403
      %v1160 = vpop.f32.mrf.mxu0
      %v1161 = vadd.f32 0.0, %v1160
      %v1162 = vpop.f32.mrf.mxu0
      %v1163 = vadd.f32 0.0, %v1162
      %1164 = vmatmul.bf16.gmra.mxu0 %v404
      %v1165 = vpop.f32.mrf.mxu0
      %v1166 = vadd.f32 0.0, %v1165
      %v1167 = vpop.f32.mrf.mxu0
      %v1168 = vadd.f32 0.0, %v1167
      %1169 = vmatmul.bf16.gmra.mxu0 %v405
      %v1170 = vpop.f32.mrf.mxu0
      %v1171 = vadd.f32 0.0, %v1170
      %v1172 = vpop.f32.mrf.mxu0
      %v1173 = vadd.f32 0.0, %v1172
      %1174 = vmatmul.bf16.gmra.mxu0 %v406
      %v1175 = vpop.f32.mrf.mxu0
      %v1176 = vadd.f32 0.0, %v1175
      %v1177 = vpop.f32.mrf.mxu0
      %v1178 = vadd.f32 0.0, %v1177
      %1179 = vmatmul.bf16.gmra.mxu0 %v407
      %v1180 = vpop.f32.mrf.mxu0
      %v1181 = vadd.f32 0.0, %v1180
      %v1182 = vpop.f32.mrf.mxu0
      %v1183 = vadd.f32 0.0, %v1182
      %1184 = vmatmul.bf16.gmra.mxu0 %v408
      %v1185 = vpop.f32.mrf.mxu0
      %v1186 = vadd.f32 0.0, %v1185
      %v1187 = vpop.f32.mrf.mxu0
      %v1188 = vadd.f32 0.0, %v1187
      %1189 = vmatmul.bf16.gmra.mxu0 %v409
      %v1190 = vpop.f32.mrf.mxu0
      %v1191 = vadd.f32 0.0, %v1190
      %v1192 = vpop.f32.mrf.mxu0
      %v1193 = vadd.f32 0.0, %v1192
      %1194 = vmatmul.bf16.gmra.mxu0 %v410
      %v1195 = vpop.f32.mrf.mxu0
      %v1196 = vadd.f32 0.0, %v1195
      %v1197 = vpop.f32.mrf.mxu0
      %v1198 = vadd.f32 0.0, %v1197
      %1199 = vmatmul.bf16.gmra.mxu0 %v411
      %v1200 = vpop.f32.mrf.mxu0
      %v1201 = vadd.f32 0.0, %v1200
      %v1202 = vpop.f32.mrf.mxu0
      %v1203 = vadd.f32 0.0, %v1202
      %1204 = vmatmul.bf16.gmra.mxu0 %v412
      %v1205 = vpop.f32.mrf.mxu0
      %v1206 = vadd.f32 0.0, %v1205
      %v1207 = vpop.f32.mrf.mxu0
      %v1208 = vadd.f32 0.0, %v1207
      %1209 = vmatmul.bf16.gmra.mxu0 %v413
      %v1210 = vpop.f32.mrf.mxu0
      %v1211 = vadd.f32 0.0, %v1210
      %v1212 = vpop.f32.mrf.mxu0
      %v1213 = vadd.f32 0.0, %v1212
      %1214 = vmatmul.bf16.gmra.mxu0 %v414
      %v1215 = vpop.f32.mrf.mxu0
      %v1216 = vadd.f32 0.0, %v1215
      %v1217 = vpop.f32.mrf.mxu0
      %v1218 = vadd.f32 0.0, %v1217
      %1219 = vmatmul.bf16.gmra.mxu0 %v1070
      %v1220 = vpop.f32.mrf.mxu0
      %v1221 = vadd.f32 0.0, %v1220
      %v1222 = vpop.f32.mrf.mxu0
      %v1223 = vadd.f32 0.0, %v1222
      %1224 = vdwg.mxu0
      %v1225 = vadd.f32 %v1029, %v1146
      %v1226 = vadd.f32 %v1030, %v1148
      %v1227 = vadd.f32 %v1031, %v1151
      %v1228 = vadd.f32 %v1032, %v1153
      %v1229 = vadd.f32 %v1033, %v1156
      %v1230 = vadd.f32 %v1034, %v1158
      %v1231 = vadd.f32 %v1035, %v1161
      %v1232 = vadd.f32 %v1036, %v1163
      %v1233 = vadd.f32 %v1037, %v1166
      %v1234 = vadd.f32 %v1038, %v1168
      %v1235 = vadd.f32 %v1039, %v1171
      %v1236 = vadd.f32 %v1040, %v1173
      %v1237 = vadd.f32 %v1041, %v1176
      %v1238 = vadd.f32 %v1042, %v1178
      %v1239 = vadd.f32 %v1043, %v1181
      %v1240 = vadd.f32 %v1044, %v1183
      %v1241 = vadd.f32 %v1045, %v1186
      %v1242 = vadd.f32 %v1046, %v1188
      %v1243 = vadd.f32 %v1047, %v1191
      %v1244 = vadd.f32 %v1048, %v1193
      %v1245 = vadd.f32 %v1049, %v1196
      %v1246 = vadd.f32 %v1050, %v1198
      %v1247 = vadd.f32 %v1051, %v1201
      %v1248 = vadd.f32 %v1052, %v1203
      %v1249 = vadd.f32 %v1053, %v1206
      %v1250 = vadd.f32 %v1054, %v1208
      %v1251 = vadd.f32 %v1055, %v1211
      %v1252 = vadd.f32 %v1056, %v1213
      %v1253 = vadd.f32 %v1057, %v1216
      %v1254 = vadd.f32 %v1058, %v1218
      %v1255 = vadd.f32 %v1059, %v1221
      %v1256 = vadd.f32 %v1060, %v1223
      %v1257 = vpack.c.bf16 %v240, %v239
      %s1258 = scalar_lea.vmem %s1, 256
      %v1259 = vld [vmem:[%s1258] sm:$0xf]
      %v1260 = vld [vmem:[%s1258 + $0x4] sm:$0xf]
      %v1261 = vld [vmem:[%s1258 + $0x8] sm:$0xf]
      %v1262 = vld [vmem:[%s1258 + $0xc] sm:$0xf]
      %v1263 = vld [vmem:[%s1258 + $0x10] sm:$0xf]
      %v1264 = vld [vmem:[%s1258 + $0x14] sm:$0xf]
      %v1265 = vld [vmem:[%s1258 + $0x18] sm:$0xf]
      %v1266 = vld [vmem:[%s1258 + $0x1c] sm:$0xf]
      %v1267 = vld [vmem:[%s1258 + $0x20] sm:$0xf]
      %v1268 = vld [vmem:[%s1258 + $0x24] sm:$0xf]
      %v1269 = vld [vmem:[%s1258 + $0x28] sm:$0xf]
      %v1270 = vld [vmem:[%s1258 + $0x2c] sm:$0xf]
      %v1271 = vld [vmem:[%s1258 + $0x30] sm:$0xf]
      %v1272 = vld [vmem:[%s1258 + $0x34] sm:$0xf]
      %v1273 = vld [vmem:[%s1258 + $0x38] sm:$0xf]
      %v1274 = vld [vmem:[%s1258 + $0x3c] sm:$0xf]
      %v1291 = vunpack.c.l.b16 %v1259
      %v1292 = vunpack.c.l.b16 %v1260
      %v1293 = vunpack.c.l.b16 %v1261
      %v1294 = vunpack.c.l.b16 %v1262
      %v1295 = vunpack.c.l.b16 %v1263
      %v1296 = vunpack.c.l.b16 %v1264
      %v1297 = vunpack.c.l.b16 %v1265
      %v1298 = vunpack.c.l.b16 %v1266
      %v1299 = vunpack.c.l.b16 %v1267
      %v1300 = vunpack.c.l.b16 %v1268
      %v1301 = vunpack.c.l.b16 %v1269
      %v1302 = vunpack.c.l.b16 %v1270
      %v1303 = vunpack.c.l.b16 %v1271
      %v1304 = vunpack.c.l.b16 %v1272
      %v1305 = vunpack.c.l.b16 %v1273
      %v1306 = vunpack.c.l.b16 %v1274
      %v1307 = vpack.c.b16 %v1292, %v1291
      %v1308 = vpack.c.b16 %v1294, %v1293
      %v1309 = vpack.c.b16 %v1296, %v1295
      %v1310 = vpack.c.b16 %v1298, %v1297
      %v1311 = vpack.c.b16 %v1300, %v1299
      %v1312 = vpack.c.b16 %v1302, %v1301
      %v1313 = vpack.c.b16 %v1304, %v1303
      %v1314 = vpack.c.b16 %v1306, %v1305
      %1323 = vmatpush.bf16.msra.mxu0 %v1314
      %1324 = vmatpush.bf16.msra.mxu0 %v1313
      %1325 = vmatpush.bf16.msra.mxu0 %v1312
      %1326 = vmatpush.bf16.msra.mxu0 %v1311
      %1327 = vmatpush.bf16.msra.mxu0 %v1310
      %1328 = vmatpush.bf16.msra.mxu0 %v1309
      %1329 = vmatpush.bf16.msra.mxu0 %v1308
      %1330 = vmatpush.bf16.msra.mxu0 %v1307
      %1331 = vmatmul.bf16.gmra.mxu0 %v431
      %v1332 = vpop.f32.mrf.mxu0
      %v1333 = vadd.f32 0.0, %v1332
      %v1334 = vpop.f32.mrf.mxu0
      %v1335 = vadd.f32 0.0, %v1334
      %1336 = vmatmul.bf16.gmra.mxu0 %v432
      %v1337 = vpop.f32.mrf.mxu0
      %v1338 = vadd.f32 0.0, %v1337
      %v1339 = vpop.f32.mrf.mxu0
      %v1340 = vadd.f32 0.0, %v1339
      %1341 = vmatmul.bf16.gmra.mxu0 %v433
      %v1342 = vpop.f32.mrf.mxu0
      %v1343 = vadd.f32 0.0, %v1342
      %v1344 = vpop.f32.mrf.mxu0
      %v1345 = vadd.f32 0.0, %v1344
      %1346 = vmatmul.bf16.gmra.mxu0 %v434
      %v1347 = vpop.f32.mrf.mxu0
      %v1348 = vadd.f32 0.0, %v1347
      %v1349 = vpop.f32.mrf.mxu0
      %v1350 = vadd.f32 0.0, %v1349
      %1351 = vmatmul.bf16.gmra.mxu0 %v435
      %v1352 = vpop.f32.mrf.mxu0
      %v1353 = vadd.f32 0.0, %v1352
      %v1354 = vpop.f32.mrf.mxu0
      %v1355 = vadd.f32 0.0, %v1354
      %1356 = vmatmul.bf16.gmra.mxu0 %v436
      %v1357 = vpop.f32.mrf.mxu0
      %v1358 = vadd.f32 0.0, %v1357
      %v1359 = vpop.f32.mrf.mxu0
      %v1360 = vadd.f32 0.0, %v1359
      %1361 = vmatmul.bf16.gmra.mxu0 %v437
      %v1362 = vpop.f32.mrf.mxu0
      %v1363 = vadd.f32 0.0, %v1362
      %v1364 = vpop.f32.mrf.mxu0
      %v1365 = vadd.f32 0.0, %v1364
      %1366 = vmatmul.bf16.gmra.mxu0 %v438
      %v1367 = vpop.f32.mrf.mxu0
      %v1368 = vadd.f32 0.0, %v1367
      %v1369 = vpop.f32.mrf.mxu0
      %v1370 = vadd.f32 0.0, %v1369
      %1371 = vmatmul.bf16.gmra.mxu0 %v439
      %v1372 = vpop.f32.mrf.mxu0
      %v1373 = vadd.f32 0.0, %v1372
      %v1374 = vpop.f32.mrf.mxu0
      %v1375 = vadd.f32 0.0, %v1374
      %1376 = vmatmul.bf16.gmra.mxu0 %v440
      %v1377 = vpop.f32.mrf.mxu0
      %v1378 = vadd.f32 0.0, %v1377
      %v1379 = vpop.f32.mrf.mxu0
      %v1380 = vadd.f32 0.0, %v1379
      %1381 = vmatmul.bf16.gmra.mxu0 %v441
      %v1382 = vpop.f32.mrf.mxu0
      %v1383 = vadd.f32 0.0, %v1382
      %v1384 = vpop.f32.mrf.mxu0
      %v1385 = vadd.f32 0.0, %v1384
      %1386 = vmatmul.bf16.gmra.mxu0 %v442
      %v1387 = vpop.f32.mrf.mxu0
      %v1388 = vadd.f32 0.0, %v1387
      %v1389 = vpop.f32.mrf.mxu0
      %v1390 = vadd.f32 0.0, %v1389
      %1391 = vmatmul.bf16.gmra.mxu0 %v443
      %v1392 = vpop.f32.mrf.mxu0
      %v1393 = vadd.f32 0.0, %v1392
      %v1394 = vpop.f32.mrf.mxu0
      %v1395 = vadd.f32 0.0, %v1394
      %1396 = vmatmul.bf16.gmra.mxu0 %v444
      %v1397 = vpop.f32.mrf.mxu0
      %v1398 = vadd.f32 0.0, %v1397
      %v1399 = vpop.f32.mrf.mxu0
      %v1400 = vadd.f32 0.0, %v1399
      %1401 = vmatmul.bf16.gmra.mxu0 %v445
      %v1402 = vpop.f32.mrf.mxu0
      %v1403 = vadd.f32 0.0, %v1402
      %v1404 = vpop.f32.mrf.mxu0
      %v1405 = vadd.f32 0.0, %v1404
      %1406 = vmatmul.bf16.gmra.mxu0 %v1257
      %v1407 = vpop.f32.mrf.mxu0
      %v1408 = vadd.f32 0.0, %v1407
      %v1409 = vpop.f32.mrf.mxu0
      %v1410 = vadd.f32 0.0, %v1409
      %1411 = vdwg.mxu0
      %v1412 = vadd.f32 %v1225, %v1333
      %v1413 = vadd.f32 %v1226, %v1335
      %v1414 = vadd.f32 %v1227, %v1338
      %v1415 = vadd.f32 %v1228, %v1340
      %v1416 = vadd.f32 %v1229, %v1343
      %v1417 = vadd.f32 %v1230, %v1345
      %v1418 = vadd.f32 %v1231, %v1348
      %v1419 = vadd.f32 %v1232, %v1350
      %v1420 = vadd.f32 %v1233, %v1353
      %v1421 = vadd.f32 %v1234, %v1355
      %v1422 = vadd.f32 %v1235, %v1358
      %v1423 = vadd.f32 %v1236, %v1360
      %v1424 = vadd.f32 %v1237, %v1363
      %v1425 = vadd.f32 %v1238, %v1365
      %v1426 = vadd.f32 %v1239, %v1368
      %v1427 = vadd.f32 %v1240, %v1370
      %v1428 = vadd.f32 %v1241, %v1373
      %v1429 = vadd.f32 %v1242, %v1375
      %v1430 = vadd.f32 %v1243, %v1378
      %v1431 = vadd.f32 %v1244, %v1380
      %v1432 = vadd.f32 %v1245, %v1383
      %v1433 = vadd.f32 %v1246, %v1385
      %v1434 = vadd.f32 %v1247, %v1388
      %v1435 = vadd.f32 %v1248, %v1390
      %v1436 = vadd.f32 %v1249, %v1393
      %v1437 = vadd.f32 %v1250, %v1395
      %v1438 = vadd.f32 %v1251, %v1398
      %v1439 = vadd.f32 %v1252, %v1400
      %v1440 = vadd.f32 %v1253, %v1403
      %v1441 = vadd.f32 %v1254, %v1405
      %v1442 = vadd.f32 %v1255, %v1408
      %v1443 = vadd.f32 %v1256, %v1410
      %v1444 = vrot.slane %v240, 1
      %v1445 = vsel %vm738, %v798, %v1444
      %v1448 = vsel %vm738, %v1444, 0.0
      %v1449 = vsel %vm246, %v1445, 0.0
      %v1450 = vsel %vm247, %v1448, 0.0
      %v1451 = vpack.c.bf16 %v1450, %v1449
      %s1452 = scalar_lea.vmem %s1, 320
      %v1453 = vld [vmem:[%s1452] sm:$0xf]
      %v1454 = vld [vmem:[%s1452 + $0x4] sm:$0xf]
      %v1455 = vld [vmem:[%s1452 + $0x8] sm:$0xf]
      %v1456 = vld [vmem:[%s1452 + $0xc] sm:$0xf]
      %v1457 = vld [vmem:[%s1452 + $0x10] sm:$0xf]
      %v1458 = vld [vmem:[%s1452 + $0x14] sm:$0xf]
      %v1459 = vld [vmem:[%s1452 + $0x18] sm:$0xf]
      %v1460 = vld [vmem:[%s1452 + $0x1c] sm:$0xf]
      %v1461 = vld [vmem:[%s1452 + $0x20] sm:$0xf]
      %v1462 = vld [vmem:[%s1452 + $0x24] sm:$0xf]
      %v1463 = vld [vmem:[%s1452 + $0x28] sm:$0xf]
      %v1464 = vld [vmem:[%s1452 + $0x2c] sm:$0xf]
      %v1465 = vld [vmem:[%s1452 + $0x30] sm:$0xf]
      %v1466 = vld [vmem:[%s1452 + $0x34] sm:$0xf]
      %v1467 = vld [vmem:[%s1452 + $0x38] sm:$0xf]
      %v1468 = vld [vmem:[%s1452 + $0x3c] sm:$0xf]
      %v1485 = vunpack.c.l.b16 %v1453
      %v1486 = vunpack.c.l.b16 %v1454
      %v1487 = vunpack.c.l.b16 %v1455
      %v1488 = vunpack.c.l.b16 %v1456
      %v1489 = vunpack.c.l.b16 %v1457
      %v1490 = vunpack.c.l.b16 %v1458
      %v1491 = vunpack.c.l.b16 %v1459
      %v1492 = vunpack.c.l.b16 %v1460
      %v1493 = vunpack.c.l.b16 %v1461
      %v1494 = vunpack.c.l.b16 %v1462
      %v1495 = vunpack.c.l.b16 %v1463
      %v1496 = vunpack.c.l.b16 %v1464
      %v1497 = vunpack.c.l.b16 %v1465
      %v1498 = vunpack.c.l.b16 %v1466
      %v1499 = vunpack.c.l.b16 %v1467
      %v1500 = vunpack.c.l.b16 %v1468
      %v1501 = vpack.c.b16 %v1486, %v1485
      %v1502 = vpack.c.b16 %v1488, %v1487
      %v1503 = vpack.c.b16 %v1490, %v1489
      %v1504 = vpack.c.b16 %v1492, %v1491
      %v1505 = vpack.c.b16 %v1494, %v1493
      %v1506 = vpack.c.b16 %v1496, %v1495
      %v1507 = vpack.c.b16 %v1498, %v1497
      %v1508 = vpack.c.b16 %v1500, %v1499
      %1517 = vmatpush.bf16.msra.mxu0 %v1508
      %1518 = vmatpush.bf16.msra.mxu0 %v1507
      %1519 = vmatpush.bf16.msra.mxu0 %v1506
      %1520 = vmatpush.bf16.msra.mxu0 %v1505
      %1521 = vmatpush.bf16.msra.mxu0 %v1504
      %1522 = vmatpush.bf16.msra.mxu0 %v1503
      %1523 = vmatpush.bf16.msra.mxu0 %v1502
      %1524 = vmatpush.bf16.msra.mxu0 %v1501
      %1525 = vmatmul.bf16.gmra.mxu0 %v860
      %v1526 = vpop.f32.mrf.mxu0
      %v1527 = vadd.f32 0.0, %v1526
      %v1528 = vpop.f32.mrf.mxu0
      %v1529 = vadd.f32 0.0, %v1528
      %1530 = vmatmul.bf16.gmra.mxu0 %v861
      %v1531 = vpop.f32.mrf.mxu0
      %v1532 = vadd.f32 0.0, %v1531
      %v1533 = vpop.f32.mrf.mxu0
      %v1534 = vadd.f32 0.0, %v1533
      %1535 = vmatmul.bf16.gmra.mxu0 %v862
      %v1536 = vpop.f32.mrf.mxu0
      %v1537 = vadd.f32 0.0, %v1536
      %v1538 = vpop.f32.mrf.mxu0
      %v1539 = vadd.f32 0.0, %v1538
      %1540 = vmatmul.bf16.gmra.mxu0 %v863
      %v1541 = vpop.f32.mrf.mxu0
      %v1542 = vadd.f32 0.0, %v1541
      %v1543 = vpop.f32.mrf.mxu0
      %v1544 = vadd.f32 0.0, %v1543
      %1545 = vmatmul.bf16.gmra.mxu0 %v864
      %v1546 = vpop.f32.mrf.mxu0
      %v1547 = vadd.f32 0.0, %v1546
      %v1548 = vpop.f32.mrf.mxu0
      %v1549 = vadd.f32 0.0, %v1548
      %1550 = vmatmul.bf16.gmra.mxu0 %v865
      %v1551 = vpop.f32.mrf.mxu0
      %v1552 = vadd.f32 0.0, %v1551
      %v1553 = vpop.f32.mrf.mxu0
      %v1554 = vadd.f32 0.0, %v1553
      %1555 = vmatmul.bf16.gmra.mxu0 %v866
      %v1556 = vpop.f32.mrf.mxu0
      %v1557 = vadd.f32 0.0, %v1556
      %v1558 = vpop.f32.mrf.mxu0
      %v1559 = vadd.f32 0.0, %v1558
      %1560 = vmatmul.bf16.gmra.mxu0 %v867
      %v1561 = vpop.f32.mrf.mxu0
      %v1562 = vadd.f32 0.0, %v1561
      %v1563 = vpop.f32.mrf.mxu0
      %v1564 = vadd.f32 0.0, %v1563
      %1565 = vmatmul.bf16.gmra.mxu0 %v868
      %v1566 = vpop.f32.mrf.mxu0
      %v1567 = vadd.f32 0.0, %v1566
      %v1568 = vpop.f32.mrf.mxu0
      %v1569 = vadd.f32 0.0, %v1568
      %1570 = vmatmul.bf16.gmra.mxu0 %v869
      %v1571 = vpop.f32.mrf.mxu0
      %v1572 = vadd.f32 0.0, %v1571
      %v1573 = vpop.f32.mrf.mxu0
      %v1574 = vadd.f32 0.0, %v1573
      %1575 = vmatmul.bf16.gmra.mxu0 %v870
      %v1576 = vpop.f32.mrf.mxu0
      %v1577 = vadd.f32 0.0, %v1576
      %v1578 = vpop.f32.mrf.mxu0
      %v1579 = vadd.f32 0.0, %v1578
      %1580 = vmatmul.bf16.gmra.mxu0 %v871
      %v1581 = vpop.f32.mrf.mxu0
      %v1582 = vadd.f32 0.0, %v1581
      %v1583 = vpop.f32.mrf.mxu0
      %v1584 = vadd.f32 0.0, %v1583
      %1585 = vmatmul.bf16.gmra.mxu0 %v872
      %v1586 = vpop.f32.mrf.mxu0
      %v1587 = vadd.f32 0.0, %v1586
      %v1588 = vpop.f32.mrf.mxu0
      %v1589 = vadd.f32 0.0, %v1588
      %1590 = vmatmul.bf16.gmra.mxu0 %v873
      %v1591 = vpop.f32.mrf.mxu0
      %v1592 = vadd.f32 0.0, %v1591
      %v1593 = vpop.f32.mrf.mxu0
      %v1594 = vadd.f32 0.0, %v1593
      %1595 = vmatmul.bf16.gmra.mxu0 %v874
      %v1596 = vpop.f32.mrf.mxu0
      %v1597 = vadd.f32 0.0, %v1596
      %v1598 = vpop.f32.mrf.mxu0
      %v1599 = vadd.f32 0.0, %v1598
      %1600 = vmatmul.bf16.gmra.mxu0 %v1451
      %v1601 = vpop.f32.mrf.mxu0
      %v1602 = vadd.f32 0.0, %v1601
      %v1603 = vpop.f32.mrf.mxu0
      %v1604 = vadd.f32 0.0, %v1603
      %1605 = vdwg.mxu0
      %v1606 = vadd.f32 %v1412, %v1527
      %v1607 = vadd.f32 %v1413, %v1529
      %v1608 = vadd.f32 %v1414, %v1532
      %v1609 = vadd.f32 %v1415, %v1534
      %v1610 = vadd.f32 %v1416, %v1537
      %v1611 = vadd.f32 %v1417, %v1539
      %v1612 = vadd.f32 %v1418, %v1542
      %v1613 = vadd.f32 %v1419, %v1544
      %v1614 = vadd.f32 %v1420, %v1547
      %v1615 = vadd.f32 %v1421, %v1549
      %v1616 = vadd.f32 %v1422, %v1552
      %v1617 = vadd.f32 %v1423, %v1554
      %v1618 = vadd.f32 %v1424, %v1557
      %v1619 = vadd.f32 %v1425, %v1559
      %v1620 = vadd.f32 %v1426, %v1562
      %v1621 = vadd.f32 %v1427, %v1564
      %v1622 = vadd.f32 %v1428, %v1567
      %v1623 = vadd.f32 %v1429, %v1569
      %v1624 = vadd.f32 %v1430, %v1572
      %v1625 = vadd.f32 %v1431, %v1574
      %v1626 = vadd.f32 %v1432, %v1577
      %v1627 = vadd.f32 %v1433, %v1579
      %v1628 = vadd.f32 %v1434, %v1582
      %v1629 = vadd.f32 %v1435, %v1584
      %v1630 = vadd.f32 %v1436, %v1587
      %v1631 = vadd.f32 %v1437, %v1589
      %v1632 = vadd.f32 %v1438, %v1592
      %v1633 = vadd.f32 %v1439, %v1594
      %v1634 = vadd.f32 %v1440, %v1597
      %v1635 = vadd.f32 %v1441, %v1599
      %v1636 = vadd.f32 %v1442, %v1602
      %v1637 = vadd.f32 %v1443, %v1604
      %s1638 = scalar_lea.vmem %s1, 384
      %v1639 = vld [vmem:[%s1638] sm:$0xf]
      %v1640 = vld [vmem:[%s1638 + $0x4] sm:$0xf]
      %v1641 = vld [vmem:[%s1638 + $0x8] sm:$0xf]
      %v1642 = vld [vmem:[%s1638 + $0xc] sm:$0xf]
      %v1643 = vld [vmem:[%s1638 + $0x10] sm:$0xf]
      %v1644 = vld [vmem:[%s1638 + $0x14] sm:$0xf]
      %v1645 = vld [vmem:[%s1638 + $0x18] sm:$0xf]
      %v1646 = vld [vmem:[%s1638 + $0x1c] sm:$0xf]
      %v1647 = vld [vmem:[%s1638 + $0x20] sm:$0xf]
      %v1648 = vld [vmem:[%s1638 + $0x24] sm:$0xf]
      %v1649 = vld [vmem:[%s1638 + $0x28] sm:$0xf]
      %v1650 = vld [vmem:[%s1638 + $0x2c] sm:$0xf]
      %v1651 = vld [vmem:[%s1638 + $0x30] sm:$0xf]
      %v1652 = vld [vmem:[%s1638 + $0x34] sm:$0xf]
      %v1653 = vld [vmem:[%s1638 + $0x38] sm:$0xf]
      %v1654 = vld [vmem:[%s1638 + $0x3c] sm:$0xf]
      %v1671 = vunpack.c.l.b16 %v1639
      %v1672 = vunpack.c.l.b16 %v1640
      %v1673 = vunpack.c.l.b16 %v1641
      %v1674 = vunpack.c.l.b16 %v1642
      %v1675 = vunpack.c.l.b16 %v1643
      %v1676 = vunpack.c.l.b16 %v1644
      %v1677 = vunpack.c.l.b16 %v1645
      %v1678 = vunpack.c.l.b16 %v1646
      %v1679 = vunpack.c.l.b16 %v1647
      %v1680 = vunpack.c.l.b16 %v1648
      %v1681 = vunpack.c.l.b16 %v1649
      %v1682 = vunpack.c.l.b16 %v1650
      %v1683 = vunpack.c.l.b16 %v1651
      %v1684 = vunpack.c.l.b16 %v1652
      %v1685 = vunpack.c.l.b16 %v1653
      %v1686 = vunpack.c.l.b16 %v1654
      %v1687 = vpack.c.b16 %v1672, %v1671
      %v1688 = vpack.c.b16 %v1674, %v1673
      %v1689 = vpack.c.b16 %v1676, %v1675
      %v1690 = vpack.c.b16 %v1678, %v1677
      %v1691 = vpack.c.b16 %v1680, %v1679
      %v1692 = vpack.c.b16 %v1682, %v1681
      %v1693 = vpack.c.b16 %v1684, %v1683
      %v1694 = vpack.c.b16 %v1686, %v1685
      %1703 = vmatpush.bf16.msra.mxu0 %v1694
      %1704 = vmatpush.bf16.msra.mxu0 %v1693
      %1705 = vmatpush.bf16.msra.mxu0 %v1692
      %1706 = vmatpush.bf16.msra.mxu0 %v1691
      %1707 = vmatpush.bf16.msra.mxu0 %v1690
      %1708 = vmatpush.bf16.msra.mxu0 %v1689
      %1709 = vmatpush.bf16.msra.mxu0 %v1688
      %1710 = vmatpush.bf16.msra.mxu0 %v1687
      %1711 = vmatmul.bf16.gmra.mxu0 %v401
      %v1712 = vpop.f32.mrf.mxu0
      %v1713 = vadd.f32 0.0, %v1712
      %v1714 = vpop.f32.mrf.mxu0
      %v1715 = vadd.f32 0.0, %v1714
      %1716 = vmatmul.bf16.gmra.mxu0 %v402
      %v1717 = vpop.f32.mrf.mxu0
      %v1718 = vadd.f32 0.0, %v1717
      %v1719 = vpop.f32.mrf.mxu0
      %v1720 = vadd.f32 0.0, %v1719
      %1721 = vmatmul.bf16.gmra.mxu0 %v403
      %v1722 = vpop.f32.mrf.mxu0
      %v1723 = vadd.f32 0.0, %v1722
      %v1724 = vpop.f32.mrf.mxu0
      %v1725 = vadd.f32 0.0, %v1724
      %1726 = vmatmul.bf16.gmra.mxu0 %v404
      %v1727 = vpop.f32.mrf.mxu0
      %v1728 = vadd.f32 0.0, %v1727
      %v1729 = vpop.f32.mrf.mxu0
      %v1730 = vadd.f32 0.0, %v1729
      %1731 = vmatmul.bf16.gmra.mxu0 %v405
      %v1732 = vpop.f32.mrf.mxu0
      %v1733 = vadd.f32 0.0, %v1732
      %v1734 = vpop.f32.mrf.mxu0
      %v1735 = vadd.f32 0.0, %v1734
      %1736 = vmatmul.bf16.gmra.mxu0 %v406
      %v1737 = vpop.f32.mrf.mxu0
      %v1738 = vadd.f32 0.0, %v1737
      %v1739 = vpop.f32.mrf.mxu0
      %v1740 = vadd.f32 0.0, %v1739
      %1741 = vmatmul.bf16.gmra.mxu0 %v407
      %v1742 = vpop.f32.mrf.mxu0
      %v1743 = vadd.f32 0.0, %v1742
      %v1744 = vpop.f32.mrf.mxu0
      %v1745 = vadd.f32 0.0, %v1744
      %1746 = vmatmul.bf16.gmra.mxu0 %v408
      %v1747 = vpop.f32.mrf.mxu0
      %v1748 = vadd.f32 0.0, %v1747
      %v1749 = vpop.f32.mrf.mxu0
      %v1750 = vadd.f32 0.0, %v1749
      %1751 = vmatmul.bf16.gmra.mxu0 %v409
      %v1752 = vpop.f32.mrf.mxu0
      %v1753 = vadd.f32 0.0, %v1752
      %v1754 = vpop.f32.mrf.mxu0
      %v1755 = vadd.f32 0.0, %v1754
      %1756 = vmatmul.bf16.gmra.mxu0 %v410
      %v1757 = vpop.f32.mrf.mxu0
      %v1758 = vadd.f32 0.0, %v1757
      %v1759 = vpop.f32.mrf.mxu0
      %v1760 = vadd.f32 0.0, %v1759
      %1761 = vmatmul.bf16.gmra.mxu0 %v411
      %v1762 = vpop.f32.mrf.mxu0
      %v1763 = vadd.f32 0.0, %v1762
      %v1764 = vpop.f32.mrf.mxu0
      %v1765 = vadd.f32 0.0, %v1764
      %1766 = vmatmul.bf16.gmra.mxu0 %v412
      %v1767 = vpop.f32.mrf.mxu0
      %v1768 = vadd.f32 0.0, %v1767
      %v1769 = vpop.f32.mrf.mxu0
      %v1770 = vadd.f32 0.0, %v1769
      %1771 = vmatmul.bf16.gmra.mxu0 %v413
      %v1772 = vpop.f32.mrf.mxu0
      %v1773 = vadd.f32 0.0, %v1772
      %v1774 = vpop.f32.mrf.mxu0
      %v1775 = vadd.f32 0.0, %v1774
      %1776 = vmatmul.bf16.gmra.mxu0 %v414
      %v1777 = vpop.f32.mrf.mxu0
      %v1778 = vadd.f32 0.0, %v1777
      %v1779 = vpop.f32.mrf.mxu0
      %v1780 = vadd.f32 0.0, %v1779
      %1781 = vmatmul.bf16.gmra.mxu0 %v1070
      %v1782 = vpop.f32.mrf.mxu0
      %v1783 = vadd.f32 0.0, %v1782
      %v1784 = vpop.f32.mrf.mxu0
      %v1785 = vadd.f32 0.0, %v1784
      %1786 = vmatmul.bf16.gmra.mxu0 %v399
      %v1787 = vpop.f32.mrf.mxu0
      %v1788 = vadd.f32 0.0, %v1787
      %v1789 = vpop.f32.mrf.mxu0
      %v1790 = vadd.f32 0.0, %v1789
      %1791 = vdwg.mxu0
      %v1792 = vadd.f32 %v1606, %v1713
      %v1793 = vadd.f32 %v1607, %v1715
      %v1794 = vadd.f32 %v1608, %v1718
      %v1795 = vadd.f32 %v1609, %v1720
      %v1796 = vadd.f32 %v1610, %v1723
      %v1797 = vadd.f32 %v1611, %v1725
      %v1798 = vadd.f32 %v1612, %v1728
      %v1799 = vadd.f32 %v1613, %v1730
      %v1800 = vadd.f32 %v1614, %v1733
      %v1801 = vadd.f32 %v1615, %v1735
      %v1802 = vadd.f32 %v1616, %v1738
      %v1803 = vadd.f32 %v1617, %v1740
      %v1804 = vadd.f32 %v1618, %v1743
      %v1805 = vadd.f32 %v1619, %v1745
      %v1806 = vadd.f32 %v1620, %v1748
      %v1807 = vadd.f32 %v1621, %v1750
      %v1808 = vadd.f32 %v1622, %v1753
      %v1809 = vadd.f32 %v1623, %v1755
      %v1810 = vadd.f32 %v1624, %v1758
      %v1811 = vadd.f32 %v1625, %v1760
      %v1812 = vadd.f32 %v1626, %v1763
      %v1813 = vadd.f32 %v1627, %v1765
      %v1814 = vadd.f32 %v1628, %v1768
      %v1815 = vadd.f32 %v1629, %v1770
      %v1816 = vadd.f32 %v1630, %v1773
      %v1817 = vadd.f32 %v1631, %v1775
      %v1818 = vadd.f32 %v1632, %v1778
      %v1819 = vadd.f32 %v1633, %v1780
      %v1820 = vadd.f32 %v1634, %v1783
      %v1821 = vadd.f32 %v1635, %v1785
      %v1822 = vadd.f32 %v1636, %v1788
      %v1823 = vadd.f32 %v1637, %v1790
      %s1824 = scalar_lea.vmem %s1, 448
      %v1825 = vld [vmem:[%s1824] sm:$0xf]
      %v1826 = vld [vmem:[%s1824 + $0x4] sm:$0xf]
      %v1827 = vld [vmem:[%s1824 + $0x8] sm:$0xf]
      %v1828 = vld [vmem:[%s1824 + $0xc] sm:$0xf]
      %v1829 = vld [vmem:[%s1824 + $0x10] sm:$0xf]
      %v1830 = vld [vmem:[%s1824 + $0x14] sm:$0xf]
      %v1831 = vld [vmem:[%s1824 + $0x18] sm:$0xf]
      %v1832 = vld [vmem:[%s1824 + $0x1c] sm:$0xf]
      %v1833 = vld [vmem:[%s1824 + $0x20] sm:$0xf]
      %v1834 = vld [vmem:[%s1824 + $0x24] sm:$0xf]
      %v1835 = vld [vmem:[%s1824 + $0x28] sm:$0xf]
      %v1836 = vld [vmem:[%s1824 + $0x2c] sm:$0xf]
      %v1837 = vld [vmem:[%s1824 + $0x30] sm:$0xf]
      %v1838 = vld [vmem:[%s1824 + $0x34] sm:$0xf]
      %v1839 = vld [vmem:[%s1824 + $0x38] sm:$0xf]
      %v1840 = vld [vmem:[%s1824 + $0x3c] sm:$0xf]
      %v1857 = vunpack.c.l.b16 %v1825
      %v1858 = vunpack.c.l.b16 %v1826
      %v1859 = vunpack.c.l.b16 %v1827
      %v1860 = vunpack.c.l.b16 %v1828
      %v1861 = vunpack.c.l.b16 %v1829
      %v1862 = vunpack.c.l.b16 %v1830
      %v1863 = vunpack.c.l.b16 %v1831
      %v1864 = vunpack.c.l.b16 %v1832
      %v1865 = vunpack.c.l.b16 %v1833
      %v1866 = vunpack.c.l.b16 %v1834
      %v1867 = vunpack.c.l.b16 %v1835
      %v1868 = vunpack.c.l.b16 %v1836
      %v1869 = vunpack.c.l.b16 %v1837
      %v1870 = vunpack.c.l.b16 %v1838
      %v1871 = vunpack.c.l.b16 %v1839
      %v1872 = vunpack.c.l.b16 %v1840
      %v1873 = vpack.c.b16 %v1858, %v1857
      %v1874 = vpack.c.b16 %v1860, %v1859
      %v1875 = vpack.c.b16 %v1862, %v1861
      %v1876 = vpack.c.b16 %v1864, %v1863
      %v1877 = vpack.c.b16 %v1866, %v1865
      %v1878 = vpack.c.b16 %v1868, %v1867
      %v1879 = vpack.c.b16 %v1870, %v1869
      %v1880 = vpack.c.b16 %v1872, %v1871
      %1889 = vmatpush.bf16.msra.mxu0 %v1880
      %1890 = vmatpush.bf16.msra.mxu0 %v1879
      %1891 = vmatpush.bf16.msra.mxu0 %v1878
      %1892 = vmatpush.bf16.msra.mxu0 %v1877
      %1893 = vmatpush.bf16.msra.mxu0 %v1876
      %1894 = vmatpush.bf16.msra.mxu0 %v1875
      %1895 = vmatpush.bf16.msra.mxu0 %v1874
      %1896 = vmatpush.bf16.msra.mxu0 %v1873
      %1897 = vmatmul.bf16.gmra.mxu0 %v432
      %v1898 = vpop.f32.mrf.mxu0
      %v1899 = vadd.f32 0.0, %v1898
      %v1900 = vpop.f32.mrf.mxu0
      %v1901 = vadd.f32 0.0, %v1900
      %1902 = vmatmul.bf16.gmra.mxu0 %v433
      %v1903 = vpop.f32.mrf.mxu0
      %v1904 = vadd.f32 0.0, %v1903
      %v1905 = vpop.f32.mrf.mxu0
      %v1906 = vadd.f32 0.0, %v1905
      %1907 = vmatmul.bf16.gmra.mxu0 %v434
      %v1908 = vpop.f32.mrf.mxu0
      %v1909 = vadd.f32 0.0, %v1908
      %v1910 = vpop.f32.mrf.mxu0
      %v1911 = vadd.f32 0.0, %v1910
      %1912 = vmatmul.bf16.gmra.mxu0 %v435
      %v1913 = vpop.f32.mrf.mxu0
      %v1914 = vadd.f32 0.0, %v1913
      %v1915 = vpop.f32.mrf.mxu0
      %v1916 = vadd.f32 0.0, %v1915
      %1917 = vmatmul.bf16.gmra.mxu0 %v436
      %v1918 = vpop.f32.mrf.mxu0
      %v1919 = vadd.f32 0.0, %v1918
      %v1920 = vpop.f32.mrf.mxu0
      %v1921 = vadd.f32 0.0, %v1920
      %1922 = vmatmul.bf16.gmra.mxu0 %v437
      %v1923 = vpop.f32.mrf.mxu0
      %v1924 = vadd.f32 0.0, %v1923
      %v1925 = vpop.f32.mrf.mxu0
      %v1926 = vadd.f32 0.0, %v1925
      %1927 = vmatmul.bf16.gmra.mxu0 %v438
      %v1928 = vpop.f32.mrf.mxu0
      %v1929 = vadd.f32 0.0, %v1928
      %v1930 = vpop.f32.mrf.mxu0
      %v1931 = vadd.f32 0.0, %v1930
      %1932 = vmatmul.bf16.gmra.mxu0 %v439
      %v1933 = vpop.f32.mrf.mxu0
      %v1934 = vadd.f32 0.0, %v1933
      %v1935 = vpop.f32.mrf.mxu0
      %v1936 = vadd.f32 0.0, %v1935
      %1937 = vmatmul.bf16.gmra.mxu0 %v440
      %v1938 = vpop.f32.mrf.mxu0
      %v1939 = vadd.f32 0.0, %v1938
      %v1940 = vpop.f32.mrf.mxu0
      %v1941 = vadd.f32 0.0, %v1940
      %1942 = vmatmul.bf16.gmra.mxu0 %v441
      %v1943 = vpop.f32.mrf.mxu0
      %v1944 = vadd.f32 0.0, %v1943
      %v1945 = vpop.f32.mrf.mxu0
      %v1946 = vadd.f32 0.0, %v1945
      %1947 = vmatmul.bf16.gmra.mxu0 %v442
      %v1948 = vpop.f32.mrf.mxu0
      %v1949 = vadd.f32 0.0, %v1948
      %v1950 = vpop.f32.mrf.mxu0
      %v1951 = vadd.f32 0.0, %v1950
      %1952 = vmatmul.bf16.gmra.mxu0 %v443
      %v1953 = vpop.f32.mrf.mxu0
      %v1954 = vadd.f32 0.0, %v1953
      %v1955 = vpop.f32.mrf.mxu0
      %v1956 = vadd.f32 0.0, %v1955
      %1957 = vmatmul.bf16.gmra.mxu0 %v444
      %v1958 = vpop.f32.mrf.mxu0
      %v1959 = vadd.f32 0.0, %v1958
      %v1960 = vpop.f32.mrf.mxu0
      %v1961 = vadd.f32 0.0, %v1960
      %1962 = vmatmul.bf16.gmra.mxu0 %v445
      %v1963 = vpop.f32.mrf.mxu0
      %v1964 = vadd.f32 0.0, %v1963
      %v1965 = vpop.f32.mrf.mxu0
      %v1966 = vadd.f32 0.0, %v1965
      %1967 = vmatmul.bf16.gmra.mxu0 %v1257
      %v1968 = vpop.f32.mrf.mxu0
      %v1969 = vadd.f32 0.0, %v1968
      %v1970 = vpop.f32.mrf.mxu0
      %v1971 = vadd.f32 0.0, %v1970
      %1972 = vmatmul.bf16.gmra.mxu0 %v399
      %v1973 = vpop.f32.mrf.mxu0
      %v1974 = vadd.f32 0.0, %v1973
      %v1975 = vpop.f32.mrf.mxu0
      %v1976 = vadd.f32 0.0, %v1975
      %1977 = vdwg.mxu0
      %v1978 = vadd.f32 %v1792, %v1899
      %v1979 = vadd.f32 %v1793, %v1901
      %v1980 = vadd.f32 %v1794, %v1904
      %v1981 = vadd.f32 %v1795, %v1906
      %v1982 = vadd.f32 %v1796, %v1909
      %v1983 = vadd.f32 %v1797, %v1911
      %v1984 = vadd.f32 %v1798, %v1914
      %v1985 = vadd.f32 %v1799, %v1916
      %v1986 = vadd.f32 %v1800, %v1919
      %v1987 = vadd.f32 %v1801, %v1921
      %v1988 = vadd.f32 %v1802, %v1924
      %v1989 = vadd.f32 %v1803, %v1926
      %v1990 = vadd.f32 %v1804, %v1929
      %v1991 = vadd.f32 %v1805, %v1931
      %v1992 = vadd.f32 %v1806, %v1934
      %v1993 = vadd.f32 %v1807, %v1936
      %v1994 = vadd.f32 %v1808, %v1939
      %v1995 = vadd.f32 %v1809, %v1941
      %v1996 = vadd.f32 %v1810, %v1944
      %v1997 = vadd.f32 %v1811, %v1946
      %v1998 = vadd.f32 %v1812, %v1949
      %v1999 = vadd.f32 %v1813, %v1951
      %v2000 = vadd.f32 %v1814, %v1954
      %v2001 = vadd.f32 %v1815, %v1956
      %v2002 = vadd.f32 %v1816, %v1959
      %v2003 = vadd.f32 %v1817, %v1961
      %v2004 = vadd.f32 %v1818, %v1964
      %v2005 = vadd.f32 %v1819, %v1966
      %v2006 = vadd.f32 %v1820, %v1969
      %v2007 = vadd.f32 %v1821, %v1971
      %v2008 = vadd.f32 %v1822, %v1974
      %v2009 = vadd.f32 %v1823, %v1976
      %s2010 = scalar_lea.vmem %s1, 512
      %v2011 = vld [vmem:[%s2010] sm:$0xf]
      %v2012 = vld [vmem:[%s2010 + $0x4] sm:$0xf]
      %v2013 = vld [vmem:[%s2010 + $0x8] sm:$0xf]
      %v2014 = vld [vmem:[%s2010 + $0xc] sm:$0xf]
      %v2015 = vld [vmem:[%s2010 + $0x10] sm:$0xf]
      %v2016 = vld [vmem:[%s2010 + $0x14] sm:$0xf]
      %v2017 = vld [vmem:[%s2010 + $0x18] sm:$0xf]
      %v2018 = vld [vmem:[%s2010 + $0x1c] sm:$0xf]
      %v2019 = vld [vmem:[%s2010 + $0x20] sm:$0xf]
      %v2020 = vld [vmem:[%s2010 + $0x24] sm:$0xf]
      %v2021 = vld [vmem:[%s2010 + $0x28] sm:$0xf]
      %v2022 = vld [vmem:[%s2010 + $0x2c] sm:$0xf]
      %v2023 = vld [vmem:[%s2010 + $0x30] sm:$0xf]
      %v2024 = vld [vmem:[%s2010 + $0x34] sm:$0xf]
      %v2025 = vld [vmem:[%s2010 + $0x38] sm:$0xf]
      %v2026 = vld [vmem:[%s2010 + $0x3c] sm:$0xf]
      %v2043 = vunpack.c.l.b16 %v2011
      %v2044 = vunpack.c.l.b16 %v2012
      %v2045 = vunpack.c.l.b16 %v2013
      %v2046 = vunpack.c.l.b16 %v2014
      %v2047 = vunpack.c.l.b16 %v2015
      %v2048 = vunpack.c.l.b16 %v2016
      %v2049 = vunpack.c.l.b16 %v2017
      %v2050 = vunpack.c.l.b16 %v2018
      %v2051 = vunpack.c.l.b16 %v2019
      %v2052 = vunpack.c.l.b16 %v2020
      %v2053 = vunpack.c.l.b16 %v2021
      %v2054 = vunpack.c.l.b16 %v2022
      %v2055 = vunpack.c.l.b16 %v2023
      %v2056 = vunpack.c.l.b16 %v2024
      %v2057 = vunpack.c.l.b16 %v2025
      %v2058 = vunpack.c.l.b16 %v2026
      %v2059 = vpack.c.b16 %v2044, %v2043
      %v2060 = vpack.c.b16 %v2046, %v2045
      %v2061 = vpack.c.b16 %v2048, %v2047
      %v2062 = vpack.c.b16 %v2050, %v2049
      %v2063 = vpack.c.b16 %v2052, %v2051
      %v2064 = vpack.c.b16 %v2054, %v2053
      %v2065 = vpack.c.b16 %v2056, %v2055
      %v2066 = vpack.c.b16 %v2058, %v2057
      %2075 = vmatpush.bf16.msra.mxu0 %v2066
      %2076 = vmatpush.bf16.msra.mxu0 %v2065
      %2077 = vmatpush.bf16.msra.mxu0 %v2064
      %2078 = vmatpush.bf16.msra.mxu0 %v2063
      %2079 = vmatpush.bf16.msra.mxu0 %v2062
      %2080 = vmatpush.bf16.msra.mxu0 %v2061
      %2081 = vmatpush.bf16.msra.mxu0 %v2060
      %2082 = vmatpush.bf16.msra.mxu0 %v2059
      %2083 = vmatmul.bf16.gmra.mxu0 %v861
      %v2084 = vpop.f32.mrf.mxu0
      %v2085 = vadd.f32 0.0, %v2084
      %v2086 = vpop.f32.mrf.mxu0
      %v2087 = vadd.f32 0.0, %v2086
      %2088 = vmatmul.bf16.gmra.mxu0 %v862
      %v2089 = vpop.f32.mrf.mxu0
      %v2090 = vadd.f32 0.0, %v2089
      %v2091 = vpop.f32.mrf.mxu0
      %v2092 = vadd.f32 0.0, %v2091
      %2093 = vmatmul.bf16.gmra.mxu0 %v863
      %v2094 = vpop.f32.mrf.mxu0
      %v2095 = vadd.f32 0.0, %v2094
      %v2096 = vpop.f32.mrf.mxu0
      %v2097 = vadd.f32 0.0, %v2096
      %2098 = vmatmul.bf16.gmra.mxu0 %v864
      %v2099 = vpop.f32.mrf.mxu0
      %v2100 = vadd.f32 0.0, %v2099
      %v2101 = vpop.f32.mrf.mxu0
      %v2102 = vadd.f32 0.0, %v2101
      %2103 = vmatmul.bf16.gmra.mxu0 %v865
      %v2104 = vpop.f32.mrf.mxu0
      %v2105 = vadd.f32 0.0, %v2104
      %v2106 = vpop.f32.mrf.mxu0
      %v2107 = vadd.f32 0.0, %v2106
      %2108 = vmatmul.bf16.gmra.mxu0 %v866
      %v2109 = vpop.f32.mrf.mxu0
      %v2110 = vadd.f32 0.0, %v2109
      %v2111 = vpop.f32.mrf.mxu0
      %v2112 = vadd.f32 0.0, %v2111
      %2113 = vmatmul.bf16.gmra.mxu0 %v867
      %v2114 = vpop.f32.mrf.mxu0
      %v2115 = vadd.f32 0.0, %v2114
      %v2116 = vpop.f32.mrf.mxu0
      %v2117 = vadd.f32 0.0, %v2116
      %2118 = vmatmul.bf16.gmra.mxu0 %v868
      %v2119 = vpop.f32.mrf.mxu0
      %v2120 = vadd.f32 0.0, %v2119
      %v2121 = vpop.f32.mrf.mxu0
      %v2122 = vadd.f32 0.0, %v2121
      %2123 = vmatmul.bf16.gmra.mxu0 %v869
      %v2124 = vpop.f32.mrf.mxu0
      %v2125 = vadd.f32 0.0, %v2124
      %v2126 = vpop.f32.mrf.mxu0
      %v2127 = vadd.f32 0.0, %v2126
      %2128 = vmatmul.bf16.gmra.mxu0 %v870
      %v2129 = vpop.f32.mrf.mxu0
      %v2130 = vadd.f32 0.0, %v2129
      %v2131 = vpop.f32.mrf.mxu0
      %v2132 = vadd.f32 0.0, %v2131
      %2133 = vmatmul.bf16.gmra.mxu0 %v871
      %v2134 = vpop.f32.mrf.mxu0
      %v2135 = vadd.f32 0.0, %v2134
      %v2136 = vpop.f32.mrf.mxu0
      %v2137 = vadd.f32 0.0, %v2136
      %2138 = vmatmul.bf16.gmra.mxu0 %v872
      %v2139 = vpop.f32.mrf.mxu0
      %v2140 = vadd.f32 0.0, %v2139
      %v2141 = vpop.f32.mrf.mxu0
      %v2142 = vadd.f32 0.0, %v2141
      %2143 = vmatmul.bf16.gmra.mxu0 %v873
      %v2144 = vpop.f32.mrf.mxu0
      %v2145 = vadd.f32 0.0, %v2144
      %v2146 = vpop.f32.mrf.mxu0
      %v2147 = vadd.f32 0.0, %v2146
      %2148 = vmatmul.bf16.gmra.mxu0 %v874
      %v2149 = vpop.f32.mrf.mxu0
      %v2150 = vadd.f32 0.0, %v2149
      %v2151 = vpop.f32.mrf.mxu0
      %v2152 = vadd.f32 0.0, %v2151
      %2153 = vmatmul.bf16.gmra.mxu0 %v1451
      %v2154 = vpop.f32.mrf.mxu0
      %v2155 = vadd.f32 0.0, %v2154
      %v2156 = vpop.f32.mrf.mxu0
      %v2157 = vadd.f32 0.0, %v2156
      %2158 = vmatmul.bf16.gmra.mxu0 %v399
      %v2159 = vpop.f32.mrf.mxu0
      %v2160 = vadd.f32 0.0, %v2159
      %v2161 = vpop.f32.mrf.mxu0
      %v2162 = vadd.f32 0.0, %v2161
      %2163 = vdwg.mxu0
      %v2164 = vadd.f32 %v1978, %v2085
      %v2165 = vadd.f32 %v1979, %v2087
      %v2166 = vadd.f32 %v1980, %v2090
      %v2167 = vadd.f32 %v1981, %v2092
      %v2168 = vadd.f32 %v1982, %v2095
      %v2169 = vadd.f32 %v1983, %v2097
      %v2170 = vadd.f32 %v1984, %v2100
      %v2171 = vadd.f32 %v1985, %v2102
      %v2172 = vadd.f32 %v1986, %v2105
      %v2173 = vadd.f32 %v1987, %v2107
      %v2174 = vadd.f32 %v1988, %v2110
      %v2175 = vadd.f32 %v1989, %v2112
      %v2176 = vadd.f32 %v1990, %v2115
      %v2177 = vadd.f32 %v1991, %v2117
      %v2178 = vadd.f32 %v1992, %v2120
      %v2179 = vadd.f32 %v1993, %v2122
      %v2180 = vadd.f32 %v1994, %v2125
      %v2181 = vadd.f32 %v1995, %v2127
      %v2182 = vadd.f32 %v1996, %v2130
      %v2183 = vadd.f32 %v1997, %v2132
      %v2184 = vadd.f32 %v1998, %v2135
      %v2185 = vadd.f32 %v1999, %v2137
      %v2186 = vadd.f32 %v2000, %v2140
      %v2187 = vadd.f32 %v2001, %v2142
      %v2188 = vadd.f32 %v2002, %v2145
      %v2189 = vadd.f32 %v2003, %v2147
      %v2190 = vadd.f32 %v2004, %v2150
      %v2191 = vadd.f32 %v2005, %v2152
      %v2192 = vadd.f32 %v2006, %v2155
      %v2193 = vadd.f32 %v2007, %v2157
      %v2194 = vadd.f32 %v2008, %v2160
      %v2195 = vadd.f32 %v2009, %v2162
      %v2196 = vld [vmem:[%s2] sm:$0x1]
      %v2198 = vperm.slane %v2196, 0
      %v2200 = vadd.f32 %v2164, %v2198
      %v2201 = vadd.f32 %v2165, %v2198
      %v2202 = vadd.f32 %v2166, %v2198
      %v2203 = vadd.f32 %v2167, %v2198
      %v2204 = vadd.f32 %v2168, %v2198
      %v2205 = vadd.f32 %v2169, %v2198
      %v2206 = vadd.f32 %v2170, %v2198
      %v2207 = vadd.f32 %v2171, %v2198
      %v2208 = vadd.f32 %v2172, %v2198
      %v2209 = vadd.f32 %v2173, %v2198
      %v2210 = vadd.f32 %v2174, %v2198
      %v2211 = vadd.f32 %v2175, %v2198
      %v2212 = vadd.f32 %v2176, %v2198
      %v2213 = vadd.f32 %v2177, %v2198
      %v2214 = vadd.f32 %v2178, %v2198
      %v2215 = vadd.f32 %v2179, %v2198
      %v2216 = vadd.f32 %v2180, %v2198
      %v2217 = vadd.f32 %v2181, %v2198
      %v2218 = vadd.f32 %v2182, %v2198
      %v2219 = vadd.f32 %v2183, %v2198
      %v2220 = vadd.f32 %v2184, %v2198
      %v2221 = vadd.f32 %v2185, %v2198
      %v2222 = vadd.f32 %v2186, %v2198
      %v2223 = vadd.f32 %v2187, %v2198
      %v2224 = vadd.f32 %v2188, %v2198
      %v2225 = vadd.f32 %v2189, %v2198
      %v2226 = vadd.f32 %v2190, %v2198
      %v2227 = vadd.f32 %v2191, %v2198
      %v2228 = vadd.f32 %v2192, %v2198
      %v2229 = vadd.f32 %v2193, %v2198
      %v2230 = vadd.f32 %v2194, %v2198
      %v2231 = vadd.f32 %v2195, %v2198
      %v2232 = vpack.c.bf16 %v2200, %v2200
      %v2233 = vpack.c.bf16 %v2201, %v2201
      %v2234 = vpack.c.bf16 %v2202, %v2202
      %v2235 = vpack.c.bf16 %v2203, %v2203
      %v2236 = vpack.c.bf16 %v2204, %v2204
      %v2237 = vpack.c.bf16 %v2205, %v2205
      %v2238 = vpack.c.bf16 %v2206, %v2206
      %v2239 = vpack.c.bf16 %v2207, %v2207
      %v2240 = vpack.c.bf16 %v2208, %v2208
      %v2241 = vpack.c.bf16 %v2209, %v2209
      %v2242 = vpack.c.bf16 %v2210, %v2210
      %v2243 = vpack.c.bf16 %v2211, %v2211
      %v2244 = vpack.c.bf16 %v2212, %v2212
      %v2245 = vpack.c.bf16 %v2213, %v2213
      %v2246 = vpack.c.bf16 %v2214, %v2214
      %v2247 = vpack.c.bf16 %v2215, %v2215
      %v2248 = vpack.c.bf16 %v2216, %v2216
      %v2249 = vpack.c.bf16 %v2217, %v2217
      %v2250 = vpack.c.bf16 %v2218, %v2218
      %v2251 = vpack.c.bf16 %v2219, %v2219
      %v2252 = vpack.c.bf16 %v2220, %v2220
      %v2253 = vpack.c.bf16 %v2221, %v2221
      %v2254 = vpack.c.bf16 %v2222, %v2222
      %v2255 = vpack.c.bf16 %v2223, %v2223
      %v2256 = vpack.c.bf16 %v2224, %v2224
      %v2257 = vpack.c.bf16 %v2225, %v2225
      %v2258 = vpack.c.bf16 %v2226, %v2226
      %v2259 = vpack.c.bf16 %v2227, %v2227
      %v2260 = vpack.c.bf16 %v2228, %v2228
      %v2261 = vpack.c.bf16 %v2229, %v2229
      %v2262 = vpack.c.bf16 %v2230, %v2230
      %v2263 = vpack.c.bf16 %v2231, %v2231
      %2264 = vst [vmem:[%s204] sm:$0xf] %v2232
      %2265 = vst [vmem:[%s204 + $0x4] sm:$0xf] %v2233
      %2266 = vst [vmem:[%s204 + $0x8] sm:$0xf] %v2234
      %2267 = vst [vmem:[%s204 + $0xc] sm:$0xf] %v2235
      %2268 = vst [vmem:[%s204 + $0x10] sm:$0xf] %v2236
      %2269 = vst [vmem:[%s204 + $0x14] sm:$0xf] %v2237
      %2270 = vst [vmem:[%s204 + $0x18] sm:$0xf] %v2238
      %2271 = vst [vmem:[%s204 + $0x1c] sm:$0xf] %v2239
      %2272 = vst [vmem:[%s204 + $0x20] sm:$0xf] %v2240
      %2273 = vst [vmem:[%s204 + $0x24] sm:$0xf] %v2241
      %2274 = vst [vmem:[%s204 + $0x28] sm:$0xf] %v2242
      %2275 = vst [vmem:[%s204 + $0x2c] sm:$0xf] %v2243
      %2276 = vst [vmem:[%s204 + $0x30] sm:$0xf] %v2244
      %2277 = vst [vmem:[%s204 + $0x34] sm:$0xf] %v2245
      %2278 = vst [vmem:[%s204 + $0x38] sm:$0xf] %v2246
      %2279 = vst [vmem:[%s204 + $0x3c] sm:$0xf] %v2247
      %2280 = vst [vmem:[%s204 + $0x40] sm:$0xf] %v2248
      %2281 = vst [vmem:[%s204 + $0x44] sm:$0xf] %v2249
      %2282 = vst [vmem:[%s204 + $0x48] sm:$0xf] %v2250
      %2283 = vst [vmem:[%s204 + $0x4c] sm:$0xf] %v2251
      %2284 = vst [vmem:[%s204 + $0x50] sm:$0xf] %v2252
      %2285 = vst [vmem:[%s204 + $0x54] sm:$0xf] %v2253
      %2286 = vst [vmem:[%s204 + $0x58] sm:$0xf] %v2254
      %2287 = vst [vmem:[%s204 + $0x5c] sm:$0xf] %v2255
      %2288 = vst [vmem:[%s204 + $0x60] sm:$0xf] %v2256
      %2289 = vst [vmem:[%s204 + $0x64] sm:$0xf] %v2257
      %2290 = vst [vmem:[%s204 + $0x68] sm:$0xf] %v2258
      %2291 = vst [vmem:[%s204 + $0x6c] sm:$0xf] %v2259
      %2292 = vst [vmem:[%s204 + $0x70] sm:$0xf] %v2260
      %2293 = vst [vmem:[%s204 + $0x74] sm:$0xf] %v2261
      %2294 = vst [vmem:[%s204 + $0x78] sm:$0xf] %v2262
      %2295 = vst [vmem:[%s204 + $0x7c] sm:$0xf] %v2263
      %v2296 = vadd.f32 %v2200, %v2201
      %v2297 = vadd.f32 %v2296, %v2202
      %v2298 = vadd.f32 %v2297, %v2203
      %v2299 = vadd.f32 %v2298, %v2204
      %v2300 = vadd.f32 %v2299, %v2205
      %v2301 = vadd.f32 %v2300, %v2206
      %v2302 = vadd.f32 %v2301, %v2207
      %v2303 = vadd.f32 %v2302, %v2208
      %v2304 = vadd.f32 %v2303, %v2209
      %v2305 = vadd.f32 %v2304, %v2210
      %v2306 = vadd.f32 %v2305, %v2211
      %v2307 = vadd.f32 %v2306, %v2212
      %v2308 = vadd.f32 %v2307, %v2213
      %v2309 = vadd.f32 %v2308, %v2214
      %v2310 = vadd.f32 %v2309, %v2215
      %v2311 = vadd.f32 %v2310, %v2216
      %v2312 = vadd.f32 %v2311, %v2217
      %v2313 = vadd.f32 %v2312, %v2218
      %v2314 = vadd.f32 %v2313, %v2219
      %v2315 = vadd.f32 %v2314, %v2220
      %v2316 = vadd.f32 %v2315, %v2221
      %v2317 = vadd.f32 %v2316, %v2222
      %v2318 = vadd.f32 %v2317, %v2223
      %v2319 = vadd.f32 %v2318, %v2224
      %v2320 = vadd.f32 %v2319, %v2225
      %v2321 = vadd.f32 %v2320, %v2226
      %v2322 = vadd.f32 %v2321, %v2227
      %v2323 = vadd.f32 %v2322, %v2228
      %v2324 = vadd.f32 %v2323, %v2229
      %v2325 = vadd.f32 %v2324, %v2230
      %v2326 = vadd.f32 %v2325, %v2231
      %v2327 = vrot.slane %v2326, 4
      %v2328 = vadd.f32 %v2326, %v2327
      %v2329 = vrot.slane %v2328, 2
      %v2330 = vadd.f32 %v2328, %v2329
      %v2331 = vrot.slane %v2330, 1
      %v2332 = vadd.f32 %v2330, %v2331
      %v2333 = vmul.f32 %v2332, 0.00390625
      %v2334 = vsub.f32 %v2200, %v2333
      %v2335 = vsub.f32 %v2201, %v2333
      %v2336 = vsub.f32 %v2202, %v2333
      %v2337 = vsub.f32 %v2203, %v2333
      %v2338 = vsub.f32 %v2204, %v2333
      %v2339 = vsub.f32 %v2205, %v2333
      %v2340 = vsub.f32 %v2206, %v2333
      %v2341 = vsub.f32 %v2207, %v2333
      %v2342 = vsub.f32 %v2208, %v2333
      %v2343 = vsub.f32 %v2209, %v2333
      %v2344 = vsub.f32 %v2210, %v2333
      %v2345 = vsub.f32 %v2211, %v2333
      %v2346 = vsub.f32 %v2212, %v2333
      %v2347 = vsub.f32 %v2213, %v2333
      %v2348 = vsub.f32 %v2214, %v2333
      %v2349 = vsub.f32 %v2215, %v2333
      %v2350 = vsub.f32 %v2216, %v2333
      %v2351 = vsub.f32 %v2217, %v2333
      %v2352 = vsub.f32 %v2218, %v2333
      %v2353 = vsub.f32 %v2219, %v2333
      %v2354 = vsub.f32 %v2220, %v2333
      %v2355 = vsub.f32 %v2221, %v2333
      %v2356 = vsub.f32 %v2222, %v2333
      %v2357 = vsub.f32 %v2223, %v2333
      %v2358 = vsub.f32 %v2224, %v2333
      %v2359 = vsub.f32 %v2225, %v2333
      %v2360 = vsub.f32 %v2226, %v2333
      %v2361 = vsub.f32 %v2227, %v2333
      %v2362 = vsub.f32 %v2228, %v2333
      %v2363 = vsub.f32 %v2229, %v2333
      %v2364 = vsub.f32 %v2230, %v2333
      %v2365 = vsub.f32 %v2231, %v2333
      %v2366 = vmul.f32 %v2334, %v2334
      %v2367 = vmul.f32 %v2335, %v2335
      %v2368 = vmul.f32 %v2336, %v2336
      %v2369 = vmul.f32 %v2337, %v2337
      %v2370 = vmul.f32 %v2338, %v2338
      %v2371 = vmul.f32 %v2339, %v2339
      %v2372 = vmul.f32 %v2340, %v2340
      %v2373 = vmul.f32 %v2341, %v2341
      %v2374 = vmul.f32 %v2342, %v2342
      %v2375 = vmul.f32 %v2343, %v2343
      %v2376 = vmul.f32 %v2344, %v2344
      %v2377 = vmul.f32 %v2345, %v2345
      %v2378 = vmul.f32 %v2346, %v2346
      %v2379 = vmul.f32 %v2347, %v2347
      %v2380 = vmul.f32 %v2348, %v2348
      %v2381 = vmul.f32 %v2349, %v2349
      %v2382 = vmul.f32 %v2350, %v2350
      %v2383 = vmul.f32 %v2351, %v2351
      %v2384 = vmul.f32 %v2352, %v2352
      %v2385 = vmul.f32 %v2353, %v2353
      %v2386 = vmul.f32 %v2354, %v2354
      %v2387 = vmul.f32 %v2355, %v2355
      %v2388 = vmul.f32 %v2356, %v2356
      %v2389 = vmul.f32 %v2357, %v2357
      %v2390 = vmul.f32 %v2358, %v2358
      %v2391 = vmul.f32 %v2359, %v2359
      %v2392 = vmul.f32 %v2360, %v2360
      %v2393 = vmul.f32 %v2361, %v2361
      %v2394 = vmul.f32 %v2362, %v2362
      %v2395 = vmul.f32 %v2363, %v2363
      %v2396 = vmul.f32 %v2364, %v2364
      %v2397 = vmul.f32 %v2365, %v2365
      %v2398 = vadd.f32 %v2366, %v2367
      %v2399 = vadd.f32 %v2398, %v2368
      %v2400 = vadd.f32 %v2399, %v2369
      %v2401 = vadd.f32 %v2400, %v2370
      %v2402 = vadd.f32 %v2401, %v2371
      %v2403 = vadd.f32 %v2402, %v2372
      %v2404 = vadd.f32 %v2403, %v2373
      %v2405 = vadd.f32 %v2404, %v2374
      %v2406 = vadd.f32 %v2405, %v2375
      %v2407 = vadd.f32 %v2406, %v2376
      %v2408 = vadd.f32 %v2407, %v2377
      %v2409 = vadd.f32 %v2408, %v2378
      %v2410 = vadd.f32 %v2409, %v2379
      %v2411 = vadd.f32 %v2410, %v2380
      %v2412 = vadd.f32 %v2411, %v2381
      %v2413 = vadd.f32 %v2412, %v2382
      %v2414 = vadd.f32 %v2413, %v2383
      %v2415 = vadd.f32 %v2414, %v2384
      %v2416 = vadd.f32 %v2415, %v2385
      %v2417 = vadd.f32 %v2416, %v2386
      %v2418 = vadd.f32 %v2417, %v2387
      %v2419 = vadd.f32 %v2418, %v2388
      %v2420 = vadd.f32 %v2419, %v2389
      %v2421 = vadd.f32 %v2420, %v2390
      %v2422 = vadd.f32 %v2421, %v2391
      %v2423 = vadd.f32 %v2422, %v2392
      %v2424 = vadd.f32 %v2423, %v2393
      %v2425 = vadd.f32 %v2424, %v2394
      %v2426 = vadd.f32 %v2425, %v2395
      %v2427 = vadd.f32 %v2426, %v2396
      %v2428 = vadd.f32 %v2427, %v2397
      %v2429 = vrot.slane %v2428, 4
      %v2430 = vadd.f32 %v2428, %v2429
      %v2431 = vrot.slane %v2430, 2
      %v2432 = vadd.f32 %v2430, %v2431
      %v2433 = vrot.slane %v2432, 1
      %v2434 = vadd.f32 %v2432, %v2433
      %v2435 = vsel %vm278, %v2332, %v2434
      %vm2436 = vcmask 1041408
      %v2437 = vsel %vm2436, %v2435, 0.0
      %2438 = vst [vmem:[%s208] sm:$0xff] %v2437
      %p2439 = scmp.lt.s32.totalorder %s16, 1
      %s2440 = scalar_select %p2439, %s16, 1
      %s2441 = smul.addr %s2440, 32
      %s2442 = smul.addr %s2441, 4
      %s2443 = scalar_lea.vmem %s3, %s2442
      %p2444 = scmp.lt.s32.totalorder %s16, 1
      %s2445 = scalar_select %p2444, %s16, 1
      %s2446 = smul.addr %s2445, 8
      %s2447 = scalar_lea.vmem %s4, %s2446
      // Predicated region
      $region33: #{residual_block.3} parent=31 // pred_check
        %p2448 = pneg %p102
      $region34: #{residual_block.3} parent=31 // pred_check_branch
        %2450 = sbr.rel (%p2448) target = $region36
      $region35: #{residual_block.3} parent=31 // pred_region
        _
      $region36: #{residual_block.3} parent=31 // pred_fallthru
        _
      // Predicated region
      $region37: #{residual_block.3} parent=31 // pred_check
        %p2451 = pneg %p128
      $region38: #{residual_block.3} parent=31 // pred_check_branch
        %2453 = sbr.rel (%p2451) target = $region40
      $region39: #{residual_block.3} parent=31 // pred_region
        _
      $region40: #{residual_block.3} parent=31 // pred_fallthru
        _
    $region32: #{residual_block.3} parent=5 // pred_fallthru
      _
    %p2454 = scmp.le.s32.totalorder 2, %s11
    // Predicated region
    $region41: #{residual_block.3} parent=5 // pred_check
      %p2455 = pneg %p2454
    $region42: #{residual_block.3} parent=5 // pred_check_branch
      %2457 = sbr.rel (%p2455) target = $region44
    $region43: #{residual_block.3} parent=5 // pred_region
      %s2458 = ssub.s32 %s11, 2
      // Predicated region
      $region45: #{residual_block.3} parent=43 // pred_check
        %p2459 = pneg %p108
      $region46: #{residual_block.3} parent=43 // pred_check_branch
        %2461 = sbr.rel (%p2459) target = $region48
      $region47: #{residual_block.3} parent=43 // pred_region
        %p2462 = scmp.lt.s32.totalorder %s17, 1
        %s2463 = scalar_select %p2462, %s17, 1
        %s2464 = smul.addr %s2463, 32
        %s2465 = smul.addr %s2464, 4
        %s2466 = scalar_lea.vmem %s3, %s2465
      $region48: #{residual_block.3} parent=43 // pred_fallthru
        _
      // Predicated region
      $region49: #{residual_block.3} parent=43 // pred_check
        %p2467 = pneg %p134
      $region50: #{residual_block.3} parent=43 // pred_check_branch
        %2469 = sbr.rel (%p2467) target = $region52
      $region51: #{residual_block.3} parent=43 // pred_region
        %p2470 = scmp.lt.s32.totalorder %s17, 1
        %s2471 = scalar_select %p2470, %s17, 1
        %s2472 = smul.addr %s2471, 8
        %s2473 = scalar_lea.vmem %s4, %s2472
      $region52: #{residual_block.3} parent=43 // pred_fallthru
        _
    $region44: #{residual_block.3} parent=5 // pred_fallthru
      _
  $region6: #{residual_block.3} parent=0 // loop_footer
    %s15 = sadd.s32 1, %s11
  $region7: #{residual_block.3} parent=0 // loop_footer_branch
    %10 = sbr.rel target = $region3
  $region8: #{residual_block.3} parent=0 // loop_exit
    _

// kernel: residual_block.4
$region0: #{residual_block.4}
  #allocation0 [shape = 'u32[]', space=smem, size = 0x4, offset = 0x4, fixed_abs, tag = 'smem constant byte address 0x4 - core index']
  #allocation1 [shape = 'u32[72,128]{1,0:T(1,128)}', space=vmem, size = 0x9000, scoped, tag = 'internal scratch']
  %s0 = inlined_call_operand.vmem [shape: bf16[2,16,16,128], index: 0, kind: input, shape index: {}]
  %s1 = inlined_call_operand.vmem [shape: f32[1,128], index: 1, kind: input, shape index: {}]
  %s2 = inlined_call_operand.vmem [shape: f32[1,128], index: 2, kind: input, shape index: {}]
  %s3 = inlined_call_operand.vmem [shape: bf16[9,128,128], index: 3, kind: input, shape index: {}]
  %s4 = inlined_call_operand.vmem [shape: f32[1,128], index: 4, kind: input, shape index: {}]
  %s5 = inlined_call_operand.vmem [shape: bf16[2,16,16,128], index: 5, kind: output, shape index: {0}]
  %s6 = inlined_call_operand.vmem [shape: f32[2,8,128], index: 6, kind: output, shape index: {1}]
  %7 = xla_tuple %s5, %s6
  %s8 = sld [smem:[#allocation0]]
  $region61: #{residual_block.4} parent=0
    _
  %s10 = ssub.s32 1, %s8
  %s11 = scalar_select 0, %s10, %s8
  loop: start=0, step=1, limit=4
  $region2: #{residual_block.4} parent=0 // loop_pre_header
    _
  $region3: #{residual_block.4} parent=0 // loop_header
    %s13 = sphi 0, %s17
    %p14 = scmp.ge.s32.totalorder %s13, 4
    %s23 = sphi 0, %s25
    %s26 = sphi 0, %s23
    %s27 = sphi 0, %s26
    %s43 = sphi 0, %s27
    %s47 = sphi 0, %s47
    %s49 = sphi 0, %s47
    %s50 = sphi 0, %s49
    %s64 = sphi 0, %s50
    %s68 = sphi 0, %s68
    %s70 = sphi 0, %s68
    %s71 = sphi 0, %s70
    %s85 = sphi 0, %s71
    %s89 = sphi 0, %s89
    %s91 = sphi 0, %s89
    %s92 = sphi 0, %s91
    %s106 = sphi 0, %s92
    %s110 = sphi 0, %s110
    %s112 = sphi 0, %s110
    %s113 = sphi 0, %s112
    %s127 = sphi 0, %s113
    %s133 = sphi 0, %s135
    %s136 = sphi 0, %s133
    %s137 = sphi 0, %s136
    %s153 = sphi 0, %s137
    %s159 = sphi 0, %s161
    %s162 = sphi 0, %s159
    %s163 = sphi 0, %s162
    %s179 = sphi 0, %s163
  $region4: #{residual_block.4} parent=0 // loop_header_branch
    %16 = sbr.rel (%p14) target = $region8
  $region5: #{residual_block.4} parent=0 // loop_body
    %s18 = ssub.s32 %s13, 1
    %s19 = ssub.s32 %s13, 2
    %s20 = sadd.s32 %s13, 1
    %s21 = ssub.s32 %s13, %s20
    %p22 = scmp.eq.s32.totalorder %s21, 0
    %s24 = sadd.s32 %s23, 1
    %s25 = scalar_select %p22, %s23, %s24
    %p28 = pneg %p22
    %p29 = scmp.eq.s32.totalorder %s13, 1
    %p30 = por %p28, %p29
    %p31 = scmp.ne.s32.totalorder %s23, %s26
    %p32 = scmp.eq.s32.totalorder %s13, 0
    %p33 = por %p31, %p32
    %p34 = scmp.ne.s32.totalorder %s23, %s26
    %p35 = scmp.eq.s32.totalorder %s18, 1
    %p36 = por %p34, %p35
    %p37 = scmp.ne.s32.totalorder %s26, %s27
    %p38 = scmp.eq.s32.totalorder %s18, 0
    %p39 = por %p37, %p38
    %p40 = scmp.ne.s32.totalorder %s26, %s27
    %p41 = scmp.eq.s32.totalorder %s19, 1
    %p42 = por %p40, %p41
    %p44 = scmp.ne.s32.totalorder %s27, %s43
    %p45 = scmp.eq.s32.totalorder %s19, 0
    %p46 = por %p44, %p45
    %s48 = sadd.s32 %s47, 1
    %p51 = scmp.eq.s32.totalorder %s13, 1
    %p52 = scmp.ne.s32.totalorder %s47, %s49
    %p53 = scmp.eq.s32.totalorder %s13, 0
    %p54 = por %p52, %p53
    %p55 = scmp.ne.s32.totalorder %s47, %s49
    %p56 = scmp.eq.s32.totalorder %s18, 1
    %p57 = por %p55, %p56
    %p58 = scmp.ne.s32.totalorder %s49, %s50
    %p59 = scmp.eq.s32.totalorder %s18, 0
    %p60 = por %p58, %p59
    %p61 = scmp.ne.s32.totalorder %s49, %s50
    %p62 = scmp.eq.s32.totalorder %s19, 1
    %p63 = por %p61, %p62
    %p65 = scmp.ne.s32.totalorder %s50, %s64
    %p66 = scmp.eq.s32.totalorder %s19, 0
    %p67 = por %p65, %p66
    %s69 = sadd.s32 %s68, 1
    %p72 = scmp.eq.s32.totalorder %s13, 1
    %p73 = scmp.ne.s32.totalorder %s68, %s70
    %p74 = scmp.eq.s32.totalorder %s13, 0
    %p75 = por %p73, %p74
    %p76 = scmp.ne.s32.totalorder %s68, %s70
    %p77 = scmp.eq.s32.totalorder %s18, 1
    %p78 = por %p76, %p77
    %p79 = scmp.ne.s32.totalorder %s70, %s71
    %p80 = scmp.eq.s32.totalorder %s18, 0
    %p81 = por %p79, %p80
    %p82 = scmp.ne.s32.totalorder %s70, %s71
    %p83 = scmp.eq.s32.totalorder %s19, 1
    %p84 = por %p82, %p83
    %p86 = scmp.ne.s32.totalorder %s71, %s85
    %p87 = scmp.eq.s32.totalorder %s19, 0
    %p88 = por %p86, %p87
    %s90 = sadd.s32 %s89, 1
    %p93 = scmp.eq.s32.totalorder %s13, 1
    %p94 = scmp.ne.s32.totalorder %s89, %s91
    %p95 = scmp.eq.s32.totalorder %s13, 0
    %p96 = por %p94, %p95
    %p97 = scmp.ne.s32.totalorder %s89, %s91
    %p98 = scmp.eq.s32.totalorder %s18, 1
    %p99 = por %p97, %p98
    %p100 = scmp.ne.s32.totalorder %s91, %s92
    %p101 = scmp.eq.s32.totalorder %s18, 0
    %p102 = por %p100, %p101
    %p103 = scmp.ne.s32.totalorder %s91, %s92
    %p104 = scmp.eq.s32.totalorder %s19, 1
    %p105 = por %p103, %p104
    %p107 = scmp.ne.s32.totalorder %s92, %s106
    %p108 = scmp.eq.s32.totalorder %s19, 0
    %p109 = por %p107, %p108
    %s111 = sadd.s32 %s110, 1
    %p114 = scmp.eq.s32.totalorder %s13, 1
    %p115 = scmp.ne.s32.totalorder %s110, %s112
    %p116 = scmp.eq.s32.totalorder %s13, 0
    %p117 = por %p115, %p116
    %p118 = scmp.ne.s32.totalorder %s110, %s112
    %p119 = scmp.eq.s32.totalorder %s18, 1
    %p120 = por %p118, %p119
    %p121 = scmp.ne.s32.totalorder %s112, %s113
    %p122 = scmp.eq.s32.totalorder %s18, 0
    %p123 = por %p121, %p122
    %p124 = scmp.ne.s32.totalorder %s112, %s113
    %p125 = scmp.eq.s32.totalorder %s19, 1
    %p126 = por %p124, %p125
    %p128 = scmp.ne.s32.totalorder %s113, %s127
    %p129 = scmp.eq.s32.totalorder %s19, 0
    %p130 = por %p128, %p129
    %s131 = ssub.s32 %s13, %s20
    %p132 = scmp.eq.s32.totalorder %s131, 0
    %s134 = sadd.s32 %s133, 1
    %s135 = scalar_select %p132, %s133, %s134
    %p138 = pneg %p132
    %p139 = scmp.eq.s32.totalorder %s13, 1
    %p140 = por %p138, %p139
    %p141 = scmp.ne.s32.totalorder %s133, %s136
    %p142 = scmp.eq.s32.totalorder %s13, 0
    %p143 = por %p141, %p142
    %p144 = scmp.ne.s32.totalorder %s133, %s136
    %p145 = scmp.eq.s32.totalorder %s18, 1
    %p146 = por %p144, %p145
    %p147 = scmp.ne.s32.totalorder %s136, %s137
    %p148 = scmp.eq.s32.totalorder %s18, 0
    %p149 = por %p147, %p148
    %p150 = scmp.ne.s32.totalorder %s136, %s137
    %p151 = scmp.eq.s32.totalorder %s19, 1
    %p152 = por %p150, %p151
    %p154 = scmp.ne.s32.totalorder %s137, %s153
    %p155 = scmp.eq.s32.totalorder %s19, 0
    %p156 = por %p154, %p155
    %s157 = ssub.s32 %s13, %s20
    %p158 = scmp.eq.s32.totalorder %s157, 0
    %s160 = sadd.s32 %s159, 1
    %s161 = scalar_select %p158, %s159, %s160
    %p164 = pneg %p158
    %p165 = scmp.eq.s32.totalorder %s13, 1
    %p166 = por %p164, %p165
    %p167 = scmp.ne.s32.totalorder %s159, %s162
    %p168 = scmp.eq.s32.totalorder %s13, 0
    %p169 = por %p167, %p168
    %p170 = scmp.ne.s32.totalorder %s159, %s162
    %p171 = scmp.eq.s32.totalorder %s18, 1
    %p172 = por %p170, %p171
    %p173 = scmp.ne.s32.totalorder %s162, %s163
    %p174 = scmp.eq.s32.totalorder %s18, 0
    %p175 = por %p173, %p174
    %p176 = scmp.ne.s32.totalorder %s162, %s163
    %p177 = scmp.eq.s32.totalorder %s19, 1
    %p178 = por %p176, %p177
    %p180 = scmp.ne.s32.totalorder %s163, %s179
    %p181 = scmp.eq.s32.totalorder %s19, 0
    %p182 = por %p180, %p181
    %p183 = scmp.le.s32.totalorder 1, %s13
    %p184 = scmp.lt.s32.totalorder %s13, 3
    %p185 = pnand %p183, %p184
    %p186 = pneg %p185
    // Predicated region
    $region9: #{residual_block.4} parent=5 // pred_check
      _
    $region10: #{residual_block.4} parent=5 // pred_check_branch
      %188 = sbr.rel (%p185) target = $region12
    $region11: #{residual_block.4} parent=5 // pred_region
      %s189 = ssub.s32 %s13, 1
      // Predicated region
      $region13: #{residual_block.4} parent=11 // pred_check
        %p190 = pneg %p60
      $region14: #{residual_block.4} parent=11 // pred_check_branch
        %192 = sbr.rel (%p190) target = $region16
      $region15: #{residual_block.4} parent=11 // pred_region
        _
      $region16: #{residual_block.4} parent=11 // pred_fallthru
        _
      // Predicated region
      $region17: #{residual_block.4} parent=11 // pred_check
        %p193 = pneg %p81
      $region18: #{residual_block.4} parent=11 // pred_check_branch
        %195 = sbr.rel (%p193) target = $region20
      $region19: #{residual_block.4} parent=11 // pred_region
        _
      $region20: #{residual_block.4} parent=11 // pred_fallthru
        _
      // Predicated region
      $region21: #{residual_block.4} parent=11 // pred_check
        %p196 = pneg %p102
      $region22: #{residual_block.4} parent=11 // pred_check_branch
        %198 = sbr.rel (%p196) target = $region24
      $region23: #{residual_block.4} parent=11 // pred_region
        _
      $region24: #{residual_block.4} parent=11 // pred_fallthru
        _
      // Predicated region
      $region25: #{residual_block.4} parent=11 // pred_check
        %p199 = pneg %p123
      $region26: #{residual_block.4} parent=11 // pred_check_branch
        %201 = sbr.rel (%p199) target = $region28
      $region27: #{residual_block.4} parent=11 // pred_region
        _
      $region28: #{residual_block.4} parent=11 // pred_fallthru
        _
    $region12: #{residual_block.4} parent=5 // pred_fallthru
      _
    %p202 = scmp.lt.s32.totalorder %s13, 2
    // Predicated region
    $region29: #{residual_block.4} parent=5 // pred_check
      %p203 = pneg %p202
    $region30: #{residual_block.4} parent=5 // pred_check_branch
      %205 = sbr.rel (%p203) target = $region32
    $region31: #{residual_block.4} parent=5 // pred_region
      // Predicated region
      $region33: #{residual_block.4} parent=31 // pred_check
        %p206 = pneg %p33
      $region34: #{residual_block.4} parent=31 // pred_check_branch
        %208 = sbr.rel (%p206) target = $region36
      $region35: #{residual_block.4} parent=31 // pred_region
        %p209 = scmp.lt.s32.totalorder %s13, 1
        %s210 = scalar_select %p209, %s13, 1
        %s211 = smul.addr %s210, 32
        %s212 = smul.addr %s211, 4
        %s213 = scalar_lea.vmem %s0, %s212
      $region36: #{residual_block.4} parent=31 // pred_fallthru
        _
    $region32: #{residual_block.4} parent=5 // pred_fallthru
      _
    %p214 = scmp.le.s32.totalorder 1, %s13
    %p215 = scmp.lt.s32.totalorder %s13, 3
    %p216 = pnand %p214, %p215
    %p217 = pneg %p216
    // Predicated region
    $region37: #{residual_block.4} parent=5 // pred_check
      _
    $region38: #{residual_block.4} parent=5 // pred_check_branch
      %219 = sbr.rel (%p216) target = $region40
    $region39: #{residual_block.4} parent=5 // pred_region
      %s220 = ssub.s32 %s13, 1
      %p221 = scmp.lt.s32.totalorder %s18, 1
      %s222 = scalar_select %p221, %s18, 1
      %s223 = smul.addr %s222, 32
      %s224 = smul.addr %s223, 4
      %s225 = scalar_lea.vmem %s0, %s224
      %p226 = pneg %p39
      %p227 = pneg %p36
      %p228 = pneg %p60
      %p229 = pneg %p57
      %p230 = pneg %p81
      %p231 = pneg %p78
      %p232 = pneg %p102
      %p233 = pneg %p99
      %p234 = pneg %p123
      %p235 = pneg %p120
      %p236 = pneg %p149
      %p237 = pneg %p146
      %p238 = scmp.lt.s32.totalorder %s18, 1
      %s239 = scalar_select %p238, %s18, 1
      %s240 = smul.addr %s239, 32
      %s241 = smul.addr %s240, 4
      %s242 = scalar_lea.vmem %s5, %s241
      %p243 = pneg %p175
      %p244 = pneg %p172
      %p245 = scmp.lt.s32.totalorder %s18, 1
      %s246 = scalar_select %p245, %s18, 1
      %s247 = smul.addr %s246, 8
      %s248 = scalar_lea.vmem %s6, %s247
      %p249 = scmp.lt.s32.totalorder %s18, 1
      %s250 = scalar_select %p249, %s18, 1
      %s251 = smul.addr %s250, 32
      %s252 = smul.addr %s251, 4
      %s253 = scalar_lea.vmem %s0, %s252
      %p254 = scmp.lt.s32.totalorder %s18, 1
      %s255 = scalar_select %p254, %s18, 1
      %s256 = smul.addr %s255, 32
      %s257 = smul.addr %s256, 4
      %s258 = scalar_lea.vmem %s5, %s257
      %p259 = scmp.lt.s32.totalorder %s18, 1
      %s260 = scalar_select %p259, %s18, 1
      %s261 = smul.addr %s260, 8
      %s262 = scalar_lea.vmem %s6, %s261
      %v263 = vld [vmem:[%s253] sm:$0xf]
      %v264 = vld [vmem:[%s253 + $0x4] sm:$0xf]
      %v265 = vld [vmem:[%s253 + $0x8] sm:$0xf]
      %v266 = vld [vmem:[%s253 + $0xc] sm:$0xf]
      %v267 = vld [vmem:[%s253 + $0x10] sm:$0xf]
      %v268 = vld [vmem:[%s253 + $0x14] sm:$0xf]
      %v269 = vld [vmem:[%s253 + $0x18] sm:$0xf]
      %v270 = vld [vmem:[%s253 + $0x1c] sm:$0xf]
      %v271 = vld [vmem:[%s253 + $0x20] sm:$0xf]
      %v272 = vld [vmem:[%s253 + $0x24] sm:$0xf]
      %v273 = vld [vmem:[%s253 + $0x28] sm:$0xf]
      %v274 = vld [vmem:[%s253 + $0x2c] sm:$0xf]
      %v275 = vld [vmem:[%s253 + $0x30] sm:$0xf]
      %v276 = vld [vmem:[%s253 + $0x34] sm:$0xf]
      %v277 = vld [vmem:[%s253 + $0x38] sm:$0xf]
      %v278 = vld [vmem:[%s253 + $0x3c] sm:$0xf]
      %v279 = vld [vmem:[%s253 + $0x40] sm:$0xf]
      %v280 = vld [vmem:[%s253 + $0x44] sm:$0xf]
      %v281 = vld [vmem:[%s253 + $0x48] sm:$0xf]
      %v282 = vld [vmem:[%s253 + $0x4c] sm:$0xf]
      %v283 = vld [vmem:[%s253 + $0x50] sm:$0xf]
      %v284 = vld [vmem:[%s253 + $0x54] sm:$0xf]
      %v285 = vld [vmem:[%s253 + $0x58] sm:$0xf]
      %v286 = vld [vmem:[%s253 + $0x5c] sm:$0xf]
      %v287 = vld [vmem:[%s253 + $0x60] sm:$0xf]
      %v288 = vld [vmem:[%s253 + $0x64] sm:$0xf]
      %v289 = vld [vmem:[%s253 + $0x68] sm:$0xf]
      %v290 = vld [vmem:[%s253 + $0x6c] sm:$0xf]
      %v291 = vld [vmem:[%s253 + $0x70] sm:$0xf]
      %v292 = vld [vmem:[%s253 + $0x74] sm:$0xf]
      %v293 = vld [vmem:[%s253 + $0x78] sm:$0xf]
      %v294 = vld [vmem:[%s253 + $0x7c] sm:$0xf]
      %v295 = vunpack.c.l.bf16 %v263
      %v296 = vunpack.c.l.bf16 %v264
      %v297 = vunpack.c.l.bf16 %v265
      %v298 = vunpack.c.l.bf16 %v266
      %v299 = vunpack.c.l.bf16 %v267
      %v300 = vunpack.c.l.bf16 %v268
      %v301 = vunpack.c.l.bf16 %v269
      %v302 = vunpack.c.l.bf16 %v270
      %v303 = vunpack.c.l.bf16 %v271
      %v304 = vunpack.c.l.bf16 %v272
      %v305 = vunpack.c.l.bf16 %v273
      %v306 = vunpack.c.l.bf16 %v274
      %v307 = vunpack.c.l.bf16 %v275
      %v308 = vunpack.c.l.bf16 %v276
      %v309 = vunpack.c.l.bf16 %v277
      %v310 = vunpack.c.l.bf16 %v278
      %v311 = vunpack.c.l.bf16 %v279
      %v312 = vunpack.c.l.bf16 %v280
      %v313 = vunpack.c.l.bf16 %v281
      %v314 = vunpack.c.l.bf16 %v282
      %v315 = vunpack.c.l.bf16 %v283
      %v316 = vunpack.c.l.bf16 %v284
      %v317 = vunpack.c.l.bf16 %v285
      %v318 = vunpack.c.l.bf16 %v286
      %v319 = vunpack.c.l.bf16 %v287
      %v320 = vunpack.c.l.bf16 %v288
      %v321 = vunpack.c.l.bf16 %v289
      %v322 = vunpack.c.l.bf16 %v290
      %v323 = vunpack.c.l.bf16 %v291
      %v324 = vunpack.c.l.bf16 %v292
      %v325 = vunpack.c.l.bf16 %v293
      %v326 = vunpack.c.l.bf16 %v294
      %v327 = vld [vmem:[%s1] sm:$0x1]
      %v329 = vperm.slane %v327, 0
      %v331 = vmul.f32 %v295, %v329
      %v332 = vmul.f32 %v296, %v329
      %v333 = vmul.f32 %v297, %v329
      %v334 = vmul.f32 %v298, %v329
      %v335 = vmul.f32 %v299, %v329
      %v336 = vmul.f32 %v300, %v329
      %v337 = vmul.f32 %v301, %v329
      %v338 = vmul.f32 %v302, %v329
      %v339 = vmul.f32 %v303, %v329
      %v340 = vmul.f32 %v304, %v329
      %v341 = vmul.f32 %v305, %v329
      %v342 = vmul.f32 %v306, %v329
      %v343 = vmul.f32 %v307, %v329
      %v344 = vmul.f32 %v308, %v329
      %v345 = vmul.f32 %v309, %v329
      %v346 = vmul.f32 %v310, %v329
      %v347 = vmul.f32 %v311, %v329
      %v348 = vmul.f32 %v312, %v329
      %v349 = vmul.f32 %v313, %v329
      %v350 = vmul.f32 %v314, %v329
      %v351 = vmul.f32 %v315, %v329
      %v352 = vmul.f32 %v316, %v329
      %v353 = vmul.f32 %v317, %v329
      %v354 = vmul.f32 %v318, %v329
      %v355 = vmul.f32 %v319, %v329
      %v356 = vmul.f32 %v320, %v329
      %v357 = vmul.f32 %v321, %v329
      %v358 = vmul.f32 %v322, %v329
      %v359 = vmul.f32 %v323, %v329
      %v360 = vmul.f32 %v324, %v329
      %v361 = vmul.f32 %v325, %v329
      %v362 = vmul.f32 %v326, %v329
      %v363 = vld [vmem:[%s2] sm:$0x1]
      %v365 = vperm.slane %v363, 0
      %v367 = vadd.f32 %v331, %v365
      %v368 = vadd.f32 %v332, %v365
      %v369 = vadd.f32 %v333, %v365
      %v370 = vadd.f32 %v334, %v365
      %v371 = vadd.f32 %v335, %v365
      %v372 = vadd.f32 %v336, %v365
      %v373 = vadd.f32 %v337, %v365
      %v374 = vadd.f32 %v338, %v365
      %v375 = vadd.f32 %v339, %v365
      %v376 = vadd.f32 %v340, %v365
      %v377 = vadd.f32 %v341, %v365
      %v378 = vadd.f32 %v342, %v365
      %v379 = vadd.f32 %v343, %v365
      %v380 = vadd.f32 %v344, %v365
      %v381 = vadd.f32 %v345, %v365
      %v382 = vadd.f32 %v346, %v365
      %v383 = vadd.f32 %v347, %v365
      %v384 = vadd.f32 %v348, %v365
      %v385 = vadd.f32 %v349, %v365
      %v386 = vadd.f32 %v350, %v365
      %v387 = vadd.f32 %v351, %v365
      %v388 = vadd.f32 %v352, %v365
      %v389 = vadd.f32 %v353, %v365
      %v390 = vadd.f32 %v354, %v365
      %v391 = vadd.f32 %v355, %v365
      %v392 = vadd.f32 %v356, %v365
      %v393 = vadd.f32 %v357, %v365
      %v394 = vadd.f32 %v358, %v365
      %v395 = vadd.f32 %v359, %v365
      %v396 = vadd.f32 %v360, %v365
      %v397 = vadd.f32 %v361, %v365
      %v398 = vadd.f32 %v362, %v365
      %v399 = vmax.f32 %v367, 0.0
      %v400 = vmax.f32 %v368, 0.0
      %v401 = vmax.f32 %v369, 0.0
      %v402 = vmax.f32 %v370, 0.0
      %v403 = vmax.f32 %v371, 0.0
      %v404 = vmax.f32 %v372, 0.0
      %v405 = vmax.f32 %v373, 0.0
      %v406 = vmax.f32 %v374, 0.0
      %v407 = vmax.f32 %v375, 0.0
      %v408 = vmax.f32 %v376, 0.0
      %v409 = vmax.f32 %v377, 0.0
      %v410 = vmax.f32 %v378, 0.0
      %v411 = vmax.f32 %v379, 0.0
      %v412 = vmax.f32 %v380, 0.0
      %v413 = vmax.f32 %v381, 0.0
      %v414 = vmax.f32 %v382, 0.0
      %v415 = vmax.f32 %v383, 0.0
      %v416 = vmax.f32 %v384, 0.0
      %v417 = vmax.f32 %v385, 0.0
      %v418 = vmax.f32 %v386, 0.0
      %v419 = vmax.f32 %v387, 0.0
      %v420 = vmax.f32 %v388, 0.0
      %v421 = vmax.f32 %v389, 0.0
      %v422 = vmax.f32 %v390, 0.0
      %v423 = vmax.f32 %v391, 0.0
      %v424 = vmax.f32 %v392, 0.0
      %v425 = vmax.f32 %v393, 0.0
      %v426 = vmax.f32 %v394, 0.0
      %v427 = vmax.f32 %v395, 0.0
      %v428 = vmax.f32 %v396, 0.0
      %v429 = vmax.f32 %v397, 0.0
      %v430 = vmax.f32 %v398, 0.0
      %v431 = vlaneseq
      %v432 = vshrl.u32 %v431, 7
      %v433 = vadd.s32 %v432, 8
      %vm434 = vcmp.ge.s32.totalorder %v432, 1
      %vm435 = vcmp.ge.s32.totalorder %v433, 1
      %vm436 = vcmp.le.s32.totalorder %v432, 14
      %vm437 = vcmp.le.s32.totalorder %v433, 14
      %vm468 = vcmask 1040384
      %v469 = vrot.slane %v399, 7
      %v470 = vrot.slane %v400, 7
      %v471 = vsel %vm468, %v469, %v470
      %v472 = vrot.slane %v401, 7
      %v473 = vsel %vm468, %v470, %v472
      %v474 = vrot.slane %v402, 7
      %v475 = vsel %vm468, %v472, %v474
      %v476 = vrot.slane %v403, 7
      %v477 = vsel %vm468, %v474, %v476
      %v478 = vrot.slane %v404, 7
      %v479 = vsel %vm468, %v476, %v478
      %v480 = vrot.slane %v405, 7
      %v481 = vsel %vm468, %v478, %v480
      %v482 = vrot.slane %v406, 7
      %v483 = vsel %vm468, %v480, %v482
      %v484 = vrot.slane %v407, 7
      %v485 = vsel %vm468, %v482, %v484
      %v486 = vrot.slane %v408, 7
      %v487 = vsel %vm468, %v484, %v486
      %v488 = vrot.slane %v409, 7
      %v489 = vsel %vm468, %v486, %v488
      %v490 = vrot.slane %v410, 7
      %v491 = vsel %vm468, %v488, %v490
      %v492 = vrot.slane %v411, 7
      %v493 = vsel %vm468, %v490, %v492
      %v494 = vrot.slane %v412, 7
      %v495 = vsel %vm468, %v492, %v494
      %v496 = vrot.slane %v413, 7
      %v497 = vsel %vm468, %v494, %v496
      %v498 = vrot.slane %v414, 7
      %v499 = vsel %vm468, %v496, %v498
      %v500 = vrot.slane %v415, 7
      %v501 = vsel %vm468, %v498, %v500
      %v502 = vrot.slane %v416, 7
      %v503 = vsel %vm468, %v500, %v502
      %v504 = vrot.slane %v417, 7
      %v505 = vsel %vm468, %v502, %v504
      %v506 = vrot.slane %v418, 7
      %v507 = vsel %vm468, %v504, %v506
      %v508 = vrot.slane %v419, 7
      %v509 = vsel %vm468, %v506, %v508
      %v510 = vrot.slane %v420, 7
      %v511 = vsel %vm468, %v508, %v510
      %v512 = vrot.slane %v421, 7
      %v513 = vsel %vm468, %v510, %v512
      %v514 = vrot.slane %v422, 7
      %v515 = vsel %vm468, %v512, %v514
      %v516 = vrot.slane %v423, 7
      %v517 = vsel %vm468, %v514, %v516
      %v518 = vrot.slane %v424, 7
      %v519 = vsel %vm468, %v516, %v518
      %v520 = vrot.slane %v425, 7
      %v521 = vsel %vm468, %v518, %v520
      %v522 = vrot.slane %v426, 7
      %v523 = vsel %vm468, %v520, %v522
      %v524 = vrot.slane %v427, 7
      %v525 = vsel %vm468, %v522, %v524
      %v526 = vrot.slane %v428, 7
      %v527 = vsel %vm468, %v524, %v526
      %v558 = vsel %vm468, 0.0, %v469
      %v559 = vsel %vm434, %v558, 0.0
      %v560 = vsel %vm435, %v471, 0.0
      %v561 = vsel %vm434, %v473, 0.0
      %v562 = vsel %vm435, %v475, 0.0
      %v563 = vsel %vm434, %v477, 0.0
      %v564 = vsel %vm435, %v479, 0.0
      %v565 = vsel %vm434, %v481, 0.0
      %v566 = vsel %vm435, %v483, 0.0
      %v567 = vsel %vm434, %v485, 0.0
      %v568 = vsel %vm435, %v487, 0.0
      %v569 = vsel %vm434, %v489, 0.0
      %v570 = vsel %vm435, %v491, 0.0
      %v571 = vsel %vm434, %v493, 0.0
      %v572 = vsel %vm435, %v495, 0.0
      %v573 = vsel %vm434, %v497, 0.0
      %v574 = vsel %vm435, %v499, 0.0
      %v575 = vsel %vm434, %v501, 0.0
      %v576 = vsel %vm435, %v503, 0.0
      %v577 = vsel %vm434, %v505, 0.0
      %v578 = vsel %vm435, %v507, 0.0
      %v579 = vsel %vm434, %v509, 0.0
      %v580 = vsel %vm435, %v511, 0.0
      %v581 = vsel %vm434, %v513, 0.0
      %v582 = vsel %vm435, %v515, 0.0
      %v583 = vsel %vm434, %v517, 0.0
      %v584 = vsel %vm435, %v519, 0.0
      %v585 = vsel %vm434, %v521, 0.0
      %v586 = vsel %vm435, %v523, 0.0
      %v587 = vsel %vm434, %v525, 0.0
      %v588 = vsel %vm435, %v527, 0.0
      %v589 = vpack.c.bf16 0.0, 0.0
      %v590 = vpack.c.bf16 %v560, %v559
      %v591 = vpack.c.bf16 %v562, %v561
      %v592 = vpack.c.bf16 %v564, %v563
      %v593 = vpack.c.bf16 %v566, %v565
      %v594 = vpack.c.bf16 %v568, %v567
      %v595 = vpack.c.bf16 %v570, %v569
      %v596 = vpack.c.bf16 %v572, %v571
      %v597 = vpack.c.bf16 %v574, %v573
      %v598 = vpack.c.bf16 %v576, %v575
      %v599 = vpack.c.bf16 %v578, %v577
      %v600 = vpack.c.bf16 %v580, %v579
      %v601 = vpack.c.bf16 %v582, %v581
      %v602 = vpack.c.bf16 %v584, %v583
      %v603 = vpack.c.bf16 %v586, %v585
      %v604 = vpack.c.bf16 %v588, %v587
      %v605 = vld [vmem:[%s3] sm:$0xf]
      %v606 = vld [vmem:[%s3 + $0x4] sm:$0xf]
      %v607 = vld [vmem:[%s3 + $0x8] sm:$0xf]
      %v608 = vld [vmem:[%s3 + $0xc] sm:$0xf]
      %v609 = vld [vmem:[%s3 + $0x10] sm:$0xf]
      %v610 = vld [vmem:[%s3 + $0x14] sm:$0xf]
      %v611 = vld [vmem:[%s3 + $0x18] sm:$0xf]
      %v612 = vld [vmem:[%s3 + $0x1c] sm:$0xf]
      %v613 = vld [vmem:[%s3 + $0x20] sm:$0xf]
      %v614 = vld [vmem:[%s3 + $0x24] sm:$0xf]
      %v615 = vld [vmem:[%s3 + $0x28] sm:$0xf]
      %v616 = vld [vmem:[%s3 + $0x2c] sm:$0xf]
      %v617 = vld [vmem:[%s3 + $0x30] sm:$0xf]
      %v618 = vld [vmem:[%s3 + $0x34] sm:$0xf]
      %v619 = vld [vmem:[%s3 + $0x38] sm:$0xf]
      %v620 = vld [vmem:[%s3 + $0x3c] sm:$0xf]
      %v621 = vpack.c.bf16 %v400, %v399
      %v622 = vpack.c.bf16 %v402, %v401
      %v623 = vpack.c.bf16 %v404, %v403
      %v624 = vpack.c.bf16 %v406, %v405
      %v625 = vpack.c.bf16 %v408, %v407
      %v626 = vpack.c.bf16 %v410, %v409
      %v627 = vpack.c.bf16 %v412, %v411
      %v628 = vpack.c.bf16 %v414, %v413
      %v629 = vpack.c.bf16 %v416, %v415
      %v630 = vpack.c.bf16 %v418, %v417
      %v631 = vpack.c.bf16 %v420, %v419
      %v632 = vpack.c.bf16 %v422, %v421
      %v633 = vpack.c.bf16 %v424, %v423
      %v634 = vpack.c.bf16 %v426, %v425
      %v635 = vpack.c.bf16 %v428, %v427
      %s636 = scalar_lea.vmem %s3, 64
      %v637 = vld [vmem:[%s636] sm:$0xf]
      %v638 = vld [vmem:[%s636 + $0x4] sm:$0xf]
      %v639 = vld [vmem:[%s636 + $0x8] sm:$0xf]
      %v640 = vld [vmem:[%s636 + $0xc] sm:$0xf]
      %v641 = vld [vmem:[%s636 + $0x10] sm:$0xf]
      %v642 = vld [vmem:[%s636 + $0x14] sm:$0xf]
      %v643 = vld [vmem:[%s636 + $0x18] sm:$0xf]
      %v644 = vld [vmem:[%s636 + $0x1c] sm:$0xf]
      %v645 = vld [vmem:[%s636 + $0x20] sm:$0xf]
      %v646 = vld [vmem:[%s636 + $0x24] sm:$0xf]
      %v647 = vld [vmem:[%s636 + $0x28] sm:$0xf]
      %v648 = vld [vmem:[%s636 + $0x2c] sm:$0xf]
      %v649 = vld [vmem:[%s636 + $0x30] sm:$0xf]
      %v650 = vld [vmem:[%s636 + $0x34] sm:$0xf]
      %v651 = vld [vmem:[%s636 + $0x38] sm:$0xf]
      %v652 = vld [vmem:[%s636 + $0x3c] sm:$0xf]
      %v669 = vunpack.c.l.b16 %v637
      %v670 = vunpack.c.l.b16 %v638
      %v671 = vunpack.c.l.b16 %v639
      %v672 = vunpack.c.l.b16 %v640
      %v673 = vunpack.c.l.b16 %v641
      %v674 = vunpack.c.l.b16 %v642
      %v675 = vunpack.c.l.b16 %v643
      %v676 = vunpack.c.l.b16 %v644
      %v677 = vunpack.c.l.b16 %v645
      %v678 = vunpack.c.l.b16 %v646
      %v679 = vunpack.c.l.b16 %v647
      %v680 = vunpack.c.l.b16 %v648
      %v681 = vunpack.c.l.b16 %v649
      %v682 = vunpack.c.l.b16 %v650
      %v683 = vunpack.c.l.b16 %v651
      %v684 = vunpack.c.l.b16 %v652
      %v685 = vpack.c.b16 %v670, %v669
      %v686 = vpack.c.b16 %v672, %v671
      %v687 = vpack.c.b16 %v674, %v673
      %v688 = vpack.c.b16 %v676, %v675
      %v689 = vpack.c.b16 %v678, %v677
      %v690 = vpack.c.b16 %v680, %v679
      %v691 = vpack.c.b16 %v682, %v681
      %v692 = vpack.c.b16 %v684, %v683
      %701 = vmatpush.bf16.msra.mxu0 %v692
      %702 = vmatpush.bf16.msra.mxu0 %v691
      %703 = vmatpush.bf16.msra.mxu0 %v690
      %704 = vmatpush.bf16.msra.mxu0 %v689
      %705 = vmatpush.bf16.msra.mxu0 %v688
      %706 = vmatpush.bf16.msra.mxu0 %v687
      %707 = vmatpush.bf16.msra.mxu0 %v686
      %708 = vmatpush.bf16.msra.mxu0 %v685
      %709 = vmatmul.bf16.gmra.mxu0 %v589
      %v710 = vpop.f32.mrf.mxu0
      %v711 = vadd.f32 0.0, %v710
      %v712 = vpop.f32.mrf.mxu0
      %v713 = vadd.f32 0.0, %v712
      %714 = vmatmul.bf16.gmra.mxu0 %v621
      %v715 = vpop.f32.mrf.mxu0
      %v716 = vadd.f32 0.0, %v715
      %v717 = vpop.f32.mrf.mxu0
      %v718 = vadd.f32 0.0, %v717
      %719 = vmatmul.bf16.gmra.mxu0 %v622
      %v720 = vpop.f32.mrf.mxu0
      %v721 = vadd.f32 0.0, %v720
      %v722 = vpop.f32.mrf.mxu0
      %v723 = vadd.f32 0.0, %v722
      %724 = vmatmul.bf16.gmra.mxu0 %v623
      %v725 = vpop.f32.mrf.mxu0
      %v726 = vadd.f32 0.0, %v725
      %v727 = vpop.f32.mrf.mxu0
      %v728 = vadd.f32 0.0, %v727
      %729 = vmatmul.bf16.gmra.mxu0 %v624
      %v730 = vpop.f32.mrf.mxu0
      %v731 = vadd.f32 0.0, %v730
      %v732 = vpop.f32.mrf.mxu0
      %v733 = vadd.f32 0.0, %v732
      %734 = vmatmul.bf16.gmra.mxu0 %v625
      %v735 = vpop.f32.mrf.mxu0
      %v736 = vadd.f32 0.0, %v735
      %v737 = vpop.f32.mrf.mxu0
      %v738 = vadd.f32 0.0, %v737
      %739 = vmatmul.bf16.gmra.mxu0 %v626
      %v740 = vpop.f32.mrf.mxu0
      %v741 = vadd.f32 0.0, %v740
      %v742 = vpop.f32.mrf.mxu0
      %v743 = vadd.f32 0.0, %v742
      %744 = vmatmul.bf16.gmra.mxu0 %v627
      %v745 = vpop.f32.mrf.mxu0
      %v746 = vadd.f32 0.0, %v745
      %v747 = vpop.f32.mrf.mxu0
      %v748 = vadd.f32 0.0, %v747
      %749 = vmatmul.bf16.gmra.mxu0 %v628
      %v750 = vpop.f32.mrf.mxu0
      %v751 = vadd.f32 0.0, %v750
      %v752 = vpop.f32.mrf.mxu0
      %v753 = vadd.f32 0.0, %v752
      %754 = vmatmul.bf16.gmra.mxu0 %v629
      %v755 = vpop.f32.mrf.mxu0
      %v756 = vadd.f32 0.0, %v755
      %v757 = vpop.f32.mrf.mxu0
      %v758 = vadd.f32 0.0, %v757
      %759 = vmatmul.bf16.gmra.mxu0 %v630
      %v760 = vpop.f32.mrf.mxu0
      %v761 = vadd.f32 0.0, %v760
      %v762 = vpop.f32.mrf.mxu0
      %v763 = vadd.f32 0.0, %v762
      %764 = vmatmul.bf16.gmra.mxu0 %v631
      %v765 = vpop.f32.mrf.mxu0
      %v766 = vadd.f32 0.0, %v765
      %v767 = vpop.f32.mrf.mxu0
      %v768 = vadd.f32 0.0, %v767
      %769 = vmatmul.bf16.gmra.mxu0 %v632
      %v770 = vpop.f32.mrf.mxu0
      %v771 = vadd.f32 0.0, %v770
      %v772 = vpop.f32.mrf.mxu0
      %v773 = vadd.f32 0.0, %v772
      %774 = vmatmul.bf16.gmra.mxu0 %v633
      %v775 = vpop.f32.mrf.mxu0
      %v776 = vadd.f32 0.0, %v775
      %v777 = vpop.f32.mrf.mxu0
      %v778 = vadd.f32 0.0, %v777
      %779 = vmatmul.bf16.gmra.mxu0 %v634
      %v780 = vpop.f32.mrf.mxu0
      %v781 = vadd.f32 0.0, %v780
      %v782 = vpop.f32.mrf.mxu0
      %v783 = vadd.f32 0.0, %v782
      %784 = vmatmul.bf16.gmra.mxu0 %v635
      %v785 = vpop.f32.mrf.mxu0
      %v786 = vadd.f32 0.0, %v785
      %v787 = vpop.f32.mrf.mxu0
      %v788 = vadd.f32 0.0, %v787
      %789 = vdwg.mxu0
      %v806 = vunpack.c.l.b16 %v605
      %v807 = vunpack.c.l.b16 %v606
      %v808 = vunpack.c.l.b16 %v607
      %v809 = vunpack.c.l.b16 %v608
      %v810 = vunpack.c.l.b16 %v609
      %v811 = vunpack.c.l.b16 %v610
      %v812 = vunpack.c.l.b16 %v611
      %v813 = vunpack.c.l.b16 %v612
      %v814 = vunpack.c.l.b16 %v613
      %v815 = vunpack.c.l.b16 %v614
      %v816 = vunpack.c.l.b16 %v615
      %v817 = vunpack.c.l.b16 %v616
      %v818 = vunpack.c.l.b16 %v617
      %v819 = vunpack.c.l.b16 %v618
      %v820 = vunpack.c.l.b16 %v619
      %v821 = vunpack.c.l.b16 %v620
      %v822 = vpack.c.b16 %v807, %v806
      %v823 = vpack.c.b16 %v809, %v808
      %v824 = vpack.c.b16 %v811, %v810
      %v825 = vpack.c.b16 %v813, %v812
      %v826 = vpack.c.b16 %v815, %v814
      %v827 = vpack.c.b16 %v817, %v816
      %v828 = vpack.c.b16 %v819, %v818
      %v829 = vpack.c.b16 %v821, %v820
      %838 = vmatpush.bf16.msra.mxu0 %v829
      %839 = vmatpush.bf16.msra.mxu0 %v828
      %840 = vmatpush.bf16.msra.mxu0 %v827
      %841 = vmatpush.bf16.msra.mxu0 %v826
      %842 = vmatpush.bf16.msra.mxu0 %v825
      %843 = vmatpush.bf16.msra.mxu0 %v824
      %844 = vmatpush.bf16.msra.mxu0 %v823
      %845 = vmatpush.bf16.msra.mxu0 %v822
      %846 = vmatmul.bf16.gmra.mxu0 %v589
      %v847 = vpop.f32.mrf.mxu0
      %v848 = vadd.f32 %v711, %v847
      %v849 = vpop.f32.mrf.mxu0
      %v850 = vadd.f32 %v713, %v849
      %851 = vmatmul.bf16.gmra.mxu0 %v590
      %v852 = vpop.f32.mrf.mxu0
      %v853 = vadd.f32 %v716, %v852
      %v854 = vpop.f32.mrf.mxu0
      %v855 = vadd.f32 %v718, %v854
      %856 = vmatmul.bf16.gmra.mxu0 %v591
      %v857 = vpop.f32.mrf.mxu0
      %v858 = vadd.f32 %v721, %v857
      %v859 = vpop.f32.mrf.mxu0
      %v860 = vadd.f32 %v723, %v859
      %861 = vmatmul.bf16.gmra.mxu0 %v592
      %v862 = vpop.f32.mrf.mxu0
      %v863 = vadd.f32 %v726, %v862
      %v864 = vpop.f32.mrf.mxu0
      %v865 = vadd.f32 %v728, %v864
      %866 = vmatmul.bf16.gmra.mxu0 %v593
      %v867 = vpop.f32.mrf.mxu0
      %v868 = vadd.f32 %v731, %v867
      %v869 = vpop.f32.mrf.mxu0
      %v870 = vadd.f32 %v733, %v869
      %871 = vmatmul.bf16.gmra.mxu0 %v594
      %v872 = vpop.f32.mrf.mxu0
      %v873 = vadd.f32 %v736, %v872
      %v874 = vpop.f32.mrf.mxu0
      %v875 = vadd.f32 %v738, %v874
      %876 = vmatmul.bf16.gmra.mxu0 %v595
      %v877 = vpop.f32.mrf.mxu0
      %v878 = vadd.f32 %v741, %v877
      %v879 = vpop.f32.mrf.mxu0
      %v880 = vadd.f32 %v743, %v879
      %881 = vmatmul.bf16.gmra.mxu0 %v596
      %v882 = vpop.f32.mrf.mxu0
      %v883 = vadd.f32 %v746, %v882
      %v884 = vpop.f32.mrf.mxu0
      %v885 = vadd.f32 %v748, %v884
      %886 = vmatmul.bf16.gmra.mxu0 %v597
      %v887 = vpop.f32.mrf.mxu0
      %v888 = vadd.f32 %v751, %v887
      %v889 = vpop.f32.mrf.mxu0
      %v890 = vadd.f32 %v753, %v889
      %891 = vmatmul.bf16.gmra.mxu0 %v598
      %v892 = vpop.f32.mrf.mxu0
      %v893 = vadd.f32 %v756, %v892
      %v894 = vpop.f32.mrf.mxu0
      %v895 = vadd.f32 %v758, %v894
      %896 = vmatmul.bf16.gmra.mxu0 %v599
      %v897 = vpop.f32.mrf.mxu0
      %v898 = vadd.f32 %v761, %v897
      %v899 = vpop.f32.mrf.mxu0
      %v900 = vadd.f32 %v763, %v899
      %901 = vmatmul.bf16.gmra.mxu0 %v600
      %v902 = vpop.f32.mrf.mxu0
      %v903 = vadd.f32 %v766, %v902
      %v904 = vpop.f32.mrf.mxu0
      %v905 = vadd.f32 %v768, %v904
      %906 = vmatmul.bf16.gmra.mxu0 %v601
      %v907 = vpop.f32.mrf.mxu0
      %v908 = vadd.f32 %v771, %v907
      %v909 = vpop.f32.mrf.mxu0
      %v910 = vadd.f32 %v773, %v909
      %911 = vmatmul.bf16.gmra.mxu0 %v602
      %v912 = vpop.f32.mrf.mxu0
      %v913 = vadd.f32 %v776, %v912
      %v914 = vpop.f32.mrf.mxu0
      %v915 = vadd.f32 %v778, %v914
      %916 = vmatmul.bf16.gmra.mxu0 %v603
      %v917 = vpop.f32.mrf.mxu0
      %v918 = vadd.f32 %v781, %v917
      %v919 = vpop.f32.mrf.mxu0
      %v920 = vadd.f32 %v783, %v919
      %921 = vmatmul.bf16.gmra.mxu0 %v604
      %v922 = vpop.f32.mrf.mxu0
      %v923 = vadd.f32 %v786, %v922
      %v924 = vpop.f32.mrf.mxu0
      %v925 = vadd.f32 %v788, %v924
      %926 = vdwg.mxu0
      %vm928 = vcmask 1046528
      %v929 = vrot.slane %v399, 1
      %v930 = vrot.slane %v400, 1
      %v931 = vsel %vm928, %v929, %v930
      %v932 = vrot.slane %v401, 1
      %v933 = vsel %vm928, %v930, %v932
      %v934 = vrot.slane %v402, 1
      %v935 = vsel %vm928, %v932, %v934
      %v936 = vrot.slane %v403, 1
      %v937 = vsel %vm928, %v934, %v936
      %v938 = vrot.slane %v404, 1
      %v939 = vsel %vm928, %v936, %v938
      %v940 = vrot.slane %v405, 1
      %v941 = vsel %vm928, %v938, %v940
      %v942 = vrot.slane %v406, 1
      %v943 = vsel %vm928, %v940, %v942
      %v944 = vrot.slane %v407, 1
      %v945 = vsel %vm928, %v942, %v944
      %v946 = vrot.slane %v408, 1
      %v947 = vsel %vm928, %v944, %v946
      %v948 = vrot.slane %v409, 1
      %v949 = vsel %vm928, %v946, %v948
      %v950 = vrot.slane %v410, 1
      %v951 = vsel %vm928, %v948, %v950
      %v952 = vrot.slane %v411, 1
      %v953 = vsel %vm928, %v950, %v952
      %v954 = vrot.slane %v412, 1
      %v955 = vsel %vm928, %v952, %v954
      %v956 = vrot.slane %v413, 1
      %v957 = vsel %vm928, %v954, %v956
      %v958 = vrot.slane %v414, 1
      %v959 = vsel %vm928, %v956, %v958
      %v960 = vrot.slane %v415, 1
      %v961 = vsel %vm928, %v958, %v960
      %v962 = vrot.slane %v416, 1
      %v963 = vsel %vm928, %v960, %v962
      %v964 = vrot.slane %v417, 1
      %v965 = vsel %vm928, %v962, %v964
      %v966 = vrot.slane %v418, 1
      %v967 = vsel %vm928, %v964, %v966
      %v968 = vrot.slane %v419, 1
      %v969 = vsel %vm928, %v966, %v968
      %v970 = vrot.slane %v420, 1
      %v971 = vsel %vm928, %v968, %v970
      %v972 = vrot.slane %v421, 1
      %v973 = vsel %vm928, %v970, %v972
      %v974 = vrot.slane %v422, 1
      %v975 = vsel %vm928, %v972, %v974
      %v976 = vrot.slane %v423, 1
      %v977 = vsel %vm928, %v974, %v976
      %v978 = vrot.slane %v424, 1
      %v979 = vsel %vm928, %v976, %v978
      %v980 = vrot.slane %v425, 1
      %v981 = vsel %vm928, %v978, %v980
      %v982 = vrot.slane %v426, 1
      %v983 = vsel %vm928, %v980, %v982
      %v984 = vrot.slane %v427, 1
      %v985 = vsel %vm928, %v982, %v984
      %v986 = vrot.slane %v428, 1
      %v987 = vsel %vm928, %v984, %v986
      %v988 = vrot.slane %v429, 1
      %v989 = vsel %vm928, %v986, %v988
      %v1020 = vsel %vm436, %v931, 0.0
      %v1021 = vsel %vm437, %v933, 0.0
      %v1022 = vsel %vm436, %v935, 0.0
      %v1023 = vsel %vm437, %v937, 0.0
      %v1024 = vsel %vm436, %v939, 0.0
      %v1025 = vsel %vm437, %v941, 0.0
      %v1026 = vsel %vm436, %v943, 0.0
      %v1027 = vsel %vm437, %v945, 0.0
      %v1028 = vsel %vm436, %v947, 0.0
      %v1029 = vsel %vm437, %v949, 0.0
      %v1030 = vsel %vm436, %v951, 0.0
      %v1031 = vsel %vm437, %v953, 0.0
      %v1032 = vsel %vm436, %v955, 0.0
      %v1033 = vsel %vm437, %v957, 0.0
      %v1034 = vsel %vm436, %v959, 0.0
      %v1035 = vsel %vm437, %v961, 0.0
      %v1036 = vsel %vm436, %v963, 0.0
      %v1037 = vsel %vm437, %v965, 0.0
      %v1038 = vsel %vm436, %v967, 0.0
      %v1039 = vsel %vm437, %v969, 0.0
      %v1040 = vsel %vm436, %v971, 0.0
      %v1041 = vsel %vm437, %v973, 0.0
      %v1042 = vsel %vm436, %v975, 0.0
      %v1043 = vsel %vm437, %v977, 0.0
      %v1044 = vsel %vm436, %v979, 0.0
      %v1045 = vsel %vm437, %v981, 0.0
      %v1046 = vsel %vm436, %v983, 0.0
      %v1047 = vsel %vm437, %v985, 0.0
      %v1048 = vsel %vm436, %v987, 0.0
      %v1049 = vsel %vm437, %v989, 0.0
      %v1050 = vpack.c.bf16 %v1021, %v1020
      %v1051 = vpack.c.bf16 %v1023, %v1022
      %v1052 = vpack.c.bf16 %v1025, %v1024
      %v1053 = vpack.c.bf16 %v1027, %v1026
      %v1054 = vpack.c.bf16 %v1029, %v1028
      %v1055 = vpack.c.bf16 %v1031, %v1030
      %v1056 = vpack.c.bf16 %v1033, %v1032
      %v1057 = vpack.c.bf16 %v1035, %v1034
      %v1058 = vpack.c.bf16 %v1037, %v1036
      %v1059 = vpack.c.bf16 %v1039, %v1038
      %v1060 = vpack.c.bf16 %v1041, %v1040
      %v1061 = vpack.c.bf16 %v1043, %v1042
      %v1062 = vpack.c.bf16 %v1045, %v1044
      %v1063 = vpack.c.bf16 %v1047, %v1046
      %v1064 = vpack.c.bf16 %v1049, %v1048
      %s1065 = scalar_lea.vmem %s3, 128
      %v1066 = vld [vmem:[%s1065] sm:$0xf]
      %v1067 = vld [vmem:[%s1065 + $0x4] sm:$0xf]
      %v1068 = vld [vmem:[%s1065 + $0x8] sm:$0xf]
      %v1069 = vld [vmem:[%s1065 + $0xc] sm:$0xf]
      %v1070 = vld [vmem:[%s1065 + $0x10] sm:$0xf]
      %v1071 = vld [vmem:[%s1065 + $0x14] sm:$0xf]
      %v1072 = vld [vmem:[%s1065 + $0x18] sm:$0xf]
      %v1073 = vld [vmem:[%s1065 + $0x1c] sm:$0xf]
      %v1074 = vld [vmem:[%s1065 + $0x20] sm:$0xf]
      %v1075 = vld [vmem:[%s1065 + $0x24] sm:$0xf]
      %v1076 = vld [vmem:[%s1065 + $0x28] sm:$0xf]
      %v1077 = vld [vmem:[%s1065 + $0x2c] sm:$0xf]
      %v1078 = vld [vmem:[%s1065 + $0x30] sm:$0xf]
      %v1079 = vld [vmem:[%s1065 + $0x34] sm:$0xf]
      %v1080 = vld [vmem:[%s1065 + $0x38] sm:$0xf]
      %v1081 = vld [vmem:[%s1065 + $0x3c] sm:$0xf]
      %v1098 = vunpack.c.l.b16 %v1066
      %v1099 = vunpack.c.l.b16 %v1067
      %v1100 = vunpack.c.l.b16 %v1068
      %v1101 = vunpack.c.l.b16 %v1069
      %v1102 = vunpack.c.l.b16 %v1070
      %v1103 = vunpack.c.l.b16 %v1071
      %v1104 = vunpack.c.l.b16 %v1072
      %v1105 = vunpack.c.l.b16 %v1073
      %v1106 = vunpack.c.l.b16 %v1074
      %v1107 = vunpack.c.l.b16 %v1075
      %v1108 = vunpack.c.l.b16 %v1076
      %v1109 = vunpack.c.l.b16 %v1077
      %v1110 = vunpack.c.l.b16 %v1078
      %v1111 = vunpack.c.l.b16 %v1079
      %v1112 = vunpack.c.l.b16 %v1080
      %v1113 = vunpack.c.l.b16 %v1081
      %v1114 = vpack.c.b16 %v1099, %v1098
      %v1115 = vpack.c.b16 %v1101, %v1100
      %v1116 = vpack.c.b16 %v1103, %v1102
      %v1117 = vpack.c.b16 %v1105, %v1104
      %v1118 = vpack.c.b16 %v1107, %v1106
      %v1119 = vpack.c.b16 %v1109, %v1108
      %v1120 = vpack.c.b16 %v1111, %v1110
      %v1121 = vpack.c.b16 %v1113, %v1112
      %1130 = vmatpush.bf16.msra.mxu0 %v1121
      %1131 = vmatpush.bf16.msra.mxu0 %v1120
      %1132 = vmatpush.bf16.msra.mxu0 %v1119
      %1133 = vmatpush.bf16.msra.mxu0 %v1118
      %1134 = vmatpush.bf16.msra.mxu0 %v1117
      %1135 = vmatpush.bf16.msra.mxu0 %v1116
      %1136 = vmatpush.bf16.msra.mxu0 %v1115
      %1137 = vmatpush.bf16.msra.mxu0 %v1114
      %1138 = vmatmul.bf16.gmra.mxu0 %v589
      %v1139 = vpop.f32.mrf.mxu0
      %v1140 = vadd.f32 0.0, %v1139
      %v1141 = vpop.f32.mrf.mxu0
      %v1142 = vadd.f32 0.0, %v1141
      %1143 = vmatmul.bf16.gmra.mxu0 %v1050
      %v1144 = vpop.f32.mrf.mxu0
      %v1145 = vadd.f32 0.0, %v1144
      %v1146 = vpop.f32.mrf.mxu0
      %v1147 = vadd.f32 0.0, %v1146
      %1148 = vmatmul.bf16.gmra.mxu0 %v1051
      %v1149 = vpop.f32.mrf.mxu0
      %v1150 = vadd.f32 0.0, %v1149
      %v1151 = vpop.f32.mrf.mxu0
      %v1152 = vadd.f32 0.0, %v1151
      %1153 = vmatmul.bf16.gmra.mxu0 %v1052
      %v1154 = vpop.f32.mrf.mxu0
      %v1155 = vadd.f32 0.0, %v1154
      %v1156 = vpop.f32.mrf.mxu0
      %v1157 = vadd.f32 0.0, %v1156
      %1158 = vmatmul.bf16.gmra.mxu0 %v1053
      %v1159 = vpop.f32.mrf.mxu0
      %v1160 = vadd.f32 0.0, %v1159
      %v1161 = vpop.f32.mrf.mxu0
      %v1162 = vadd.f32 0.0, %v1161
      %1163 = vmatmul.bf16.gmra.mxu0 %v1054
      %v1164 = vpop.f32.mrf.mxu0
      %v1165 = vadd.f32 0.0, %v1164
      %v1166 = vpop.f32.mrf.mxu0
      %v1167 = vadd.f32 0.0, %v1166
      %1168 = vmatmul.bf16.gmra.mxu0 %v1055
      %v1169 = vpop.f32.mrf.mxu0
      %v1170 = vadd.f32 0.0, %v1169
      %v1171 = vpop.f32.mrf.mxu0
      %v1172 = vadd.f32 0.0, %v1171
      %1173 = vmatmul.bf16.gmra.mxu0 %v1056
      %v1174 = vpop.f32.mrf.mxu0
      %v1175 = vadd.f32 0.0, %v1174
      %v1176 = vpop.f32.mrf.mxu0
      %v1177 = vadd.f32 0.0, %v1176
      %1178 = vmatmul.bf16.gmra.mxu0 %v1057
      %v1179 = vpop.f32.mrf.mxu0
      %v1180 = vadd.f32 0.0, %v1179
      %v1181 = vpop.f32.mrf.mxu0
      %v1182 = vadd.f32 0.0, %v1181
      %1183 = vmatmul.bf16.gmra.mxu0 %v1058
      %v1184 = vpop.f32.mrf.mxu0
      %v1185 = vadd.f32 0.0, %v1184
      %v1186 = vpop.f32.mrf.mxu0
      %v1187 = vadd.f32 0.0, %v1186
      %1188 = vmatmul.bf16.gmra.mxu0 %v1059
      %v1189 = vpop.f32.mrf.mxu0
      %v1190 = vadd.f32 0.0, %v1189
      %v1191 = vpop.f32.mrf.mxu0
      %v1192 = vadd.f32 0.0, %v1191
      %1193 = vmatmul.bf16.gmra.mxu0 %v1060
      %v1194 = vpop.f32.mrf.mxu0
      %v1195 = vadd.f32 0.0, %v1194
      %v1196 = vpop.f32.mrf.mxu0
      %v1197 = vadd.f32 0.0, %v1196
      %1198 = vmatmul.bf16.gmra.mxu0 %v1061
      %v1199 = vpop.f32.mrf.mxu0
      %v1200 = vadd.f32 0.0, %v1199
      %v1201 = vpop.f32.mrf.mxu0
      %v1202 = vadd.f32 0.0, %v1201
      %1203 = vmatmul.bf16.gmra.mxu0 %v1062
      %v1204 = vpop.f32.mrf.mxu0
      %v1205 = vadd.f32 0.0, %v1204
      %v1206 = vpop.f32.mrf.mxu0
      %v1207 = vadd.f32 0.0, %v1206
      %1208 = vmatmul.bf16.gmra.mxu0 %v1063
      %v1209 = vpop.f32.mrf.mxu0
      %v1210 = vadd.f32 0.0, %v1209
      %v1211 = vpop.f32.mrf.mxu0
      %v1212 = vadd.f32 0.0, %v1211
      %1213 = vmatmul.bf16.gmra.mxu0 %v1064
      %v1214 = vpop.f32.mrf.mxu0
      %v1215 = vadd.f32 0.0, %v1214
      %v1216 = vpop.f32.mrf.mxu0
      %v1217 = vadd.f32 0.0, %v1216
      %1218 = vdwg.mxu0
      %v1219 = vadd.f32 %v848, %v1140
      %v1220 = vadd.f32 %v850, %v1142
      %v1221 = vadd.f32 %v853, %v1145
      %v1222 = vadd.f32 %v855, %v1147
      %v1223 = vadd.f32 %v858, %v1150
      %v1224 = vadd.f32 %v860, %v1152
      %v1225 = vadd.f32 %v863, %v1155
      %v1226 = vadd.f32 %v865, %v1157
      %v1227 = vadd.f32 %v868, %v1160
      %v1228 = vadd.f32 %v870, %v1162
      %v1229 = vadd.f32 %v873, %v1165
      %v1230 = vadd.f32 %v875, %v1167
      %v1231 = vadd.f32 %v878, %v1170
      %v1232 = vadd.f32 %v880, %v1172
      %v1233 = vadd.f32 %v883, %v1175
      %v1234 = vadd.f32 %v885, %v1177
      %v1235 = vadd.f32 %v888, %v1180
      %v1236 = vadd.f32 %v890, %v1182
      %v1237 = vadd.f32 %v893, %v1185
      %v1238 = vadd.f32 %v895, %v1187
      %v1239 = vadd.f32 %v898, %v1190
      %v1240 = vadd.f32 %v900, %v1192
      %v1241 = vadd.f32 %v903, %v1195
      %v1242 = vadd.f32 %v905, %v1197
      %v1243 = vadd.f32 %v908, %v1200
      %v1244 = vadd.f32 %v910, %v1202
      %v1245 = vadd.f32 %v913, %v1205
      %v1246 = vadd.f32 %v915, %v1207
      %v1247 = vadd.f32 %v918, %v1210
      %v1248 = vadd.f32 %v920, %v1212
      %v1249 = vadd.f32 %v923, %v1215
      %v1250 = vadd.f32 %v925, %v1217
      %v1252 = vrot.slane %v429, 7
      %v1253 = vsel %vm468, %v526, %v1252
      %v1254 = vrot.slane %v430, 7
      %v1255 = vsel %vm468, %v1252, %v1254
      %v1258 = vsel %vm434, %v1253, 0.0
      %v1259 = vsel %vm435, %v1255, 0.0
      %v1260 = vpack.c.bf16 %v1259, %v1258
      %s1261 = scalar_lea.vmem %s3, 192
      %v1262 = vld [vmem:[%s1261] sm:$0xf]
      %v1263 = vld [vmem:[%s1261 + $0x4] sm:$0xf]
      %v1264 = vld [vmem:[%s1261 + $0x8] sm:$0xf]
      %v1265 = vld [vmem:[%s1261 + $0xc] sm:$0xf]
      %v1266 = vld [vmem:[%s1261 + $0x10] sm:$0xf]
      %v1267 = vld [vmem:[%s1261 + $0x14] sm:$0xf]
      %v1268 = vld [vmem:[%s1261 + $0x18] sm:$0xf]
      %v1269 = vld [vmem:[%s1261 + $0x1c] sm:$0xf]
      %v1270 = vld [vmem:[%s1261 + $0x20] sm:$0xf]
      %v1271 = vld [vmem:[%s1261 + $0x24] sm:$0xf]
      %v1272 = vld [vmem:[%s1261 + $0x28] sm:$0xf]
      %v1273 = vld [vmem:[%s1261 + $0x2c] sm:$0xf]
      %v1274 = vld [vmem:[%s1261 + $0x30] sm:$0xf]
      %v1275 = vld [vmem:[%s1261 + $0x34] sm:$0xf]
      %v1276 = vld [vmem:[%s1261 + $0x38] sm:$0xf]
      %v1277 = vld [vmem:[%s1261 + $0x3c] sm:$0xf]
      %v1294 = vunpack.c.l.b16 %v1262
      %v1295 = vunpack.c.l.b16 %v1263
      %v1296 = vunpack.c.l.b16 %v1264
      %v1297 = vunpack.c.l.b16 %v1265
      %v1298 = vunpack.c.l.b16 %v1266
      %v1299 = vunpack.c.l.b16 %v1267
      %v1300 = vunpack.c.l.b16 %v1268
      %v1301 = vunpack.c.l.b16 %v1269
      %v1302 = vunpack.c.l.b16 %v1270
      %v1303 = vunpack.c.l.b16 %v1271
      %v1304 = vunpack.c.l.b16 %v1272
      %v1305 = vunpack.c.l.b16 %v1273
      %v1306 = vunpack.c.l.b16 %v1274
      %v1307 = vunpack.c.l.b16 %v1275
      %v1308 = vunpack.c.l.b16 %v1276
      %v1309 = vunpack.c.l.b16 %v1277
      %v1310 = vpack.c.b16 %v1295, %v1294
      %v1311 = vpack.c.b16 %v1297, %v1296
      %v1312 = vpack.c.b16 %v1299, %v1298
      %v1313 = vpack.c.b16 %v1301, %v1300
      %v1314 = vpack.c.b16 %v1303, %v1302
      %v1315 = vpack.c.b16 %v1305, %v1304
      %v1316 = vpack.c.b16 %v1307, %v1306
      %v1317 = vpack.c.b16 %v1309, %v1308
      %1326 = vmatpush.bf16.msra.mxu0 %v1317
      %1327 = vmatpush.bf16.msra.mxu0 %v1316
      %1328 = vmatpush.bf16.msra.mxu0 %v1315
      %1329 = vmatpush.bf16.msra.mxu0 %v1314
      %1330 = vmatpush.bf16.msra.mxu0 %v1313
      %1331 = vmatpush.bf16.msra.mxu0 %v1312
      %1332 = vmatpush.bf16.msra.mxu0 %v1311
      %1333 = vmatpush.bf16.msra.mxu0 %v1310
      %1334 = vmatmul.bf16.gmra.mxu0 %v590
      %v1335 = vpop.f32.mrf.mxu0
      %v1336 = vadd.f32 0.0, %v1335
      %v1337 = vpop.f32.mrf.mxu0
      %v1338 = vadd.f32 0.0, %v1337
      %1339 = vmatmul.bf16.gmra.mxu0 %v591
      %v1340 = vpop.f32.mrf.mxu0
      %v1341 = vadd.f32 0.0, %v1340
      %v1342 = vpop.f32.mrf.mxu0
      %v1343 = vadd.f32 0.0, %v1342
      %1344 = vmatmul.bf16.gmra.mxu0 %v592
      %v1345 = vpop.f32.mrf.mxu0
      %v1346 = vadd.f32 0.0, %v1345
      %v1347 = vpop.f32.mrf.mxu0
      %v1348 = vadd.f32 0.0, %v1347
      %1349 = vmatmul.bf16.gmra.mxu0 %v593
      %v1350 = vpop.f32.mrf.mxu0
      %v1351 = vadd.f32 0.0, %v1350
      %v1352 = vpop.f32.mrf.mxu0
      %v1353 = vadd.f32 0.0, %v1352
      %1354 = vmatmul.bf16.gmra.mxu0 %v594
      %v1355 = vpop.f32.mrf.mxu0
      %v1356 = vadd.f32 0.0, %v1355
      %v1357 = vpop.f32.mrf.mxu0
      %v1358 = vadd.f32 0.0, %v1357
      %1359 = vmatmul.bf16.gmra.mxu0 %v595
      %v1360 = vpop.f32.mrf.mxu0
      %v1361 = vadd.f32 0.0, %v1360
      %v1362 = vpop.f32.mrf.mxu0
      %v1363 = vadd.f32 0.0, %v1362
      %1364 = vmatmul.bf16.gmra.mxu0 %v596
      %v1365 = vpop.f32.mrf.mxu0
      %v1366 = vadd.f32 0.0, %v1365
      %v1367 = vpop.f32.mrf.mxu0
      %v1368 = vadd.f32 0.0, %v1367
      %1369 = vmatmul.bf16.gmra.mxu0 %v597
      %v1370 = vpop.f32.mrf.mxu0
      %v1371 = vadd.f32 0.0, %v1370
      %v1372 = vpop.f32.mrf.mxu0
      %v1373 = vadd.f32 0.0, %v1372
      %1374 = vmatmul.bf16.gmra.mxu0 %v598
      %v1375 = vpop.f32.mrf.mxu0
      %v1376 = vadd.f32 0.0, %v1375
      %v1377 = vpop.f32.mrf.mxu0
      %v1378 = vadd.f32 0.0, %v1377
      %1379 = vmatmul.bf16.gmra.mxu0 %v599
      %v1380 = vpop.f32.mrf.mxu0
      %v1381 = vadd.f32 0.0, %v1380
      %v1382 = vpop.f32.mrf.mxu0
      %v1383 = vadd.f32 0.0, %v1382
      %1384 = vmatmul.bf16.gmra.mxu0 %v600
      %v1385 = vpop.f32.mrf.mxu0
      %v1386 = vadd.f32 0.0, %v1385
      %v1387 = vpop.f32.mrf.mxu0
      %v1388 = vadd.f32 0.0, %v1387
      %1389 = vmatmul.bf16.gmra.mxu0 %v601
      %v1390 = vpop.f32.mrf.mxu0
      %v1391 = vadd.f32 0.0, %v1390
      %v1392 = vpop.f32.mrf.mxu0
      %v1393 = vadd.f32 0.0, %v1392
      %1394 = vmatmul.bf16.gmra.mxu0 %v602
      %v1395 = vpop.f32.mrf.mxu0
      %v1396 = vadd.f32 0.0, %v1395
      %v1397 = vpop.f32.mrf.mxu0
      %v1398 = vadd.f32 0.0, %v1397
      %1399 = vmatmul.bf16.gmra.mxu0 %v603
      %v1400 = vpop.f32.mrf.mxu0
      %v1401 = vadd.f32 0.0, %v1400
      %v1402 = vpop.f32.mrf.mxu0
      %v1403 = vadd.f32 0.0, %v1402
      %1404 = vmatmul.bf16.gmra.mxu0 %v604
      %v1405 = vpop.f32.mrf.mxu0
      %v1406 = vadd.f32 0.0, %v1405
      %v1407 = vpop.f32.mrf.mxu0
      %v1408 = vadd.f32 0.0, %v1407
      %1409 = vmatmul.bf16.gmra.mxu0 %v1260
      %v1410 = vpop.f32.mrf.mxu0
      %v1411 = vadd.f32 0.0, %v1410
      %v1412 = vpop.f32.mrf.mxu0
      %v1413 = vadd.f32 0.0, %v1412
      %1414 = vdwg.mxu0
      %v1415 = vadd.f32 %v1219, %v1336
      %v1416 = vadd.f32 %v1220, %v1338
      %v1417 = vadd.f32 %v1221, %v1341
      %v1418 = vadd.f32 %v1222, %v1343
      %v1419 = vadd.f32 %v1223, %v1346
      %v1420 = vadd.f32 %v1224, %v1348
      %v1421 = vadd.f32 %v1225, %v1351
      %v1422 = vadd.f32 %v1226, %v1353
      %v1423 = vadd.f32 %v1227, %v1356
      %v1424 = vadd.f32 %v1228, %v1358
      %v1425 = vadd.f32 %v1229, %v1361
      %v1426 = vadd.f32 %v1230, %v1363
      %v1427 = vadd.f32 %v1231, %v1366
      %v1428 = vadd.f32 %v1232, %v1368
      %v1429 = vadd.f32 %v1233, %v1371
      %v1430 = vadd.f32 %v1234, %v1373
      %v1431 = vadd.f32 %v1235, %v1376
      %v1432 = vadd.f32 %v1236, %v1378
      %v1433 = vadd.f32 %v1237, %v1381
      %v1434 = vadd.f32 %v1238, %v1383
      %v1435 = vadd.f32 %v1239, %v1386
      %v1436 = vadd.f32 %v1240, %v1388
      %v1437 = vadd.f32 %v1241, %v1391
      %v1438 = vadd.f32 %v1242, %v1393
      %v1439 = vadd.f32 %v1243, %v1396
      %v1440 = vadd.f32 %v1244, %v1398
      %v1441 = vadd.f32 %v1245, %v1401
      %v1442 = vadd.f32 %v1246, %v1403
      %v1443 = vadd.f32 %v1247, %v1406
      %v1444 = vadd.f32 %v1248, %v1408
      %v1445 = vadd.f32 %v1249, %v1411
      %v1446 = vadd.f32 %v1250, %v1413
      %v1447 = vpack.c.bf16 %v430, %v429
      %s1448 = scalar_lea.vmem %s3, 256
      %v1449 = vld [vmem:[%s1448] sm:$0xf]
      %v1450 = vld [vmem:[%s1448 + $0x4] sm:$0xf]
      %v1451 = vld [vmem:[%s1448 + $0x8] sm:$0xf]
      %v1452 = vld [vmem:[%s1448 + $0xc] sm:$0xf]
      %v1453 = vld [vmem:[%s1448 + $0x10] sm:$0xf]
      %v1454 = vld [vmem:[%s1448 + $0x14] sm:$0xf]
      %v1455 = vld [vmem:[%s1448 + $0x18] sm:$0xf]
      %v1456 = vld [vmem:[%s1448 + $0x1c] sm:$0xf]
      %v1457 = vld [vmem:[%s1448 + $0x20] sm:$0xf]
      %v1458 = vld [vmem:[%s1448 + $0x24] sm:$0xf]
      %v1459 = vld [vmem:[%s1448 + $0x28] sm:$0xf]
      %v1460 = vld [vmem:[%s1448 + $0x2c] sm:$0xf]
      %v1461 = vld [vmem:[%s1448 + $0x30] sm:$0xf]
      %v1462 = vld [vmem:[%s1448 + $0x34] sm:$0xf]
      %v1463 = vld [vmem:[%s1448 + $0x38] sm:$0xf]
      %v1464 = vld [vmem:[%s1448 + $0x3c] sm:$0xf]
      %v1481 = vunpack.c.l.b16 %v1449
      %v1482 = vunpack.c.l.b16 %v1450
      %v1483 = vunpack.c.l.b16 %v1451
      %v1484 = vunpack.c.l.b16 %v1452
      %v1485 = vunpack.c.l.b16 %v1453
      %v1486 = vunpack.c.l.b16 %v1454
      %v1487 = vunpack.c.l.b16 %v1455
      %v1488 = vunpack.c.l.b16 %v1456
      %v1489 = vunpack.c.l.b16 %v1457
      %v1490 = vunpack.c.l.b16 %v1458
      %v1491 = vunpack.c.l.b16 %v1459
      %v1492 = vunpack.c.l.b16 %v1460
      %v1493 = vunpack.c.l.b16 %v1461
      %v1494 = vunpack.c.l.b16 %v1462
      %v1495 = vunpack.c.l.b16 %v1463
      %v1496 = vunpack.c.l.b16 %v1464
      %v1497 = vpack.c.b16 %v1482, %v1481
      %v1498 = vpack.c.b16 %v1484, %v1483
      %v1499 = vpack.c.b16 %v1486, %v1485
      %v1500 = vpack.c.b16 %v1488, %v1487
      %v1501 = vpack.c.b16 %v1490, %v1489
      %v1502 = vpack.c.b16 %v1492, %v1491
      %v1503 = vpack.c.b16 %v1494, %v1493
      %v1504 = vpack.c.b16 %v1496, %v1495
      %1513 = vmatpush.bf16.msra.mxu0 %v1504
      %1514 = vmatpush.bf16.msra.mxu0 %v1503
      %1515 = vmatpush.bf16.msra.mxu0 %v1502
      %1516 = vmatpush.bf16.msra.mxu0 %v1501
      %1517 = vmatpush.bf16.msra.mxu0 %v1500
      %1518 = vmatpush.bf16.msra.mxu0 %v1499
      %1519 = vmatpush.bf16.msra.mxu0 %v1498
      %1520 = vmatpush.bf16.msra.mxu0 %v1497
      %1521 = vmatmul.bf16.gmra.mxu0 %v621
      %v1522 = vpop.f32.mrf.mxu0
      %v1523 = vadd.f32 0.0, %v1522
      %v1524 = vpop.f32.mrf.mxu0
      %v1525 = vadd.f32 0.0, %v1524
      %1526 = vmatmul.bf16.gmra.mxu0 %v622
      %v1527 = vpop.f32.mrf.mxu0
      %v1528 = vadd.f32 0.0, %v1527
      %v1529 = vpop.f32.mrf.mxu0
      %v1530 = vadd.f32 0.0, %v1529
      %1531 = vmatmul.bf16.gmra.mxu0 %v623
      %v1532 = vpop.f32.mrf.mxu0
      %v1533 = vadd.f32 0.0, %v1532
      %v1534 = vpop.f32.mrf.mxu0
      %v1535 = vadd.f32 0.0, %v1534
      %1536 = vmatmul.bf16.gmra.mxu0 %v624
      %v1537 = vpop.f32.mrf.mxu0
      %v1538 = vadd.f32 0.0, %v1537
      %v1539 = vpop.f32.mrf.mxu0
      %v1540 = vadd.f32 0.0, %v1539
      %1541 = vmatmul.bf16.gmra.mxu0 %v625
      %v1542 = vpop.f32.mrf.mxu0
      %v1543 = vadd.f32 0.0, %v1542
      %v1544 = vpop.f32.mrf.mxu0
      %v1545 = vadd.f32 0.0, %v1544
      %1546 = vmatmul.bf16.gmra.mxu0 %v626
      %v1547 = vpop.f32.mrf.mxu0
      %v1548 = vadd.f32 0.0, %v1547
      %v1549 = vpop.f32.mrf.mxu0
      %v1550 = vadd.f32 0.0, %v1549
      %1551 = vmatmul.bf16.gmra.mxu0 %v627
      %v1552 = vpop.f32.mrf.mxu0
      %v1553 = vadd.f32 0.0, %v1552
      %v1554 = vpop.f32.mrf.mxu0
      %v1555 = vadd.f32 0.0, %v1554
      %1556 = vmatmul.bf16.gmra.mxu0 %v628
      %v1557 = vpop.f32.mrf.mxu0
      %v1558 = vadd.f32 0.0, %v1557
      %v1559 = vpop.f32.mrf.mxu0
      %v1560 = vadd.f32 0.0, %v1559
      %1561 = vmatmul.bf16.gmra.mxu0 %v629
      %v1562 = vpop.f32.mrf.mxu0
      %v1563 = vadd.f32 0.0, %v1562
      %v1564 = vpop.f32.mrf.mxu0
      %v1565 = vadd.f32 0.0, %v1564
      %1566 = vmatmul.bf16.gmra.mxu0 %v630
      %v1567 = vpop.f32.mrf.mxu0
      %v1568 = vadd.f32 0.0, %v1567
      %v1569 = vpop.f32.mrf.mxu0
      %v1570 = vadd.f32 0.0, %v1569
      %1571 = vmatmul.bf16.gmra.mxu0 %v631
      %v1572 = vpop.f32.mrf.mxu0
      %v1573 = vadd.f32 0.0, %v1572
      %v1574 = vpop.f32.mrf.mxu0
      %v1575 = vadd.f32 0.0, %v1574
      %1576 = vmatmul.bf16.gmra.mxu0 %v632
      %v1577 = vpop.f32.mrf.mxu0
      %v1578 = vadd.f32 0.0, %v1577
      %v1579 = vpop.f32.mrf.mxu0
      %v1580 = vadd.f32 0.0, %v1579
      %1581 = vmatmul.bf16.gmra.mxu0 %v633
      %v1582 = vpop.f32.mrf.mxu0
      %v1583 = vadd.f32 0.0, %v1582
      %v1584 = vpop.f32.mrf.mxu0
      %v1585 = vadd.f32 0.0, %v1584
      %1586 = vmatmul.bf16.gmra.mxu0 %v634
      %v1587 = vpop.f32.mrf.mxu0
      %v1588 = vadd.f32 0.0, %v1587
      %v1589 = vpop.f32.mrf.mxu0
      %v1590 = vadd.f32 0.0, %v1589
      %1591 = vmatmul.bf16.gmra.mxu0 %v635
      %v1592 = vpop.f32.mrf.mxu0
      %v1593 = vadd.f32 0.0, %v1592
      %v1594 = vpop.f32.mrf.mxu0
      %v1595 = vadd.f32 0.0, %v1594
      %1596 = vmatmul.bf16.gmra.mxu0 %v1447
      %v1597 = vpop.f32.mrf.mxu0
      %v1598 = vadd.f32 0.0, %v1597
      %v1599 = vpop.f32.mrf.mxu0
      %v1600 = vadd.f32 0.0, %v1599
      %1601 = vdwg.mxu0
      %v1602 = vadd.f32 %v1415, %v1523
      %v1603 = vadd.f32 %v1416, %v1525
      %v1604 = vadd.f32 %v1417, %v1528
      %v1605 = vadd.f32 %v1418, %v1530
      %v1606 = vadd.f32 %v1419, %v1533
      %v1607 = vadd.f32 %v1420, %v1535
      %v1608 = vadd.f32 %v1421, %v1538
      %v1609 = vadd.f32 %v1422, %v1540
      %v1610 = vadd.f32 %v1423, %v1543
      %v1611 = vadd.f32 %v1424, %v1545
      %v1612 = vadd.f32 %v1425, %v1548
      %v1613 = vadd.f32 %v1426, %v1550
      %v1614 = vadd.f32 %v1427, %v1553
      %v1615 = vadd.f32 %v1428, %v1555
      %v1616 = vadd.f32 %v1429, %v1558
      %v1617 = vadd.f32 %v1430, %v1560
      %v1618 = vadd.f32 %v1431, %v1563
      %v1619 = vadd.f32 %v1432, %v1565
      %v1620 = vadd.f32 %v1433, %v1568
      %v1621 = vadd.f32 %v1434, %v1570
      %v1622 = vadd.f32 %v1435, %v1573
      %v1623 = vadd.f32 %v1436, %v1575
      %v1624 = vadd.f32 %v1437, %v1578
      %v1625 = vadd.f32 %v1438, %v1580
      %v1626 = vadd.f32 %v1439, %v1583
      %v1627 = vadd.f32 %v1440, %v1585
      %v1628 = vadd.f32 %v1441, %v1588
      %v1629 = vadd.f32 %v1442, %v1590
      %v1630 = vadd.f32 %v1443, %v1593
      %v1631 = vadd.f32 %v1444, %v1595
      %v1632 = vadd.f32 %v1445, %v1598
      %v1633 = vadd.f32 %v1446, %v1600
      %v1634 = vrot.slane %v430, 1
      %v1635 = vsel %vm928, %v988, %v1634
      %v1638 = vsel %vm928, %v1634, 0.0
      %v1639 = vsel %vm436, %v1635, 0.0
      %v1640 = vsel %vm437, %v1638, 0.0
      %v1641 = vpack.c.bf16 %v1640, %v1639
      %s1642 = scalar_lea.vmem %s3, 320
      %v1643 = vld [vmem:[%s1642] sm:$0xf]
      %v1644 = vld [vmem:[%s1642 + $0x4] sm:$0xf]
      %v1645 = vld [vmem:[%s1642 + $0x8] sm:$0xf]
      %v1646 = vld [vmem:[%s1642 + $0xc] sm:$0xf]
      %v1647 = vld [vmem:[%s1642 + $0x10] sm:$0xf]
      %v1648 = vld [vmem:[%s1642 + $0x14] sm:$0xf]
      %v1649 = vld [vmem:[%s1642 + $0x18] sm:$0xf]
      %v1650 = vld [vmem:[%s1642 + $0x1c] sm:$0xf]
      %v1651 = vld [vmem:[%s1642 + $0x20] sm:$0xf]
      %v1652 = vld [vmem:[%s1642 + $0x24] sm:$0xf]
      %v1653 = vld [vmem:[%s1642 + $0x28] sm:$0xf]
      %v1654 = vld [vmem:[%s1642 + $0x2c] sm:$0xf]
      %v1655 = vld [vmem:[%s1642 + $0x30] sm:$0xf]
      %v1656 = vld [vmem:[%s1642 + $0x34] sm:$0xf]
      %v1657 = vld [vmem:[%s1642 + $0x38] sm:$0xf]
      %v1658 = vld [vmem:[%s1642 + $0x3c] sm:$0xf]
      %v1675 = vunpack.c.l.b16 %v1643
      %v1676 = vunpack.c.l.b16 %v1644
      %v1677 = vunpack.c.l.b16 %v1645
      %v1678 = vunpack.c.l.b16 %v1646
      %v1679 = vunpack.c.l.b16 %v1647
      %v1680 = vunpack.c.l.b16 %v1648
      %v1681 = vunpack.c.l.b16 %v1649
      %v1682 = vunpack.c.l.b16 %v1650
      %v1683 = vunpack.c.l.b16 %v1651
      %v1684 = vunpack.c.l.b16 %v1652
      %v1685 = vunpack.c.l.b16 %v1653
      %v1686 = vunpack.c.l.b16 %v1654
      %v1687 = vunpack.c.l.b16 %v1655
      %v1688 = vunpack.c.l.b16 %v1656
      %v1689 = vunpack.c.l.b16 %v1657
      %v1690 = vunpack.c.l.b16 %v1658
      %v1691 = vpack.c.b16 %v1676, %v1675
      %v1692 = vpack.c.b16 %v1678, %v1677
      %v1693 = vpack.c.b16 %v1680, %v1679
      %v1694 = vpack.c.b16 %v1682, %v1681
      %v1695 = vpack.c.b16 %v1684, %v1683
      %v1696 = vpack.c.b16 %v1686, %v1685
      %v1697 = vpack.c.b16 %v1688, %v1687
      %v1698 = vpack.c.b16 %v1690, %v1689
      %1707 = vmatpush.bf16.msra.mxu0 %v1698
      %1708 = vmatpush.bf16.msra.mxu0 %v1697
      %1709 = vmatpush.bf16.msra.mxu0 %v1696
      %1710 = vmatpush.bf16.msra.mxu0 %v1695
      %1711 = vmatpush.bf16.msra.mxu0 %v1694
      %1712 = vmatpush.bf16.msra.mxu0 %v1693
      %1713 = vmatpush.bf16.msra.mxu0 %v1692
      %1714 = vmatpush.bf16.msra.mxu0 %v1691
      %1715 = vmatmul.bf16.gmra.mxu0 %v1050
      %v1716 = vpop.f32.mrf.mxu0
      %v1717 = vadd.f32 0.0, %v1716
      %v1718 = vpop.f32.mrf.mxu0
      %v1719 = vadd.f32 0.0, %v1718
      %1720 = vmatmul.bf16.gmra.mxu0 %v1051
      %v1721 = vpop.f32.mrf.mxu0
      %v1722 = vadd.f32 0.0, %v1721
      %v1723 = vpop.f32.mrf.mxu0
      %v1724 = vadd.f32 0.0, %v1723
      %1725 = vmatmul.bf16.gmra.mxu0 %v1052
      %v1726 = vpop.f32.mrf.mxu0
      %v1727 = vadd.f32 0.0, %v1726
      %v1728 = vpop.f32.mrf.mxu0
      %v1729 = vadd.f32 0.0, %v1728
      %1730 = vmatmul.bf16.gmra.mxu0 %v1053
      %v1731 = vpop.f32.mrf.mxu0
      %v1732 = vadd.f32 0.0, %v1731
      %v1733 = vpop.f32.mrf.mxu0
      %v1734 = vadd.f32 0.0, %v1733
      %1735 = vmatmul.bf16.gmra.mxu0 %v1054
      %v1736 = vpop.f32.mrf.mxu0
      %v1737 = vadd.f32 0.0, %v1736
      %v1738 = vpop.f32.mrf.mxu0
      %v1739 = vadd.f32 0.0, %v1738
      %1740 = vmatmul.bf16.gmra.mxu0 %v1055
      %v1741 = vpop.f32.mrf.mxu0
      %v1742 = vadd.f32 0.0, %v1741
      %v1743 = vpop.f32.mrf.mxu0
      %v1744 = vadd.f32 0.0, %v1743
      %1745 = vmatmul.bf16.gmra.mxu0 %v1056
      %v1746 = vpop.f32.mrf.mxu0
      %v1747 = vadd.f32 0.0, %v1746
      %v1748 = vpop.f32.mrf.mxu0
      %v1749 = vadd.f32 0.0, %v1748
      %1750 = vmatmul.bf16.gmra.mxu0 %v1057
      %v1751 = vpop.f32.mrf.mxu0
      %v1752 = vadd.f32 0.0, %v1751
      %v1753 = vpop.f32.mrf.mxu0
      %v1754 = vadd.f32 0.0, %v1753
      %1755 = vmatmul.bf16.gmra.mxu0 %v1058
      %v1756 = vpop.f32.mrf.mxu0
      %v1757 = vadd.f32 0.0, %v1756
      %v1758 = vpop.f32.mrf.mxu0
      %v1759 = vadd.f32 0.0, %v1758
      %1760 = vmatmul.bf16.gmra.mxu0 %v1059
      %v1761 = vpop.f32.mrf.mxu0
      %v1762 = vadd.f32 0.0, %v1761
      %v1763 = vpop.f32.mrf.mxu0
      %v1764 = vadd.f32 0.0, %v1763
      %1765 = vmatmul.bf16.gmra.mxu0 %v1060
      %v1766 = vpop.f32.mrf.mxu0
      %v1767 = vadd.f32 0.0, %v1766
      %v1768 = vpop.f32.mrf.mxu0
      %v1769 = vadd.f32 0.0, %v1768
      %1770 = vmatmul.bf16.gmra.mxu0 %v1061
      %v1771 = vpop.f32.mrf.mxu0
      %v1772 = vadd.f32 0.0, %v1771
      %v1773 = vpop.f32.mrf.mxu0
      %v1774 = vadd.f32 0.0, %v1773
      %1775 = vmatmul.bf16.gmra.mxu0 %v1062
      %v1776 = vpop.f32.mrf.mxu0
      %v1777 = vadd.f32 0.0, %v1776
      %v1778 = vpop.f32.mrf.mxu0
      %v1779 = vadd.f32 0.0, %v1778
      %1780 = vmatmul.bf16.gmra.mxu0 %v1063
      %v1781 = vpop.f32.mrf.mxu0
      %v1782 = vadd.f32 0.0, %v1781
      %v1783 = vpop.f32.mrf.mxu0
      %v1784 = vadd.f32 0.0, %v1783
      %1785 = vmatmul.bf16.gmra.mxu0 %v1064
      %v1786 = vpop.f32.mrf.mxu0
      %v1787 = vadd.f32 0.0, %v1786
      %v1788 = vpop.f32.mrf.mxu0
      %v1789 = vadd.f32 0.0, %v1788
      %1790 = vmatmul.bf16.gmra.mxu0 %v1641
      %v1791 = vpop.f32.mrf.mxu0
      %v1792 = vadd.f32 0.0, %v1791
      %v1793 = vpop.f32.mrf.mxu0
      %v1794 = vadd.f32 0.0, %v1793
      %1795 = vdwg.mxu0
      %v1796 = vadd.f32 %v1602, %v1717
      %v1797 = vadd.f32 %v1603, %v1719
      %v1798 = vadd.f32 %v1604, %v1722
      %v1799 = vadd.f32 %v1605, %v1724
      %v1800 = vadd.f32 %v1606, %v1727
      %v1801 = vadd.f32 %v1607, %v1729
      %v1802 = vadd.f32 %v1608, %v1732
      %v1803 = vadd.f32 %v1609, %v1734
      %v1804 = vadd.f32 %v1610, %v1737
      %v1805 = vadd.f32 %v1611, %v1739
      %v1806 = vadd.f32 %v1612, %v1742
      %v1807 = vadd.f32 %v1613, %v1744
      %v1808 = vadd.f32 %v1614, %v1747
      %v1809 = vadd.f32 %v1615, %v1749
      %v1810 = vadd.f32 %v1616, %v1752
      %v1811 = vadd.f32 %v1617, %v1754
      %v1812 = vadd.f32 %v1618, %v1757
      %v1813 = vadd.f32 %v1619, %v1759
      %v1814 = vadd.f32 %v1620, %v1762
      %v1815 = vadd.f32 %v1621, %v1764
      %v1816 = vadd.f32 %v1622, %v1767
      %v1817 = vadd.f32 %v1623, %v1769
      %v1818 = vadd.f32 %v1624, %v1772
      %v1819 = vadd.f32 %v1625, %v1774
      %v1820 = vadd.f32 %v1626, %v1777
      %v1821 = vadd.f32 %v1627, %v1779
      %v1822 = vadd.f32 %v1628, %v1782
      %v1823 = vadd.f32 %v1629, %v1784
      %v1824 = vadd.f32 %v1630, %v1787
      %v1825 = vadd.f32 %v1631, %v1789
      %v1826 = vadd.f32 %v1632, %v1792
      %v1827 = vadd.f32 %v1633, %v1794
      %s1828 = scalar_lea.vmem %s3, 384
      %v1829 = vld [vmem:[%s1828] sm:$0xf]
      %v1830 = vld [vmem:[%s1828 + $0x4] sm:$0xf]
      %v1831 = vld [vmem:[%s1828 + $0x8] sm:$0xf]
      %v1832 = vld [vmem:[%s1828 + $0xc] sm:$0xf]
      %v1833 = vld [vmem:[%s1828 + $0x10] sm:$0xf]
      %v1834 = vld [vmem:[%s1828 + $0x14] sm:$0xf]
      %v1835 = vld [vmem:[%s1828 + $0x18] sm:$0xf]
      %v1836 = vld [vmem:[%s1828 + $0x1c] sm:$0xf]
      %v1837 = vld [vmem:[%s1828 + $0x20] sm:$0xf]
      %v1838 = vld [vmem:[%s1828 + $0x24] sm:$0xf]
      %v1839 = vld [vmem:[%s1828 + $0x28] sm:$0xf]
      %v1840 = vld [vmem:[%s1828 + $0x2c] sm:$0xf]
      %v1841 = vld [vmem:[%s1828 + $0x30] sm:$0xf]
      %v1842 = vld [vmem:[%s1828 + $0x34] sm:$0xf]
      %v1843 = vld [vmem:[%s1828 + $0x38] sm:$0xf]
      %v1844 = vld [vmem:[%s1828 + $0x3c] sm:$0xf]
      %v1861 = vunpack.c.l.b16 %v1829
      %v1862 = vunpack.c.l.b16 %v1830
      %v1863 = vunpack.c.l.b16 %v1831
      %v1864 = vunpack.c.l.b16 %v1832
      %v1865 = vunpack.c.l.b16 %v1833
      %v1866 = vunpack.c.l.b16 %v1834
      %v1867 = vunpack.c.l.b16 %v1835
      %v1868 = vunpack.c.l.b16 %v1836
      %v1869 = vunpack.c.l.b16 %v1837
      %v1870 = vunpack.c.l.b16 %v1838
      %v1871 = vunpack.c.l.b16 %v1839
      %v1872 = vunpack.c.l.b16 %v1840
      %v1873 = vunpack.c.l.b16 %v1841
      %v1874 = vunpack.c.l.b16 %v1842
      %v1875 = vunpack.c.l.b16 %v1843
      %v1876 = vunpack.c.l.b16 %v1844
      %v1877 = vpack.c.b16 %v1862, %v1861
      %v1878 = vpack.c.b16 %v1864, %v1863
      %v1879 = vpack.c.b16 %v1866, %v1865
      %v1880 = vpack.c.b16 %v1868, %v1867
      %v1881 = vpack.c.b16 %v1870, %v1869
      %v1882 = vpack.c.b16 %v1872, %v1871
      %v1883 = vpack.c.b16 %v1874, %v1873
      %v1884 = vpack.c.b16 %v1876, %v1875
      %1893 = vmatpush.bf16.msra.mxu0 %v1884
      %1894 = vmatpush.bf16.msra.mxu0 %v1883
      %1895 = vmatpush.bf16.msra.mxu0 %v1882
      %1896 = vmatpush.bf16.msra.mxu0 %v1881
      %1897 = vmatpush.bf16.msra.mxu0 %v1880
      %1898 = vmatpush.bf16.msra.mxu0 %v1879
      %1899 = vmatpush.bf16.msra.mxu0 %v1878
      %1900 = vmatpush.bf16.msra.mxu0 %v1877
      %1901 = vmatmul.bf16.gmra.mxu0 %v591
      %v1902 = vpop.f32.mrf.mxu0
      %v1903 = vadd.f32 0.0, %v1902
      %v1904 = vpop.f32.mrf.mxu0
      %v1905 = vadd.f32 0.0, %v1904
      %1906 = vmatmul.bf16.gmra.mxu0 %v592
      %v1907 = vpop.f32.mrf.mxu0
      %v1908 = vadd.f32 0.0, %v1907
      %v1909 = vpop.f32.mrf.mxu0
      %v1910 = vadd.f32 0.0, %v1909
      %1911 = vmatmul.bf16.gmra.mxu0 %v593
      %v1912 = vpop.f32.mrf.mxu0
      %v1913 = vadd.f32 0.0, %v1912
      %v1914 = vpop.f32.mrf.mxu0
      %v1915 = vadd.f32 0.0, %v1914
      %1916 = vmatmul.bf16.gmra.mxu0 %v594
      %v1917 = vpop.f32.mrf.mxu0
      %v1918 = vadd.f32 0.0, %v1917
      %v1919 = vpop.f32.mrf.mxu0
      %v1920 = vadd.f32 0.0, %v1919
      %1921 = vmatmul.bf16.gmra.mxu0 %v595
      %v1922 = vpop.f32.mrf.mxu0
      %v1923 = vadd.f32 0.0, %v1922
      %v1924 = vpop.f32.mrf.mxu0
      %v1925 = vadd.f32 0.0, %v1924
      %1926 = vmatmul.bf16.gmra.mxu0 %v596
      %v1927 = vpop.f32.mrf.mxu0
      %v1928 = vadd.f32 0.0, %v1927
      %v1929 = vpop.f32.mrf.mxu0
      %v1930 = vadd.f32 0.0, %v1929
      %1931 = vmatmul.bf16.gmra.mxu0 %v597
      %v1932 = vpop.f32.mrf.mxu0
      %v1933 = vadd.f32 0.0, %v1932
      %v1934 = vpop.f32.mrf.mxu0
      %v1935 = vadd.f32 0.0, %v1934
      %1936 = vmatmul.bf16.gmra.mxu0 %v598
      %v1937 = vpop.f32.mrf.mxu0
      %v1938 = vadd.f32 0.0, %v1937
      %v1939 = vpop.f32.mrf.mxu0
      %v1940 = vadd.f32 0.0, %v1939
      %1941 = vmatmul.bf16.gmra.mxu0 %v599
      %v1942 = vpop.f32.mrf.mxu0
      %v1943 = vadd.f32 0.0, %v1942
      %v1944 = vpop.f32.mrf.mxu0
      %v1945 = vadd.f32 0.0, %v1944
      %1946 = vmatmul.bf16.gmra.mxu0 %v600
      %v1947 = vpop.f32.mrf.mxu0
      %v1948 = vadd.f32 0.0, %v1947
      %v1949 = vpop.f32.mrf.mxu0
      %v1950 = vadd.f32 0.0, %v1949
      %1951 = vmatmul.bf16.gmra.mxu0 %v601
      %v1952 = vpop.f32.mrf.mxu0
      %v1953 = vadd.f32 0.0, %v1952
      %v1954 = vpop.f32.mrf.mxu0
      %v1955 = vadd.f32 0.0, %v1954
      %1956 = vmatmul.bf16.gmra.mxu0 %v602
      %v1957 = vpop.f32.mrf.mxu0
      %v1958 = vadd.f32 0.0, %v1957
      %v1959 = vpop.f32.mrf.mxu0
      %v1960 = vadd.f32 0.0, %v1959
      %1961 = vmatmul.bf16.gmra.mxu0 %v603
      %v1962 = vpop.f32.mrf.mxu0
      %v1963 = vadd.f32 0.0, %v1962
      %v1964 = vpop.f32.mrf.mxu0
      %v1965 = vadd.f32 0.0, %v1964
      %1966 = vmatmul.bf16.gmra.mxu0 %v604
      %v1967 = vpop.f32.mrf.mxu0
      %v1968 = vadd.f32 0.0, %v1967
      %v1969 = vpop.f32.mrf.mxu0
      %v1970 = vadd.f32 0.0, %v1969
      %1971 = vmatmul.bf16.gmra.mxu0 %v1260
      %v1972 = vpop.f32.mrf.mxu0
      %v1973 = vadd.f32 0.0, %v1972
      %v1974 = vpop.f32.mrf.mxu0
      %v1975 = vadd.f32 0.0, %v1974
      %1976 = vmatmul.bf16.gmra.mxu0 %v589
      %v1977 = vpop.f32.mrf.mxu0
      %v1978 = vadd.f32 0.0, %v1977
      %v1979 = vpop.f32.mrf.mxu0
      %v1980 = vadd.f32 0.0, %v1979
      %1981 = vdwg.mxu0
      %v1982 = vadd.f32 %v1796, %v1903
      %v1983 = vadd.f32 %v1797, %v1905
      %v1984 = vadd.f32 %v1798, %v1908
      %v1985 = vadd.f32 %v1799, %v1910
      %v1986 = vadd.f32 %v1800, %v1913
      %v1987 = vadd.f32 %v1801, %v1915
      %v1988 = vadd.f32 %v1802, %v1918
      %v1989 = vadd.f32 %v1803, %v1920
      %v1990 = vadd.f32 %v1804, %v1923
      %v1991 = vadd.f32 %v1805, %v1925
      %v1992 = vadd.f32 %v1806, %v1928
      %v1993 = vadd.f32 %v1807, %v1930
      %v1994 = vadd.f32 %v1808, %v1933
      %v1995 = vadd.f32 %v1809, %v1935
      %v1996 = vadd.f32 %v1810, %v1938
      %v1997 = vadd.f32 %v1811, %v1940
      %v1998 = vadd.f32 %v1812, %v1943
      %v1999 = vadd.f32 %v1813, %v1945
      %v2000 = vadd.f32 %v1814, %v1948
      %v2001 = vadd.f32 %v1815, %v1950
      %v2002 = vadd.f32 %v1816, %v1953
      %v2003 = vadd.f32 %v1817, %v1955
      %v2004 = vadd.f32 %v1818, %v1958
      %v2005 = vadd.f32 %v1819, %v1960
      %v2006 = vadd.f32 %v1820, %v1963
      %v2007 = vadd.f32 %v1821, %v1965
      %v2008 = vadd.f32 %v1822, %v1968
      %v2009 = vadd.f32 %v1823, %v1970
      %v2010 = vadd.f32 %v1824, %v1973
      %v2011 = vadd.f32 %v1825, %v1975
      %v2012 = vadd.f32 %v1826, %v1978
      %v2013 = vadd.f32 %v1827, %v1980
      %s2014 = scalar_lea.vmem %s3, 448
      %v2015 = vld [vmem:[%s2014] sm:$0xf]
      %v2016 = vld [vmem:[%s2014 + $0x4] sm:$0xf]
      %v2017 = vld [vmem:[%s2014 + $0x8] sm:$0xf]
      %v2018 = vld [vmem:[%s2014 + $0xc] sm:$0xf]
      %v2019 = vld [vmem:[%s2014 + $0x10] sm:$0xf]
      %v2020 = vld [vmem:[%s2014 + $0x14] sm:$0xf]
      %v2021 = vld [vmem:[%s2014 + $0x18] sm:$0xf]
      %v2022 = vld [vmem:[%s2014 + $0x1c] sm:$0xf]
      %v2023 = vld [vmem:[%s2014 + $0x20] sm:$0xf]
      %v2024 = vld [vmem:[%s2014 + $0x24] sm:$0xf]
      %v2025 = vld [vmem:[%s2014 + $0x28] sm:$0xf]
      %v2026 = vld [vmem:[%s2014 + $0x2c] sm:$0xf]
      %v2027 = vld [vmem:[%s2014 + $0x30] sm:$0xf]
      %v2028 = vld [vmem:[%s2014 + $0x34] sm:$0xf]
      %v2029 = vld [vmem:[%s2014 + $0x38] sm:$0xf]
      %v2030 = vld [vmem:[%s2014 + $0x3c] sm:$0xf]
      %v2047 = vunpack.c.l.b16 %v2015
      %v2048 = vunpack.c.l.b16 %v2016
      %v2049 = vunpack.c.l.b16 %v2017
      %v2050 = vunpack.c.l.b16 %v2018
      %v2051 = vunpack.c.l.b16 %v2019
      %v2052 = vunpack.c.l.b16 %v2020
      %v2053 = vunpack.c.l.b16 %v2021
      %v2054 = vunpack.c.l.b16 %v2022
      %v2055 = vunpack.c.l.b16 %v2023
      %v2056 = vunpack.c.l.b16 %v2024
      %v2057 = vunpack.c.l.b16 %v2025
      %v2058 = vunpack.c.l.b16 %v2026
      %v2059 = vunpack.c.l.b16 %v2027
      %v2060 = vunpack.c.l.b16 %v2028
      %v2061 = vunpack.c.l.b16 %v2029
      %v2062 = vunpack.c.l.b16 %v2030
      %v2063 = vpack.c.b16 %v2048, %v2047
      %v2064 = vpack.c.b16 %v2050, %v2049
      %v2065 = vpack.c.b16 %v2052, %v2051
      %v2066 = vpack.c.b16 %v2054, %v2053
      %v2067 = vpack.c.b16 %v2056, %v2055
      %v2068 = vpack.c.b16 %v2058, %v2057
      %v2069 = vpack.c.b16 %v2060, %v2059
      %v2070 = vpack.c.b16 %v2062, %v2061
      %2079 = vmatpush.bf16.msra.mxu0 %v2070
      %2080 = vmatpush.bf16.msra.mxu0 %v2069
      %2081 = vmatpush.bf16.msra.mxu0 %v2068
      %2082 = vmatpush.bf16.msra.mxu0 %v2067
      %2083 = vmatpush.bf16.msra.mxu0 %v2066
      %2084 = vmatpush.bf16.msra.mxu0 %v2065
      %2085 = vmatpush.bf16.msra.mxu0 %v2064
      %2086 = vmatpush.bf16.msra.mxu0 %v2063
      %2087 = vmatmul.bf16.gmra.mxu0 %v622
      %v2088 = vpop.f32.mrf.mxu0
      %v2089 = vadd.f32 0.0, %v2088
      %v2090 = vpop.f32.mrf.mxu0
      %v2091 = vadd.f32 0.0, %v2090
      %2092 = vmatmul.bf16.gmra.mxu0 %v623
      %v2093 = vpop.f32.mrf.mxu0
      %v2094 = vadd.f32 0.0, %v2093
      %v2095 = vpop.f32.mrf.mxu0
      %v2096 = vadd.f32 0.0, %v2095
      %2097 = vmatmul.bf16.gmra.mxu0 %v624
      %v2098 = vpop.f32.mrf.mxu0
      %v2099 = vadd.f32 0.0, %v2098
      %v2100 = vpop.f32.mrf.mxu0
      %v2101 = vadd.f32 0.0, %v2100
      %2102 = vmatmul.bf16.gmra.mxu0 %v625
      %v2103 = vpop.f32.mrf.mxu0
      %v2104 = vadd.f32 0.0, %v2103
      %v2105 = vpop.f32.mrf.mxu0
      %v2106 = vadd.f32 0.0, %v2105
      %2107 = vmatmul.bf16.gmra.mxu0 %v626
      %v2108 = vpop.f32.mrf.mxu0
      %v2109 = vadd.f32 0.0, %v2108
      %v2110 = vpop.f32.mrf.mxu0
      %v2111 = vadd.f32 0.0, %v2110
      %2112 = vmatmul.bf16.gmra.mxu0 %v627
      %v2113 = vpop.f32.mrf.mxu0
      %v2114 = vadd.f32 0.0, %v2113
      %v2115 = vpop.f32.mrf.mxu0
      %v2116 = vadd.f32 0.0, %v2115
      %2117 = vmatmul.bf16.gmra.mxu0 %v628
      %v2118 = vpop.f32.mrf.mxu0
      %v2119 = vadd.f32 0.0, %v2118
      %v2120 = vpop.f32.mrf.mxu0
      %v2121 = vadd.f32 0.0, %v2120
      %2122 = vmatmul.bf16.gmra.mxu0 %v629
      %v2123 = vpop.f32.mrf.mxu0
      %v2124 = vadd.f32 0.0, %v2123
      %v2125 = vpop.f32.mrf.mxu0
      %v2126 = vadd.f32 0.0, %v2125
      %2127 = vmatmul.bf16.gmra.mxu0 %v630
      %v2128 = vpop.f32.mrf.mxu0
      %v2129 = vadd.f32 0.0, %v2128
      %v2130 = vpop.f32.mrf.mxu0
      %v2131 = vadd.f32 0.0, %v2130
      %2132 = vmatmul.bf16.gmra.mxu0 %v631
      %v2133 = vpop.f32.mrf.mxu0
      %v2134 = vadd.f32 0.0, %v2133
      %v2135 = vpop.f32.mrf.mxu0
      %v2136 = vadd.f32 0.0, %v2135
      %2137 = vmatmul.bf16.gmra.mxu0 %v632
      %v2138 = vpop.f32.mrf.mxu0
      %v2139 = vadd.f32 0.0, %v2138
      %v2140 = vpop.f32.mrf.mxu0
      %v2141 = vadd.f32 0.0, %v2140
      %2142 = vmatmul.bf16.gmra.mxu0 %v633
      %v2143 = vpop.f32.mrf.mxu0
      %v2144 = vadd.f32 0.0, %v2143
      %v2145 = vpop.f32.mrf.mxu0
      %v2146 = vadd.f32 0.0, %v2145
      %2147 = vmatmul.bf16.gmra.mxu0 %v634
      %v2148 = vpop.f32.mrf.mxu0
      %v2149 = vadd.f32 0.0, %v2148
      %v2150 = vpop.f32.mrf.mxu0
      %v2151 = vadd.f32 0.0, %v2150
      %2152 = vmatmul.bf16.gmra.mxu0 %v635
      %v2153 = vpop.f32.mrf.mxu0
      %v2154 = vadd.f32 0.0, %v2153
      %v2155 = vpop.f32.mrf.mxu0
      %v2156 = vadd.f32 0.0, %v2155
      %2157 = vmatmul.bf16.gmra.mxu0 %v1447
      %v2158 = vpop.f32.mrf.mxu0
      %v2159 = vadd.f32 0.0, %v2158
      %v2160 = vpop.f32.mrf.mxu0
      %v2161 = vadd.f32 0.0, %v2160
      %2162 = vmatmul.bf16.gmra.mxu0 %v589
      %v2163 = vpop.f32.mrf.mxu0
      %v2164 = vadd.f32 0.0, %v2163
      %v2165 = vpop.f32.mrf.mxu0
      %v2166 = vadd.f32 0.0, %v2165
      %2167 = vdwg.mxu0
      %v2168 = vadd.f32 %v1982, %v2089
      %v2169 = vadd.f32 %v1983, %v2091
      %v2170 = vadd.f32 %v1984, %v2094
      %v2171 = vadd.f32 %v1985, %v2096
      %v2172 = vadd.f32 %v1986, %v2099
      %v2173 = vadd.f32 %v1987, %v2101
      %v2174 = vadd.f32 %v1988, %v2104
      %v2175 = vadd.f32 %v1989, %v2106
      %v2176 = vadd.f32 %v1990, %v2109
      %v2177 = vadd.f32 %v1991, %v2111
      %v2178 = vadd.f32 %v1992, %v2114
      %v2179 = vadd.f32 %v1993, %v2116
      %v2180 = vadd.f32 %v1994, %v2119
      %v2181 = vadd.f32 %v1995, %v2121
      %v2182 = vadd.f32 %v1996, %v2124
      %v2183 = vadd.f32 %v1997, %v2126
      %v2184 = vadd.f32 %v1998, %v2129
      %v2185 = vadd.f32 %v1999, %v2131
      %v2186 = vadd.f32 %v2000, %v2134
      %v2187 = vadd.f32 %v2001, %v2136
      %v2188 = vadd.f32 %v2002, %v2139
      %v2189 = vadd.f32 %v2003, %v2141
      %v2190 = vadd.f32 %v2004, %v2144
      %v2191 = vadd.f32 %v2005, %v2146
      %v2192 = vadd.f32 %v2006, %v2149
      %v2193 = vadd.f32 %v2007, %v2151
      %v2194 = vadd.f32 %v2008, %v2154
      %v2195 = vadd.f32 %v2009, %v2156
      %v2196 = vadd.f32 %v2010, %v2159
      %v2197 = vadd.f32 %v2011, %v2161
      %v2198 = vadd.f32 %v2012, %v2164
      %v2199 = vadd.f32 %v2013, %v2166
      %s2200 = scalar_lea.vmem %s3, 512
      %v2201 = vld [vmem:[%s2200] sm:$0xf]
      %v2202 = vld [vmem:[%s2200 + $0x4] sm:$0xf]
      %v2203 = vld [vmem:[%s2200 + $0x8] sm:$0xf]
      %v2204 = vld [vmem:[%s2200 + $0xc] sm:$0xf]
      %v2205 = vld [vmem:[%s2200 + $0x10] sm:$0xf]
      %v2206 = vld [vmem:[%s2200 + $0x14] sm:$0xf]
      %v2207 = vld [vmem:[%s2200 + $0x18] sm:$0xf]
      %v2208 = vld [vmem:[%s2200 + $0x1c] sm:$0xf]
      %v2209 = vld [vmem:[%s2200 + $0x20] sm:$0xf]
      %v2210 = vld [vmem:[%s2200 + $0x24] sm:$0xf]
      %v2211 = vld [vmem:[%s2200 + $0x28] sm:$0xf]
      %v2212 = vld [vmem:[%s2200 + $0x2c] sm:$0xf]
      %v2213 = vld [vmem:[%s2200 + $0x30] sm:$0xf]
      %v2214 = vld [vmem:[%s2200 + $0x34] sm:$0xf]
      %v2215 = vld [vmem:[%s2200 + $0x38] sm:$0xf]
      %v2216 = vld [vmem:[%s2200 + $0x3c] sm:$0xf]
      %v2233 = vunpack.c.l.b16 %v2201
      %v2234 = vunpack.c.l.b16 %v2202
      %v2235 = vunpack.c.l.b16 %v2203
      %v2236 = vunpack.c.l.b16 %v2204
      %v2237 = vunpack.c.l.b16 %v2205
      %v2238 = vunpack.c.l.b16 %v2206
      %v2239 = vunpack.c.l.b16 %v2207
      %v2240 = vunpack.c.l.b16 %v2208
      %v2241 = vunpack.c.l.b16 %v2209
      %v2242 = vunpack.c.l.b16 %v2210
      %v2243 = vunpack.c.l.b16 %v2211
      %v2244 = vunpack.c.l.b16 %v2212
      %v2245 = vunpack.c.l.b16 %v2213
      %v2246 = vunpack.c.l.b16 %v2214
      %v2247 = vunpack.c.l.b16 %v2215
      %v2248 = vunpack.c.l.b16 %v2216
      %v2249 = vpack.c.b16 %v2234, %v2233
      %v2250 = vpack.c.b16 %v2236, %v2235
      %v2251 = vpack.c.b16 %v2238, %v2237
      %v2252 = vpack.c.b16 %v2240, %v2239
      %v2253 = vpack.c.b16 %v2242, %v2241
      %v2254 = vpack.c.b16 %v2244, %v2243
      %v2255 = vpack.c.b16 %v2246, %v2245
      %v2256 = vpack.c.b16 %v2248, %v2247
      %2265 = vmatpush.bf16.msra.mxu0 %v2256
      %2266 = vmatpush.bf16.msra.mxu0 %v2255
      %2267 = vmatpush.bf16.msra.mxu0 %v2254
      %2268 = vmatpush.bf16.msra.mxu0 %v2253
      %2269 = vmatpush.bf16.msra.mxu0 %v2252
      %2270 = vmatpush.bf16.msra.mxu0 %v2251
      %2271 = vmatpush.bf16.msra.mxu0 %v2250
      %2272 = vmatpush.bf16.msra.mxu0 %v2249
      %2273 = vmatmul.bf16.gmra.mxu0 %v1051
      %v2274 = vpop.f32.mrf.mxu0
      %v2275 = vadd.f32 0.0, %v2274
      %v2276 = vpop.f32.mrf.mxu0
      %v2277 = vadd.f32 0.0, %v2276
      %2278 = vmatmul.bf16.gmra.mxu0 %v1052
      %v2279 = vpop.f32.mrf.mxu0
      %v2280 = vadd.f32 0.0, %v2279
      %v2281 = vpop.f32.mrf.mxu0
      %v2282 = vadd.f32 0.0, %v2281
      %2283 = vmatmul.bf16.gmra.mxu0 %v1053
      %v2284 = vpop.f32.mrf.mxu0
      %v2285 = vadd.f32 0.0, %v2284
      %v2286 = vpop.f32.mrf.mxu0
      %v2287 = vadd.f32 0.0, %v2286
      %2288 = vmatmul.bf16.gmra.mxu0 %v1054
      %v2289 = vpop.f32.mrf.mxu0
      %v2290 = vadd.f32 0.0, %v2289
      %v2291 = vpop.f32.mrf.mxu0
      %v2292 = vadd.f32 0.0, %v2291
      %2293 = vmatmul.bf16.gmra.mxu0 %v1055
      %v2294 = vpop.f32.mrf.mxu0
      %v2295 = vadd.f32 0.0, %v2294
      %v2296 = vpop.f32.mrf.mxu0
      %v2297 = vadd.f32 0.0, %v2296
      %2298 = vmatmul.bf16.gmra.mxu0 %v1056
      %v2299 = vpop.f32.mrf.mxu0
      %v2300 = vadd.f32 0.0, %v2299
      %v2301 = vpop.f32.mrf.mxu0
      %v2302 = vadd.f32 0.0, %v2301
      %2303 = vmatmul.bf16.gmra.mxu0 %v1057
      %v2304 = vpop.f32.mrf.mxu0
      %v2305 = vadd.f32 0.0, %v2304
      %v2306 = vpop.f32.mrf.mxu0
      %v2307 = vadd.f32 0.0, %v2306
      %2308 = vmatmul.bf16.gmra.mxu0 %v1058
      %v2309 = vpop.f32.mrf.mxu0
      %v2310 = vadd.f32 0.0, %v2309
      %v2311 = vpop.f32.mrf.mxu0
      %v2312 = vadd.f32 0.0, %v2311
      %2313 = vmatmul.bf16.gmra.mxu0 %v1059
      %v2314 = vpop.f32.mrf.mxu0
      %v2315 = vadd.f32 0.0, %v2314
      %v2316 = vpop.f32.mrf.mxu0
      %v2317 = vadd.f32 0.0, %v2316
      %2318 = vmatmul.bf16.gmra.mxu0 %v1060
      %v2319 = vpop.f32.mrf.mxu0
      %v2320 = vadd.f32 0.0, %v2319
      %v2321 = vpop.f32.mrf.mxu0
      %v2322 = vadd.f32 0.0, %v2321
      %2323 = vmatmul.bf16.gmra.mxu0 %v1061
      %v2324 = vpop.f32.mrf.mxu0
      %v2325 = vadd.f32 0.0, %v2324
      %v2326 = vpop.f32.mrf.mxu0
      %v2327 = vadd.f32 0.0, %v2326
      %2328 = vmatmul.bf16.gmra.mxu0 %v1062
      %v2329 = vpop.f32.mrf.mxu0
      %v2330 = vadd.f32 0.0, %v2329
      %v2331 = vpop.f32.mrf.mxu0
      %v2332 = vadd.f32 0.0, %v2331
      %2333 = vmatmul.bf16.gmra.mxu0 %v1063
      %v2334 = vpop.f32.mrf.mxu0
      %v2335 = vadd.f32 0.0, %v2334
      %v2336 = vpop.f32.mrf.mxu0
      %v2337 = vadd.f32 0.0, %v2336
      %2338 = vmatmul.bf16.gmra.mxu0 %v1064
      %v2339 = vpop.f32.mrf.mxu0
      %v2340 = vadd.f32 0.0, %v2339
      %v2341 = vpop.f32.mrf.mxu0
      %v2342 = vadd.f32 0.0, %v2341
      %2343 = vmatmul.bf16.gmra.mxu0 %v1641
      %v2344 = vpop.f32.mrf.mxu0
      %v2345 = vadd.f32 0.0, %v2344
      %v2346 = vpop.f32.mrf.mxu0
      %v2347 = vadd.f32 0.0, %v2346
      %2348 = vmatmul.bf16.gmra.mxu0 %v589
      %v2349 = vpop.f32.mrf.mxu0
      %v2350 = vadd.f32 0.0, %v2349
      %v2351 = vpop.f32.mrf.mxu0
      %v2352 = vadd.f32 0.0, %v2351
      %2353 = vdwg.mxu0
      %v2354 = vadd.f32 %v2168, %v2275
      %v2355 = vadd.f32 %v2169, %v2277
      %v2356 = vadd.f32 %v2170, %v2280
      %v2357 = vadd.f32 %v2171, %v2282
      %v2358 = vadd.f32 %v2172, %v2285
      %v2359 = vadd.f32 %v2173, %v2287
      %v2360 = vadd.f32 %v2174, %v2290
      %v2361 = vadd.f32 %v2175, %v2292
      %v2362 = vadd.f32 %v2176, %v2295
      %v2363 = vadd.f32 %v2177, %v2297
      %v2364 = vadd.f32 %v2178, %v2300
      %v2365 = vadd.f32 %v2179, %v2302
      %v2366 = vadd.f32 %v2180, %v2305
      %v2367 = vadd.f32 %v2181, %v2307
      %v2368 = vadd.f32 %v2182, %v2310
      %v2369 = vadd.f32 %v2183, %v2312
      %v2370 = vadd.f32 %v2184, %v2315
      %v2371 = vadd.f32 %v2185, %v2317
      %v2372 = vadd.f32 %v2186, %v2320
      %v2373 = vadd.f32 %v2187, %v2322
      %v2374 = vadd.f32 %v2188, %v2325
      %v2375 = vadd.f32 %v2189, %v2327
      %v2376 = vadd.f32 %v2190, %v2330
      %v2377 = vadd.f32 %v2191, %v2332
      %v2378 = vadd.f32 %v2192, %v2335
      %v2379 = vadd.f32 %v2193, %v2337
      %v2380 = vadd.f32 %v2194, %v2340
      %v2381 = vadd.f32 %v2195, %v2342
      %v2382 = vadd.f32 %v2196, %v2345
      %v2383 = vadd.f32 %v2197, %v2347
      %v2384 = vadd.f32 %v2198, %v2350
      %v2385 = vadd.f32 %v2199, %v2352
      %v2386 = vld [vmem:[%s4] sm:$0x1]
      %v2388 = vperm.slane %v2386, 0
      %v2390 = vadd.f32 %v2354, %v2388
      %v2391 = vadd.f32 %v2355, %v2388
      %v2392 = vadd.f32 %v2356, %v2388
      %v2393 = vadd.f32 %v2357, %v2388
      %v2394 = vadd.f32 %v2358, %v2388
      %v2395 = vadd.f32 %v2359, %v2388
      %v2396 = vadd.f32 %v2360, %v2388
      %v2397 = vadd.f32 %v2361, %v2388
      %v2398 = vadd.f32 %v2362, %v2388
      %v2399 = vadd.f32 %v2363, %v2388
      %v2400 = vadd.f32 %v2364, %v2388
      %v2401 = vadd.f32 %v2365, %v2388
      %v2402 = vadd.f32 %v2366, %v2388
      %v2403 = vadd.f32 %v2367, %v2388
      %v2404 = vadd.f32 %v2368, %v2388
      %v2405 = vadd.f32 %v2369, %v2388
      %v2406 = vadd.f32 %v2370, %v2388
      %v2407 = vadd.f32 %v2371, %v2388
      %v2408 = vadd.f32 %v2372, %v2388
      %v2409 = vadd.f32 %v2373, %v2388
      %v2410 = vadd.f32 %v2374, %v2388
      %v2411 = vadd.f32 %v2375, %v2388
      %v2412 = vadd.f32 %v2376, %v2388
      %v2413 = vadd.f32 %v2377, %v2388
      %v2414 = vadd.f32 %v2378, %v2388
      %v2415 = vadd.f32 %v2379, %v2388
      %v2416 = vadd.f32 %v2380, %v2388
      %v2417 = vadd.f32 %v2381, %v2388
      %v2418 = vadd.f32 %v2382, %v2388
      %v2419 = vadd.f32 %v2383, %v2388
      %v2420 = vadd.f32 %v2384, %v2388
      %v2421 = vadd.f32 %v2385, %v2388
      %v2422 = vpack.c.bf16 %v2390, %v2390
      %v2423 = vpack.c.bf16 %v2391, %v2391
      %v2424 = vpack.c.bf16 %v2392, %v2392
      %v2425 = vpack.c.bf16 %v2393, %v2393
      %v2426 = vpack.c.bf16 %v2394, %v2394
      %v2427 = vpack.c.bf16 %v2395, %v2395
      %v2428 = vpack.c.bf16 %v2396, %v2396
      %v2429 = vpack.c.bf16 %v2397, %v2397
      %v2430 = vpack.c.bf16 %v2398, %v2398
      %v2431 = vpack.c.bf16 %v2399, %v2399
      %v2432 = vpack.c.bf16 %v2400, %v2400
      %v2433 = vpack.c.bf16 %v2401, %v2401
      %v2434 = vpack.c.bf16 %v2402, %v2402
      %v2435 = vpack.c.bf16 %v2403, %v2403
      %v2436 = vpack.c.bf16 %v2404, %v2404
      %v2437 = vpack.c.bf16 %v2405, %v2405
      %v2438 = vpack.c.bf16 %v2406, %v2406
      %v2439 = vpack.c.bf16 %v2407, %v2407
      %v2440 = vpack.c.bf16 %v2408, %v2408
      %v2441 = vpack.c.bf16 %v2409, %v2409
      %v2442 = vpack.c.bf16 %v2410, %v2410
      %v2443 = vpack.c.bf16 %v2411, %v2411
      %v2444 = vpack.c.bf16 %v2412, %v2412
      %v2445 = vpack.c.bf16 %v2413, %v2413
      %v2446 = vpack.c.bf16 %v2414, %v2414
      %v2447 = vpack.c.bf16 %v2415, %v2415
      %v2448 = vpack.c.bf16 %v2416, %v2416
      %v2449 = vpack.c.bf16 %v2417, %v2417
      %v2450 = vpack.c.bf16 %v2418, %v2418
      %v2451 = vpack.c.bf16 %v2419, %v2419
      %v2452 = vpack.c.bf16 %v2420, %v2420
      %v2453 = vpack.c.bf16 %v2421, %v2421
      %2454 = vst [vmem:[%s258] sm:$0xf] %v2422
      %2455 = vst [vmem:[%s258 + $0x4] sm:$0xf] %v2423
      %2456 = vst [vmem:[%s258 + $0x8] sm:$0xf] %v2424
      %2457 = vst [vmem:[%s258 + $0xc] sm:$0xf] %v2425
      %2458 = vst [vmem:[%s258 + $0x10] sm:$0xf] %v2426
      %2459 = vst [vmem:[%s258 + $0x14] sm:$0xf] %v2427
      %2460 = vst [vmem:[%s258 + $0x18] sm:$0xf] %v2428
      %2461 = vst [vmem:[%s258 + $0x1c] sm:$0xf] %v2429
      %2462 = vst [vmem:[%s258 + $0x20] sm:$0xf] %v2430
      %2463 = vst [vmem:[%s258 + $0x24] sm:$0xf] %v2431
      %2464 = vst [vmem:[%s258 + $0x28] sm:$0xf] %v2432
      %2465 = vst [vmem:[%s258 + $0x2c] sm:$0xf] %v2433
      %2466 = vst [vmem:[%s258 + $0x30] sm:$0xf] %v2434
      %2467 = vst [vmem:[%s258 + $0x34] sm:$0xf] %v2435
      %2468 = vst [vmem:[%s258 + $0x38] sm:$0xf] %v2436
      %2469 = vst [vmem:[%s258 + $0x3c] sm:$0xf] %v2437
      %2470 = vst [vmem:[%s258 + $0x40] sm:$0xf] %v2438
      %2471 = vst [vmem:[%s258 + $0x44] sm:$0xf] %v2439
      %2472 = vst [vmem:[%s258 + $0x48] sm:$0xf] %v2440
      %2473 = vst [vmem:[%s258 + $0x4c] sm:$0xf] %v2441
      %2474 = vst [vmem:[%s258 + $0x50] sm:$0xf] %v2442
      %2475 = vst [vmem:[%s258 + $0x54] sm:$0xf] %v2443
      %2476 = vst [vmem:[%s258 + $0x58] sm:$0xf] %v2444
      %2477 = vst [vmem:[%s258 + $0x5c] sm:$0xf] %v2445
      %2478 = vst [vmem:[%s258 + $0x60] sm:$0xf] %v2446
      %2479 = vst [vmem:[%s258 + $0x64] sm:$0xf] %v2447
      %2480 = vst [vmem:[%s258 + $0x68] sm:$0xf] %v2448
      %2481 = vst [vmem:[%s258 + $0x6c] sm:$0xf] %v2449
      %2482 = vst [vmem:[%s258 + $0x70] sm:$0xf] %v2450
      %2483 = vst [vmem:[%s258 + $0x74] sm:$0xf] %v2451
      %2484 = vst [vmem:[%s258 + $0x78] sm:$0xf] %v2452
      %2485 = vst [vmem:[%s258 + $0x7c] sm:$0xf] %v2453
      %v2486 = vadd.f32 %v2390, %v2391
      %v2487 = vadd.f32 %v2486, %v2392
      %v2488 = vadd.f32 %v2487, %v2393
      %v2489 = vadd.f32 %v2488, %v2394
      %v2490 = vadd.f32 %v2489, %v2395
      %v2491 = vadd.f32 %v2490, %v2396
      %v2492 = vadd.f32 %v2491, %v2397
      %v2493 = vadd.f32 %v2492, %v2398
      %v2494 = vadd.f32 %v2493, %v2399
      %v2495 = vadd.f32 %v2494, %v2400
      %v2496 = vadd.f32 %v2495, %v2401
      %v2497 = vadd.f32 %v2496, %v2402
      %v2498 = vadd.f32 %v2497, %v2403
      %v2499 = vadd.f32 %v2498, %v2404
      %v2500 = vadd.f32 %v2499, %v2405
      %v2501 = vadd.f32 %v2500, %v2406
      %v2502 = vadd.f32 %v2501, %v2407
      %v2503 = vadd.f32 %v2502, %v2408
      %v2504 = vadd.f32 %v2503, %v2409
      %v2505 = vadd.f32 %v2504, %v2410
      %v2506 = vadd.f32 %v2505, %v2411
      %v2507 = vadd.f32 %v2506, %v2412
      %v2508 = vadd.f32 %v2507, %v2413
      %v2509 = vadd.f32 %v2508, %v2414
      %v2510 = vadd.f32 %v2509, %v2415
      %v2511 = vadd.f32 %v2510, %v2416
      %v2512 = vadd.f32 %v2511, %v2417
      %v2513 = vadd.f32 %v2512, %v2418
      %v2514 = vadd.f32 %v2513, %v2419
      %v2515 = vadd.f32 %v2514, %v2420
      %v2516 = vadd.f32 %v2515, %v2421
      %v2517 = vrot.slane %v2516, 4
      %v2518 = vadd.f32 %v2516, %v2517
      %v2519 = vrot.slane %v2518, 2
      %v2520 = vadd.f32 %v2518, %v2519
      %v2521 = vrot.slane %v2520, 1
      %v2522 = vadd.f32 %v2520, %v2521
      %v2523 = vmul.f32 %v2522, 0.00390625
      %v2524 = vsub.f32 %v2390, %v2523
      %v2525 = vsub.f32 %v2391, %v2523
      %v2526 = vsub.f32 %v2392, %v2523
      %v2527 = vsub.f32 %v2393, %v2523
      %v2528 = vsub.f32 %v2394, %v2523
      %v2529 = vsub.f32 %v2395, %v2523
      %v2530 = vsub.f32 %v2396, %v2523
      %v2531 = vsub.f32 %v2397, %v2523
      %v2532 = vsub.f32 %v2398, %v2523
      %v2533 = vsub.f32 %v2399, %v2523
      %v2534 = vsub.f32 %v2400, %v2523
      %v2535 = vsub.f32 %v2401, %v2523
      %v2536 = vsub.f32 %v2402, %v2523
      %v2537 = vsub.f32 %v2403, %v2523
      %v2538 = vsub.f32 %v2404, %v2523
      %v2539 = vsub.f32 %v2405, %v2523
      %v2540 = vsub.f32 %v2406, %v2523
      %v2541 = vsub.f32 %v2407, %v2523
      %v2542 = vsub.f32 %v2408, %v2523
      %v2543 = vsub.f32 %v2409, %v2523
      %v2544 = vsub.f32 %v2410, %v2523
      %v2545 = vsub.f32 %v2411, %v2523
      %v2546 = vsub.f32 %v2412, %v2523
      %v2547 = vsub.f32 %v2413, %v2523
      %v2548 = vsub.f32 %v2414, %v2523
      %v2549 = vsub.f32 %v2415, %v2523
      %v2550 = vsub.f32 %v2416, %v2523
      %v2551 = vsub.f32 %v2417, %v2523
      %v2552 = vsub.f32 %v2418, %v2523
      %v2553 = vsub.f32 %v2419, %v2523
      %v2554 = vsub.f32 %v2420, %v2523
      %v2555 = vsub.f32 %v2421, %v2523
      %v2556 = vmul.f32 %v2524, %v2524
      %v2557 = vmul.f32 %v2525, %v2525
      %v2558 = vmul.f32 %v2526, %v2526
      %v2559 = vmul.f32 %v2527, %v2527
      %v2560 = vmul.f32 %v2528, %v2528
      %v2561 = vmul.f32 %v2529, %v2529
      %v2562 = vmul.f32 %v2530, %v2530
      %v2563 = vmul.f32 %v2531, %v2531
      %v2564 = vmul.f32 %v2532, %v2532
      %v2565 = vmul.f32 %v2533, %v2533
      %v2566 = vmul.f32 %v2534, %v2534
      %v2567 = vmul.f32 %v2535, %v2535
      %v2568 = vmul.f32 %v2536, %v2536
      %v2569 = vmul.f32 %v2537, %v2537
      %v2570 = vmul.f32 %v2538, %v2538
      %v2571 = vmul.f32 %v2539, %v2539
      %v2572 = vmul.f32 %v2540, %v2540
      %v2573 = vmul.f32 %v2541, %v2541
      %v2574 = vmul.f32 %v2542, %v2542
      %v2575 = vmul.f32 %v2543, %v2543
      %v2576 = vmul.f32 %v2544, %v2544
      %v2577 = vmul.f32 %v2545, %v2545
      %v2578 = vmul.f32 %v2546, %v2546
      %v2579 = vmul.f32 %v2547, %v2547
      %v2580 = vmul.f32 %v2548, %v2548
      %v2581 = vmul.f32 %v2549, %v2549
      %v2582 = vmul.f32 %v2550, %v2550
      %v2583 = vmul.f32 %v2551, %v2551
      %v2584 = vmul.f32 %v2552, %v2552
      %v2585 = vmul.f32 %v2553, %v2553
      %v2586 = vmul.f32 %v2554, %v2554
      %v2587 = vmul.f32 %v2555, %v2555
      %v2588 = vadd.f32 %v2556, %v2557
      %v2589 = vadd.f32 %v2588, %v2558
      %v2590 = vadd.f32 %v2589, %v2559
      %v2591 = vadd.f32 %v2590, %v2560
      %v2592 = vadd.f32 %v2591, %v2561
      %v2593 = vadd.f32 %v2592, %v2562
      %v2594 = vadd.f32 %v2593, %v2563
      %v2595 = vadd.f32 %v2594, %v2564
      %v2596 = vadd.f32 %v2595, %v2565
      %v2597 = vadd.f32 %v2596, %v2566
      %v2598 = vadd.f32 %v2597, %v2567
      %v2599 = vadd.f32 %v2598, %v2568
      %v2600 = vadd.f32 %v2599, %v2569
      %v2601 = vadd.f32 %v2600, %v2570
      %v2602 = vadd.f32 %v2601, %v2571
      %v2603 = vadd.f32 %v2602, %v2572
      %v2604 = vadd.f32 %v2603, %v2573
      %v2605 = vadd.f32 %v2604, %v2574
      %v2606 = vadd.f32 %v2605, %v2575
      %v2607 = vadd.f32 %v2606, %v2576
      %v2608 = vadd.f32 %v2607, %v2577
      %v2609 = vadd.f32 %v2608, %v2578
      %v2610 = vadd.f32 %v2609, %v2579
      %v2611 = vadd.f32 %v2610, %v2580
      %v2612 = vadd.f32 %v2611, %v2581
      %v2613 = vadd.f32 %v2612, %v2582
      %v2614 = vadd.f32 %v2613, %v2583
      %v2615 = vadd.f32 %v2614, %v2584
      %v2616 = vadd.f32 %v2615, %v2585
      %v2617 = vadd.f32 %v2616, %v2586
      %v2618 = vadd.f32 %v2617, %v2587
      %v2619 = vrot.slane %v2618, 4
      %v2620 = vadd.f32 %v2618, %v2619
      %v2621 = vrot.slane %v2620, 2
      %v2622 = vadd.f32 %v2620, %v2621
      %v2623 = vrot.slane %v2622, 1
      %v2624 = vadd.f32 %v2622, %v2623
      %v2625 = vsel %vm468, %v2522, %v2624
      %vm2626 = vcmask 1041408
      %v2627 = vsel %vm2626, %v2625, 0.0
      %2628 = vst [vmem:[%s262] sm:$0xff] %v2627
      %p2629 = scmp.lt.s32.totalorder %s18, 1
      %s2630 = scalar_select %p2629, %s18, 1
      %s2631 = smul.addr %s2630, 32
      %s2632 = smul.addr %s2631, 4
      %s2633 = scalar_lea.vmem %s5, %s2632
      %p2634 = scmp.lt.s32.totalorder %s18, 1
      %s2635 = scalar_select %p2634, %s18, 1
      %s2636 = smul.addr %s2635, 8
      %s2637 = scalar_lea.vmem %s6, %s2636
      // Predicated region
      $region41: #{residual_block.4} parent=39 // pred_check
        %p2638 = pneg %p146
      $region42: #{residual_block.4} parent=39 // pred_check_branch
        %2640 = sbr.rel (%p2638) target = $region44
      $region43: #{residual_block.4} parent=39 // pred_region
        _
      $region44: #{residual_block.4} parent=39 // pred_fallthru
        _
      // Predicated region
      $region45: #{residual_block.4} parent=39 // pred_check
        %p2641 = pneg %p172
      $region46: #{residual_block.4} parent=39 // pred_check_branch
        %2643 = sbr.rel (%p2641) target = $region48
      $region47: #{residual_block.4} parent=39 // pred_region
        _
      $region48: #{residual_block.4} parent=39 // pred_fallthru
        _
    $region40: #{residual_block.4} parent=5 // pred_fallthru
      _
    %p2644 = scmp.le.s32.totalorder 2, %s13
    // Predicated region
    $region49: #{residual_block.4} parent=5 // pred_check
      %p2645 = pneg %p2644
    $region50: #{residual_block.4} parent=5 // pred_check_branch
      %2647 = sbr.rel (%p2645) target = $region52
    $region51: #{residual_block.4} parent=5 // pred_region
      %s2648 = ssub.s32 %s13, 2
      // Predicated region
      $region53: #{residual_block.4} parent=51 // pred_check
        %p2649 = pneg %p152
      $region54: #{residual_block.4} parent=51 // pred_check_branch
        %2651 = sbr.rel (%p2649) target = $region56
      $region55: #{residual_block.4} parent=51 // pred_region
        %p2652 = scmp.lt.s32.totalorder %s19, 1
        %s2653 = scalar_select %p2652, %s19, 1
        %s2654 = smul.addr %s2653, 32
        %s2655 = smul.addr %s2654, 4
        %s2656 = scalar_lea.vmem %s5, %s2655
      $region56: #{residual_block.4} parent=51 // pred_fallthru
        _
      // Predicated region
      $region57: #{residual_block.4} parent=51 // pred_check
        %p2657 = pneg %p178
      $region58: #{residual_block.4} parent=51 // pred_check_branch
        %2659 = sbr.rel (%p2657) target = $region60
      $region59: #{residual_block.4} parent=51 // pred_region
        %p2660 = scmp.lt.s32.totalorder %s19, 1
        %s2661 = scalar_select %p2660, %s19, 1
        %s2662 = smul.addr %s2661, 8
        %s2663 = scalar_lea.vmem %s6, %s2662
      $region60: #{residual_block.4} parent=51 // pred_fallthru
        _
    $region52: #{residual_block.4} parent=5 // pred_fallthru
      _
  $region6: #{residual_block.4} parent=0 // loop_footer
    %s17 = sadd.s32 1, %s13
  $region7: #{residual_block.4} parent=0 // loop_footer_branch
    %12 = sbr.rel target = $region3
  $region8: #{residual_block.4} parent=0 // loop_exit
    _

</llo_original>
